<compile_context>
chip_gen: v6e
topology: v6e:2x2x1
jax: 0.10.0
libtpu: 0.0.40
codegen_flags: <defaults>
</compile_context>

<pallas_src>
import numpy as np
import jax
import jax.numpy as jnp
from jax import lax
from jax.experimental import pallas as pl
from jax.experimental.pallas import tpu as pltpu

# ---------------- configuration ----------------
B, C_IN, C_OUT = 2, 4, 4
H = W = 8                    # image_size = 8
K = 3                        # attn_kernel_size
HID = 8                      # attn_hidden_size
S = H * W                    # 64  = in_features
KK = K * K                   # 9
F = HID * KK                 # 72  = linear out features
NORM_SCALE = 0.5
BHW = B * H * W              # 128 (= one lane tile)
FPAD = 128                   # lane-tile-aligned padded copy of F
NT = KK * C_IN               # 36 stacked taps, rows ordered (k outer, c inner)

# tap k = p*K + q  <->  source offset (dp, dq) = (p-1, q-1);  lane shift = dp*W+dq
SHIFTS = tuple((p - K // 2) * W + (q - K // 2) for p in range(K) for q in range(K))

VMEM = pltpu.MemorySpace.VMEM
HIGHEST = lax.Precision.HIGHEST


# ---------------- fused Pallas kernel ----------------
def _fused_kernel(x1_ref, x2_ref, wk_ref, wql_ref, segp_ref, wqs_ref,
                  wd_ref, mask_ref, o_ref):
    f32 = jnp.float32
    dot = lambda a, b: jnp.dot(a, b, preferred_element_type=f32, precision=HIGHEST)

    x1f = x1_ref[...]                           # (B*C_IN, S)  = (8, 64)
    x2f = x2_ref[...]                           # (8, 64)

    # 1) key / query spatial linears: two compact MXU matmuls (no zero columns).
    keym = dot(x1f, wk_ref[...])                # (8, 128)  key[b*C_IN+c, k*HID+h]
    x2m = dot(x2f, wql_ref[...])                # (8, 128)  (x2 @ wql.T)[b*C_IN+c', f]

    # 2) attention contraction.  For each key channel c build the independent slab
    #      slab_c[c', f] = sum_b key[b,c,f] * x2lin[b,c',f]              (4, 128)
    #    lane-concat the 4 slabs (128-aligned -> free placement) and hit them with
    #    ONE precomputed segment+placement matmul -> GG[c', k*C_IN + c].
    #    The 1x1 query_conv mix (+ norm_scale / batch-mean) is applied after by
    #    linearity via the tiny wqs matmul.
    slabs = []
    for c in range(C_IN):
        slabs.append(keym[c:c + 1, :] * x2m[0:C_IN, :]
                     + keym[C_IN + c:C_IN + c + 1, :] * x2m[C_IN:2 * C_IN, :])
    pcat = jnp.concatenate(slabs, axis=1)                       # (4, 4*128)
    gg = dot(pcat, segp_ref[...])                               # (4, 36)  [c', k*C_IN+c]
    attn_pre = dot(wqs_ref[...], gg)                            # (4, 36)  [o,  k*C_IN+c]

    # 3) global softmax normalisation (all C_OUT*C_IN*KK = 4*36 entries valid);
    #    divide goes through pl.reciprocal (exact).
    e = jnp.exp(attn_pre - jnp.max(attn_pre, keepdims=True))
    attn = e * pl.reciprocal(jnp.sum(e, keepdims=True), approx=False)

    # 4) conv layout of x1 derived in-kernel (no extra wrapper transpose / input):
    #    (C_IN, B*H*W) lane-dense, lane t = b*64 + h*W + w.
    x1cb = jnp.concatenate([x1f[0:C_IN, :], x1f[C_IN:2 * C_IN, :]], axis=1)  # (4,128)
    mask = mask_ref[...]                                        # (36, 128) f32 validity

    def tap_stack(arr):
        # (C_IN, 128) -> (36, 128) stacked shifted taps, rows k*C_IN + c:
        # one XLU lane-rotate per tap + ONE dense mask multiply (zero padding /
        # cross-image isolation handled by the precomputed mask).
        rows = []
        for s in SHIFTS:
            rows.append(arr if s == 0 else pltpu.roll(arr, shift=(-s) % BHW, axis=1))
        return jnp.concatenate(rows, axis=0) * mask

    # 5) depthwise value_conv as ONE MXU matmul.
    value = dot(wd_ref[...], tap_stack(x1cb))                   # (C_IN, 128)

    # 6) cross conv with the learned attention kernel as ONE MXU matmul.
    out = dot(attn, tap_stack(value))                           # (C_OUT, 128)

    # 7) write (B, C_OUT, H*W) directly so the wrapper needs no output transpose.
    for b in range(B):
        o_ref[b] = out[:, b * S:(b + 1) * S]


# ---------------- one-time, host-side weight preparation (outside jit) ------
def prepare_params(params):
    wq = np.asarray(params["query_conv_w"], np.float32)        # (C_OUT, C_IN)
    wk = np.asarray(params["key_linear_w"], np.float32)        # (F, S)
    wql = np.asarray(params["query_linear_w"], np.float32)     # (F, S)
    wv = np.asarray(params["value_conv_w"], np.float32).reshape(C_IN, KK)

    # lane-padded linear weights
    wk_p = np.zeros((S, FPAD), np.float32)
    wk_p[:, :F] = wk.T
    wql_p = np.zeros((S, FPAD), np.float32)
    wql_p[:, :F] = wql.T

    # segment-sum + column-placement matrix (parameter independent):
    #   segp[c*FPAD + k*HID + h, k*C_IN + c] = 1
    segp = np.zeros((C_IN * FPAD, NT), np.float32)
    for c in range(C_IN):
        for k in range(KK):
            segp[c * FPAD + k * HID: c * FPAD + (k + 1) * HID, k * C_IN + c] = 1.0

    # scaled query mix: folds 1x1 query_conv, norm_scale and the batch mean.
    wqs = (NORM_SCALE / B) * wq                                 # (C_OUT, C_IN)

    # depthwise conv expanded to the stacked-tap layout: wd[c, k*C_IN + c] = wv[c, k]
    wd = np.zeros((C_IN, NT), np.float32)
    for c in range(C_IN):
        for k in range(KK):
            wd[c, k * C_IN + c] = wv[c, k]

    # boundary-validity masks for the 9 taps on the (C_IN, B*H*W) lane layout
    lane = np.arange(BHW)
    hh = (lane % (H * W)) // W
    ww = lane % W
    mask = np.zeros((NT, BHW), np.float32)
    for k in range(KK):
        dp, dq = k // K - K // 2, k % K - K // 2
        ok = (hh + dp >= 0) & (hh + dp < H) & (ww + dq >= 0) & (ww + dq < W)
        mask[k * C_IN:(k + 1) * C_IN, :] = ok.astype(np.float32)

    return {
        "wk": jnp.asarray(wk_p), "wql": jnp.asarray(wql_p),
        "segp": jnp.asarray(segp), "wqs": jnp.asarray(wqs),
        "wd": jnp.asarray(wd), "mask": jnp.asarray(mask),
    }


# ---------------- wrapper ----------------
@jax.jit
def attn_conv2d_forward(x1, x2, prep):
    # Shapes are baked into the fused kernel (masks / shifts / batch-mean fold).
    assert x1.shape == (B, C_IN, H, W) and x2.shape == (B, C_IN, H, W)
    x1f = x1.reshape(B * C_IN, S).astype(jnp.float32)   # contiguous reshape only
    x2f = x2.reshape(B * C_IN, S).astype(jnp.float32)

    out = pl.pallas_call(
        _fused_kernel,
        out_shape=jax.ShapeDtypeStruct((B, C_OUT, H * W), jnp.float32),
        in_specs=[pl.BlockSpec(memory_space=VMEM)] * 8,
        out_specs=pl.BlockSpec(memory_space=VMEM),
        # Gridless single call (few vregs of work).  For production batch sizes
        # add a leading grid axis over batch with
        # compiler_params=pltpu.CompilerParams(dimension_semantics=("parallel",...))
        # so v7x's two TensorCores split the work; v5e/v6e have one TensorCore,
        # so the wins there come from the MXU/roll restructuring, not the grid.
    )(x1f, x2f, prep["wk"], prep["wql"], prep["segp"], prep["wqs"],
      prep["wd"], prep["mask"])

    return out.reshape(B, C_OUT, H, W)


# ---------------- pure-JAX reference (for verification) ----------------
def reference_forward(x1, x2, params):
    hp = lax.Precision.HIGHEST
    wq = params["query_conv_w"]
    wk = params["key_linear_w"]
    wql = params["query_linear_w"]
    wv = params["value_conv_w"]
    b = x1.shape[0]

    q2 = jnp.einsum("oc,bchw->bohw", wq, x2, precision=hp)
    key = jnp.einsum("bcs,fs->bcf", x1.reshape(b, C_IN, S), wk,
                     precision=hp).reshape(b, C_IN, KK, HID)
    qry = jnp.einsum("bos,fs->bof", q2.reshape(b, C_OUT, S), wql,
                     precision=hp).reshape(b, C_OUT, KK, HID)
    attn = jnp.einsum("bckh,bokh->ock", key, qry, precision=hp) / b
    attn = NORM_SCALE * attn
    attn = jnp.exp(attn - jnp.max(attn))
    attn = attn / jnp.sum(attn)
    ak = attn.reshape(C_OUT, C_IN, K, K)

    v = lax.conv_general_dilated(
        x1, wv.reshape(C_IN, 1, K, K), (1, 1), [(1, 1), (1, 1)],
        dimension_numbers=("NCHW", "OIHW", "NCHW"),
        feature_group_count=C_IN, precision=hp)
    out = lax.conv_general_dilated(
        v, ak, (1, 1), [(1, 1), (1, 1)],
        dimension_numbers=("NCHW", "OIHW", "NCHW"), precision=hp)
    return out


if __name__ == "__main__":
    root = jax.random.PRNGKey(0)
    k1, k2, k3, k4, k5, k6 = jax.random.split(root, 6)

    # deterministic parameter init (shapes follow the PyTorch __init__)
    bound = (3.0 / (HID * C_IN * S * S * K * K)) ** 0.25
    params = {
        "key_linear_w": jax.random.uniform(k1, (F, S), jnp.float32, -bound, bound),
        "query_linear_w": jax.random.uniform(k2, (F, S), jnp.float32, -bound, bound),
        "query_conv_w": jax.random.uniform(k3, (C_OUT, C_IN), jnp.float32, -0.5, 0.5),
        "value_conv_w": jax.random.uniform(k4, (C_IN, K, K), jnp.float32, -1.0 / 3, 1.0 / 3),
    }

    x1 = jax.random.normal(k5, (B, C_IN, H, W), jnp.float32)
    x2 = jax.random.normal(k6, (B, C_IN, H, W), jnp.float32)

    prep = prepare_params(params)          # one-time, outside the per-call path

    out = attn_conv2d_forward(x1, x2, prep)
    out = jax.block_until_ready(out)

    ref = reference_forward(x1, x2, params)
    assert out.shape == (B, C_OUT, H, W)
    if not jnp.allclose(out, ref, rtol=1e-3, atol=1e-4):
        raise AssertionError("Pallas output mismatch vs reference")
    print("KERNEL_OK")
</pallas_src>

<mosaic_0001>
module attributes {stable_mosaic.version = 11 : i64} {
  func.func @_fused_kernel(%arg0: memref<8x64xf32, #tpu.memory_space<vmem>>, %arg1: memref<8x64xf32, #tpu.memory_space<vmem>>, %arg2: memref<64x128xf32, #tpu.memory_space<vmem>>, %arg3: memref<64x128xf32, #tpu.memory_space<vmem>>, %arg4: memref<512x36xf32, #tpu.memory_space<vmem>>, %arg5: memref<4x4xf32, #tpu.memory_space<vmem>>, %arg6: memref<4x36xf32, #tpu.memory_space<vmem>>, %arg7: memref<36x128xf32, #tpu.memory_space<vmem>>, %arg8: memref<2x4x64xf32, #tpu.memory_space<vmem>>) attributes {dimension_semantics = [], scalar_prefetch = 0 : i64, scratch_operands = 0 : i64, tpu.core_type = #tpu.core_type<tc>} {
    %c0 = arith.constant 0 : index
    %c0_0 = arith.constant 0 : index
    %0 = vector.load %arg0[%c0, %c0_0] : memref<8x64xf32, #tpu.memory_space<vmem>>, vector<8x64xf32>
    %c0_1 = arith.constant 0 : index
    %c0_2 = arith.constant 0 : index
    %1 = vector.load %arg1[%c0_1, %c0_2] : memref<8x64xf32, #tpu.memory_space<vmem>>, vector<8x64xf32>
    %c0_3 = arith.constant 0 : index
    %c0_4 = arith.constant 0 : index
    %2 = vector.load %arg2[%c0_3, %c0_4] : memref<64x128xf32, #tpu.memory_space<vmem>>, vector<64x128xf32>
    %cst = arith.constant dense<0.000000e+00> : vector<8x128xf32>
    %3 = tpu.matmul %0, %2, %cst {dimension_numbers = #tpu.dot_dimension_numbers<[1], [0], [0], [1], [0, 0, 1, 1], [], []>, precision = #tpu.contract_precision<fp32>} : vector<8x64xf32>, vector<64x128xf32>, vector<8x128xf32> -> vector<8x128xf32>
    %c0_5 = arith.constant 0 : index
    %c0_6 = arith.constant 0 : index
    %4 = vector.load %arg3[%c0_5, %c0_6] : memref<64x128xf32, #tpu.memory_space<vmem>>, vector<64x128xf32>
    %cst_7 = arith.constant dense<0.000000e+00> : vector<8x128xf32>
    %5 = tpu.matmul %1, %4, %cst_7 {dimension_numbers = #tpu.dot_dimension_numbers<[1], [0], [0], [1], [0, 0, 1, 1], [], []>, precision = #tpu.contract_precision<fp32>} : vector<8x64xf32>, vector<64x128xf32>, vector<8x128xf32> -> vector<8x128xf32>
    %6 = vector.extract_strided_slice %3 {offsets = [0, 0], sizes = [1, 128], strides = [1, 1]} : vector<8x128xf32> to vector<1x128xf32>
    %7 = vector.extract_strided_slice %5 {offsets = [0, 0], sizes = [4, 128], strides = [1, 1]} : vector<8x128xf32> to vector<4x128xf32>
    %8 = vector.broadcast %6 : vector<1x128xf32> to vector<4x128xf32>
    %9 = arith.mulf %8, %7 : vector<4x128xf32>
    %10 = vector.extract_strided_slice %3 {offsets = [4, 0], sizes = [1, 128], strides = [1, 1]} : vector<8x128xf32> to vector<1x128xf32>
    %11 = vector.extract_strided_slice %5 {offsets = [4, 0], sizes = [4, 128], strides = [1, 1]} : vector<8x128xf32> to vector<4x128xf32>
    %12 = vector.broadcast %10 : vector<1x128xf32> to vector<4x128xf32>
    %13 = arith.mulf %12, %11 : vector<4x128xf32>
    %14 = arith.addf %9, %13 : vector<4x128xf32>
    %15 = vector.extract_strided_slice %3 {offsets = [1, 0], sizes = [1, 128], strides = [1, 1]} : vector<8x128xf32> to vector<1x128xf32>
    %16 = vector.extract_strided_slice %5 {offsets = [0, 0], sizes = [4, 128], strides = [1, 1]} : vector<8x128xf32> to vector<4x128xf32>
    %17 = vector.broadcast %15 : vector<1x128xf32> to vector<4x128xf32>
    %18 = arith.mulf %17, %16 : vector<4x128xf32>
    %19 = vector.extract_strided_slice %3 {offsets = [5, 0], sizes = [1, 128], strides = [1, 1]} : vector<8x128xf32> to vector<1x128xf32>
    %20 = vector.extract_strided_slice %5 {offsets = [4, 0], sizes = [4, 128], strides = [1, 1]} : vector<8x128xf32> to vector<4x128xf32>
    %21 = vector.broadcast %19 : vector<1x128xf32> to vector<4x128xf32>
    %22 = arith.mulf %21, %20 : vector<4x128xf32>
    %23 = arith.addf %18, %22 : vector<4x128xf32>
    %24 = vector.extract_strided_slice %3 {offsets = [2, 0], sizes = [1, 128], strides = [1, 1]} : vector<8x128xf32> to vector<1x128xf32>
    %25 = vector.extract_strided_slice %5 {offsets = [0, 0], sizes = [4, 128], strides = [1, 1]} : vector<8x128xf32> to vector<4x128xf32>
    %26 = vector.broadcast %24 : vector<1x128xf32> to vector<4x128xf32>
    %27 = arith.mulf %26, %25 : vector<4x128xf32>
    %28 = vector.extract_strided_slice %3 {offsets = [6, 0], sizes = [1, 128], strides = [1, 1]} : vector<8x128xf32> to vector<1x128xf32>
    %29 = vector.extract_strided_slice %5 {offsets = [4, 0], sizes = [4, 128], strides = [1, 1]} : vector<8x128xf32> to vector<4x128xf32>
    %30 = vector.broadcast %28 : vector<1x128xf32> to vector<4x128xf32>
    %31 = arith.mulf %30, %29 : vector<4x128xf32>
    %32 = arith.addf %27, %31 : vector<4x128xf32>
    %33 = vector.extract_strided_slice %3 {offsets = [3, 0], sizes = [1, 128], strides = [1, 1]} : vector<8x128xf32> to vector<1x128xf32>
    %34 = vector.extract_strided_slice %5 {offsets = [0, 0], sizes = [4, 128], strides = [1, 1]} : vector<8x128xf32> to vector<4x128xf32>
    %35 = vector.broadcast %33 : vector<1x128xf32> to vector<4x128xf32>
    %36 = arith.mulf %35, %34 : vector<4x128xf32>
    %37 = vector.extract_strided_slice %3 {offsets = [7, 0], sizes = [1, 128], strides = [1, 1]} : vector<8x128xf32> to vector<1x128xf32>
    %38 = vector.extract_strided_slice %5 {offsets = [4, 0], sizes = [4, 128], strides = [1, 1]} : vector<8x128xf32> to vector<4x128xf32>
    %39 = vector.broadcast %37 : vector<1x128xf32> to vector<4x128xf32>
    %40 = arith.mulf %39, %38 : vector<4x128xf32>
    %41 = arith.addf %36, %40 : vector<4x128xf32>
    %42 = tpu.concatenate %14, %23, %32, %41 in 1 : vector<4x128xf32>, vector<4x128xf32>, vector<4x128xf32>, vector<4x128xf32> -> vector<4x512xf32>
    %c0_8 = arith.constant 0 : index
    %c0_9 = arith.constant 0 : index
    %43 = vector.load %arg4[%c0_8, %c0_9] : memref<512x36xf32, #tpu.memory_space<vmem>>, vector<512x36xf32>
    %cst_10 = arith.constant dense<0.000000e+00> : vector<4x36xf32>
    %44 = tpu.matmul %42, %43, %cst_10 {dimension_numbers = #tpu.dot_dimension_numbers<[1], [0], [0], [1], [0, 0, 1, 1], [], []>, precision = #tpu.contract_precision<fp32>} : vector<4x512xf32>, vector<512x36xf32>, vector<4x36xf32> -> vector<4x36xf32>
    %c0_11 = arith.constant 0 : index
    %c0_12 = arith.constant 0 : index
    %45 = vector.load %arg5[%c0_11, %c0_12] : memref<4x4xf32, #tpu.memory_space<vmem>>, vector<4x4xf32>
    %cst_13 = arith.constant dense<0.000000e+00> : vector<4x36xf32>
    %46 = tpu.matmul %45, %44, %cst_13 {dimension_numbers = #tpu.dot_dimension_numbers<[1], [0], [0], [1], [0, 0, 1, 1], [], []>, precision = #tpu.contract_precision<fp32>} : vector<4x4xf32>, vector<4x36xf32>, vector<4x36xf32> -> vector<4x36xf32>
    %47 = vector.shape_cast %46 : vector<4x36xf32> to vector<1x4x36xf32>
    %cst_14 = arith.constant dense<0xFF800000> : vector<1xf32>
    %48 = vector.multi_reduction <maximumf>, %47, %cst_14 [1, 2] : vector<1x4x36xf32> to vector<1xf32>
    %49 = vector.shape_cast %48 : vector<1xf32> to vector<1x1x1xf32>
    %50 = vector.extract %49[0, 0, 0] : f32 from vector<1x1x1xf32>
    %51 = vector.broadcast %50 : f32 to vector<1x1xf32>
    %52 = vector.broadcast %51 : vector<1x1xf32> to vector<4x36xf32>
    %53 = arith.subf %46, %52 : vector<4x36xf32>
    %54 = math.exp %53 : vector<4x36xf32>
    %55 = vector.shape_cast %54 : vector<4x36xf32> to vector<1x4x36xf32>
    %cst_15 = arith.constant dense<0.000000e+00> : vector<1xf32>
    %56 = vector.multi_reduction <add>, %55, %cst_15 [1, 2] : vector<1x4x36xf32> to vector<1xf32>
    %57 = vector.shape_cast %56 : vector<1xf32> to vector<1x1x1xf32>
    %58 = vector.extract %57[0, 0, 0] : f32 from vector<1x1x1xf32>
    %59 = vector.broadcast %58 : f32 to vector<1x1xf32>
    %60 = tpu.reciprocal %59 : vector<1x1xf32> -> vector<1x1xf32>
    %61 = vector.broadcast %60 : vector<1x1xf32> to vector<4x36xf32>
    %62 = arith.mulf %54, %61 : vector<4x36xf32>
    %63 = vector.extract_strided_slice %0 {offsets = [0, 0], sizes = [4, 64], strides = [1, 1]} : vector<8x64xf32> to vector<4x64xf32>
    %64 = vector.extract_strided_slice %0 {offsets = [4, 0], sizes = [4, 64], strides = [1, 1]} : vector<8x64xf32> to vector<4x64xf32>
    %65 = tpu.concatenate %63, %64 in 1 : vector<4x64xf32>, vector<4x64xf32> -> vector<4x128xf32>
    %c0_16 = arith.constant 0 : index
    %c0_17 = arith.constant 0 : index
    %66 = vector.load %arg7[%c0_16, %c0_17] : memref<36x128xf32, #tpu.memory_space<vmem>>, vector<36x128xf32>
    %c0_18 = arith.constant 0 : index
    %c0_19 = arith.constant 0 : index
    %67 = vector.load %arg6[%c0_18, %c0_19] : memref<4x36xf32, #tpu.memory_space<vmem>>, vector<4x36xf32>
    %c9_i32 = arith.constant 9 : i32
    %68 = tpu.dynamic_rotate %65 by %c9_i32 dim 1 : vector<4x128xf32>, i32 -> vector<4x128xf32>
    %c8_i32 = arith.constant 8 : i32
    %69 = tpu.dynamic_rotate %65 by %c8_i32 dim 1 : vector<4x128xf32>, i32 -> vector<4x128xf32>
    %c7_i32 = arith.constant 7 : i32
    %70 = tpu.dynamic_rotate %65 by %c7_i32 dim 1 : vector<4x128xf32>, i32 -> vector<4x128xf32>
    %c1_i32 = arith.constant 1 : i32
    %71 = tpu.dynamic_rotate %65 by %c1_i32 dim 1 : vector<4x128xf32>, i32 -> vector<4x128xf32>
    %c127_i32 = arith.constant 127 : i32
    %72 = tpu.dynamic_rotate %65 by %c127_i32 dim 1 : vector<4x128xf32>, i32 -> vector<4x128xf32>
    %c121_i32 = arith.constant 121 : i32
    %73 = tpu.dynamic_rotate %65 by %c121_i32 dim 1 : vector<4x128xf32>, i32 -> vector<4x128xf32>
    %c120_i32 = arith.constant 120 : i32
    %74 = tpu.dynamic_rotate %65 by %c120_i32 dim 1 : vector<4x128xf32>, i32 -> vector<4x128xf32>
    %c119_i32 = arith.constant 119 : i32
    %75 = tpu.dynamic_rotate %65 by %c119_i32 dim 1 : vector<4x128xf32>, i32 -> vector<4x128xf32>
    %76 = tpu.concatenate %68, %69, %70, %71, %65, %72, %73, %74, %75 in 0 : vector<4x128xf32>, vector<4x128xf32>, vector<4x128xf32>, vector<4x128xf32>, vector<4x128xf32>, vector<4x128xf32>, vector<4x128xf32>, vector<4x128xf32>, vector<4x128xf32> -> vector<36x128xf32>
    %77 = arith.mulf %76, %66 : vector<36x128xf32>
    %cst_20 = arith.constant dense<0.000000e+00> : vector<4x128xf32>
    %78 = tpu.matmul %67, %77, %cst_20 {dimension_numbers = #tpu.dot_dimension_numbers<[1], [0], [0], [1], [0, 0, 1, 1], [], []>, precision = #tpu.contract_precision<fp32>} : vector<4x36xf32>, vector<36x128xf32>, vector<4x128xf32> -> vector<4x128xf32>
    %c9_i32_21 = arith.constant 9 : i32
    %79 = tpu.dynamic_rotate %78 by %c9_i32_21 dim 1 : vector<4x128xf32>, i32 -> vector<4x128xf32>
    %c8_i32_22 = arith.constant 8 : i32
    %80 = tpu.dynamic_rotate %78 by %c8_i32_22 dim 1 : vector<4x128xf32>, i32 -> vector<4x128xf32>
    %c7_i32_23 = arith.constant 7 : i32
    %81 = tpu.dynamic_rotate %78 by %c7_i32_23 dim 1 : vector<4x128xf32>, i32 -> vector<4x128xf32>
    %c1_i32_24 = arith.constant 1 : i32
    %82 = tpu.dynamic_rotate %78 by %c1_i32_24 dim 1 : vector<4x128xf32>, i32 -> vector<4x128xf32>
    %c127_i32_25 = arith.constant 127 : i32
    %83 = tpu.dynamic_rotate %78 by %c127_i32_25 dim 1 : vector<4x128xf32>, i32 -> vector<4x128xf32>
    %c121_i32_26 = arith.constant 121 : i32
    %84 = tpu.dynamic_rotate %78 by %c121_i32_26 dim 1 : vector<4x128xf32>, i32 -> vector<4x128xf32>
    %c120_i32_27 = arith.constant 120 : i32
    %85 = tpu.dynamic_rotate %78 by %c120_i32_27 dim 1 : vector<4x128xf32>, i32 -> vector<4x128xf32>
    %c119_i32_28 = arith.constant 119 : i32
    %86 = tpu.dynamic_rotate %78 by %c119_i32_28 dim 1 : vector<4x128xf32>, i32 -> vector<4x128xf32>
    %87 = tpu.concatenate %79, %80, %81, %82, %78, %83, %84, %85, %86 in 0 : vector<4x128xf32>, vector<4x128xf32>, vector<4x128xf32>, vector<4x128xf32>, vector<4x128xf32>, vector<4x128xf32>, vector<4x128xf32>, vector<4x128xf32>, vector<4x128xf32> -> vector<36x128xf32>
    %88 = arith.mulf %87, %66 : vector<36x128xf32>
    %cst_29 = arith.constant dense<0.000000e+00> : vector<4x128xf32>
    %89 = tpu.matmul %62, %88, %cst_29 {dimension_numbers = #tpu.dot_dimension_numbers<[1], [0], [0], [1], [0, 0, 1, 1], [], []>, precision = #tpu.contract_precision<fp32>} : vector<4x36xf32>, vector<36x128xf32>, vector<4x128xf32> -> vector<4x128xf32>
    %90 = vector.extract_strided_slice %89 {offsets = [0, 0], sizes = [4, 64], strides = [1, 1]} : vector<4x128xf32> to vector<4x64xf32>
    %c0_30 = arith.constant 0 : index
    %c0_31 = arith.constant 0 : index
    %c0_32 = arith.constant 0 : index
    %91 = vector.load %arg8[%c0_30, %c0_31, %c0_32] : memref<2x4x64xf32, #tpu.memory_space<vmem>>, vector<1x4x64xf32>
    %92 = vector.shape_cast %91 : vector<1x4x64xf32> to vector<4x64xf32>
    %93 = vector.shape_cast %90 : vector<4x64xf32> to vector<1x4x64xf32>
    tpu.vector_store %arg8[%c0_30, %c0_31, %c0_32], %93 {strides = array<i32>} : memref<2x4x64xf32, #tpu.memory_space<vmem>>, vector<1x4x64xf32>,
    %94 = vector.extract_strided_slice %89 {offsets = [0, 64], sizes = [4, 64], strides = [1, 1]} : vector<4x128xf32> to vector<4x64xf32>
    %c1 = arith.constant 1 : index
    %c0_33 = arith.constant 0 : index
    %c0_34 = arith.constant 0 : index
    %95 = vector.load %arg8[%c1, %c0_33, %c0_34] : memref<2x4x64xf32, #tpu.memory_space<vmem>>, vector<1x4x64xf32>
    %96 = vector.shape_cast %95 : vector<1x4x64xf32> to vector<4x64xf32>
    %97 = vector.shape_cast %94 : vector<4x64xf32> to vector<1x4x64xf32>
    tpu.vector_store %arg8[%c1, %c0_33, %c0_34], %97 {strides = array<i32>} : memref<2x4x64xf32, #tpu.memory_space<vmem>>, vector<1x4x64xf32>,
    return
  }
}

</mosaic_0001>

<llo_original>
// kernel: attn_conv2d_forward.1
$region0: #{attn_conv2d_forward.1}
  #allocation0 [shape = 'u32[]', space=smem, size = 0x4, offset = 0x4, fixed_abs, tag = 'smem constant byte address 0x4 - core index']
  #allocation1 [shape = 'u32[144,128]{1,0:T(1,128)}', space=vmem, size = 0x12000, scoped, tag = 'internal scratch']
  %s0 = inlined_call_operand.vmem [shape: f32[8,64], index: 0, kind: input, shape index: {}]
  %s1 = inlined_call_operand.vmem [shape: f32[8,64], index: 1, kind: input, shape index: {}]
  %s2 = inlined_call_operand.vmem [shape: f32[64,128], index: 2, kind: input, shape index: {}]
  %s3 = inlined_call_operand.vmem [shape: f32[64,128], index: 3, kind: input, shape index: {}]
  %s4 = inlined_call_operand.vmem [shape: f32[512,36], index: 4, kind: input, shape index: {}]
  %s5 = inlined_call_operand.vmem [shape: f32[4,4], index: 5, kind: input, shape index: {}]
  %s6 = inlined_call_operand.vmem [shape: f32[4,36], index: 6, kind: input, shape index: {}]
  %s7 = inlined_call_operand.vmem [shape: f32[36,128], index: 7, kind: input, shape index: {}]
  %s8 = inlined_call_operand.vmem [shape: f32[2,4,64], index: 8, kind: output, shape index: {}]
  %s9 = sld [smem:[#allocation0]]
  $region42: #{attn_conv2d_forward.1} parent=0
    _
  %s11 = ssub.s32 1, %s9
  %s12 = scalar_select 0, %s11, %s9
  // Predicated region
  $region2: #{attn_conv2d_forward.1} parent=0 // pred_check
    _
  $region3: #{attn_conv2d_forward.1} parent=0 // pred_check_branch
    %14 = sbr.rel (0) target = $region5
  $region4: #{attn_conv2d_forward.1} parent=0 // pred_region
    _
  $region5: #{attn_conv2d_forward.1} parent=0 // pred_fallthru
    _
  // Predicated region
  $region6: #{attn_conv2d_forward.1} parent=0 // pred_check
    _
  $region7: #{attn_conv2d_forward.1} parent=0 // pred_check_branch
    %16 = sbr.rel (0) target = $region9
  $region8: #{attn_conv2d_forward.1} parent=0 // pred_region
    _
  $region9: #{attn_conv2d_forward.1} parent=0 // pred_fallthru
    _
  // Predicated region
  $region10: #{attn_conv2d_forward.1} parent=0 // pred_check
    _
  $region11: #{attn_conv2d_forward.1} parent=0 // pred_check_branch
    %18 = sbr.rel (0) target = $region13
  $region12: #{attn_conv2d_forward.1} parent=0 // pred_region
    _
  $region13: #{attn_conv2d_forward.1} parent=0 // pred_fallthru
    _
  // Predicated region
  $region14: #{attn_conv2d_forward.1} parent=0 // pred_check
    _
  $region15: #{attn_conv2d_forward.1} parent=0 // pred_check_branch
    %20 = sbr.rel (0) target = $region17
  $region16: #{attn_conv2d_forward.1} parent=0 // pred_region
    _
  $region17: #{attn_conv2d_forward.1} parent=0 // pred_fallthru
    _
  // Predicated region
  $region18: #{attn_conv2d_forward.1} parent=0 // pred_check
    _
  $region19: #{attn_conv2d_forward.1} parent=0 // pred_check_branch
    %22 = sbr.rel (0) target = $region21
  $region20: #{attn_conv2d_forward.1} parent=0 // pred_region
    _
  $region21: #{attn_conv2d_forward.1} parent=0 // pred_fallthru
    _
  // Predicated region
  $region22: #{attn_conv2d_forward.1} parent=0 // pred_check
    _
  $region23: #{attn_conv2d_forward.1} parent=0 // pred_check_branch
    %24 = sbr.rel (0) target = $region25
  $region24: #{attn_conv2d_forward.1} parent=0 // pred_region
    _
  $region25: #{attn_conv2d_forward.1} parent=0 // pred_fallthru
    _
  // Predicated region
  $region26: #{attn_conv2d_forward.1} parent=0 // pred_check
    _
  $region27: #{attn_conv2d_forward.1} parent=0 // pred_check_branch
    %26 = sbr.rel (0) target = $region29
  $region28: #{attn_conv2d_forward.1} parent=0 // pred_region
    _
  $region29: #{attn_conv2d_forward.1} parent=0 // pred_fallthru
    _
  // Predicated region
  $region30: #{attn_conv2d_forward.1} parent=0 // pred_check
    _
  $region31: #{attn_conv2d_forward.1} parent=0 // pred_check_branch
    %28 = sbr.rel (0) target = $region33
  $region32: #{attn_conv2d_forward.1} parent=0 // pred_region
    _
  $region33: #{attn_conv2d_forward.1} parent=0 // pred_fallthru
    _
  %v29 = vld [vmem:[%s0] sm:$0xff]
  %v30 = vld [vmem:[%s1] sm:$0xff]
  %v31 = vld [vmem:[%s2] sm:$0xff]
  %v32 = vld [vmem:[%s2 + $0x8] sm:$0xff]
  %v33 = vld [vmem:[%s2 + $0x10] sm:$0xff]
  %v34 = vld [vmem:[%s2 + $0x18] sm:$0xff]
  %v35 = vld [vmem:[%s2 + $0x20] sm:$0xff]
  %v36 = vld [vmem:[%s2 + $0x28] sm:$0xff]
  %v37 = vld [vmem:[%s2 + $0x30] sm:$0xff]
  %v38 = vld [vmem:[%s2 + $0x38] sm:$0xff]
  %vm39 = vcmask 523264
  %v41 = vsel %vm39, %v29, 0
  %43 = vmatprep.subr.mxu0 0.0
  %44 = vmatpush1.msra.mxu0 0.0
  %45 = vmatprep.subr.mxu0 0.0
  %46 = vmatpush1.msra.mxu0 0.0
  %47 = vmatprep.subr.mxu0 0.0
  %48 = vmatpush1.msra.mxu0 0.0
  %49 = vmatprep.subr.mxu0 0.0
  %50 = vmatpush1.msra.mxu0 0.0
  %51 = vmatprep.subr.mxu0 0.0
  %52 = vmatpush1.msra.mxu0 0.0
  %53 = vmatprep.subr.mxu0 0.0
  %54 = vmatpush1.msra.mxu0 0.0
  %55 = vmatprep.subr.mxu0 0.0
  %56 = vmatpush1.msra.mxu0 0.0
  %57 = vmatprep.subr.mxu0 0.0
  %58 = vmatpush1.msra.mxu0 0.0
  %59 = vmatprep.subr.mxu0 0.0
  %v60 = vand.u32 %v38, 4294901760
  %61 = vmatpush1.msra.mxu0 %v60
  %62 = vmatprep.subr.mxu0 0.0
  %v63 = vand.u32 %v37, 4294901760
  %64 = vmatpush1.msra.mxu0 %v63
  %65 = vmatprep.subr.mxu0 0.0
  %v66 = vand.u32 %v36, 4294901760
  %67 = vmatpush1.msra.mxu0 %v66
  %68 = vmatprep.subr.mxu0 0.0
  %v69 = vand.u32 %v35, 4294901760
  %70 = vmatpush1.msra.mxu0 %v69
  %71 = vmatprep.subr.mxu0 0.0
  %v72 = vand.u32 %v34, 4294901760
  %73 = vmatpush1.msra.mxu0 %v72
  %74 = vmatprep.subr.mxu0 0.0
  %v75 = vand.u32 %v33, 4294901760
  %76 = vmatpush1.msra.mxu0 %v75
  %77 = vmatprep.subr.mxu0 0.0
  %v78 = vand.u32 %v32, 4294901760
  %79 = vmatpush1.msra.mxu0 %v78
  %80 = vmatprep.subr.mxu0 0.0
  %v81 = vand.u32 %v31, 4294901760
  %82 = vmatpush1.msra.mxu0 %v81
  %83 = vmatprep.subr.mxu0 0.0
  %84 = vmatpush2.msra.mxu0 0.0
  %85 = vmatprep.subr.mxu0 0.0
  %86 = vmatpush2.msra.mxu0 0.0
  %87 = vmatprep.subr.mxu0 0.0
  %88 = vmatpush2.msra.mxu0 0.0
  %89 = vmatprep.subr.mxu0 0.0
  %90 = vmatpush2.msra.mxu0 0.0
  %91 = vmatprep.subr.mxu0 0.0
  %92 = vmatpush2.msra.mxu0 0.0
  %93 = vmatprep.subr.mxu0 0.0
  %94 = vmatpush2.msra.mxu0 0.0
  %95 = vmatprep.subr.mxu0 0.0
  %96 = vmatpush2.msra.mxu0 0.0
  %97 = vmatprep.subr.mxu0 0.0
  %98 = vmatpush2.msra.mxu0 0.0
  %99 = vmatprep.subr.mxu0 0.0
  %100 = vmatpush2.msra.mxu0 0.0
  %101 = vmatprep.subr.mxu0 0.0
  %102 = vmatpush2.msra.mxu0 0.0
  %103 = vmatprep.subr.mxu0 0.0
  %104 = vmatpush2.msra.mxu0 0.0
  %105 = vmatprep.subr.mxu0 0.0
  %106 = vmatpush2.msra.mxu0 0.0
  %107 = vmatprep.subr.mxu0 0.0
  %108 = vmatpush2.msra.mxu0 0.0
  %109 = vmatprep.subr.mxu0 0.0
  %110 = vmatpush2.msra.mxu0 0.0
  %111 = vmatprep.subr.mxu0 0.0
  %112 = vmatpush2.msra.mxu0 0.0
  %113 = vmatprep.subr.mxu0 0.0
  %114 = vmatpush2.msra.mxu0 0.0
  %115 = vmatprep.mubr.f32.mxu0 0.0
  %v116 = vand.u32 %v41, 4294901760
  %v117 = vsub.f32 %v41, %v116
  %v118 = vand.u32 %v117, 4294901760
  %v119 = vsub.f32 %v117, %v118
  %v120 = vand.u32 %v119, 4294901760
  %121 = vmatmul.mubr.f32.gmra.mxu0 %v120
  %v122 = vpop.f32.mrf.mxu0
  %v123 = vadd.f32 0.0, %v122
  %v124 = vpop.f32.mrf.mxu0
  %125 = vdwg.mxu0
  %126 = vmatprep.subr.mxu0 0.0
  %127 = vmatpush1.msra.mxu0 0.0
  %128 = vmatprep.subr.mxu0 0.0
  %129 = vmatpush1.msra.mxu0 0.0
  %130 = vmatprep.subr.mxu0 0.0
  %131 = vmatpush1.msra.mxu0 0.0
  %132 = vmatprep.subr.mxu0 0.0
  %133 = vmatpush1.msra.mxu0 0.0
  %134 = vmatprep.subr.mxu0 0.0
  %135 = vmatpush1.msra.mxu0 0.0
  %136 = vmatprep.subr.mxu0 0.0
  %137 = vmatpush1.msra.mxu0 0.0
  %138 = vmatprep.subr.mxu0 0.0
  %139 = vmatpush1.msra.mxu0 0.0
  %140 = vmatprep.subr.mxu0 0.0
  %141 = vmatpush1.msra.mxu0 0.0
  %142 = vmatprep.subr.mxu0 0.0
  %v143 = vand.u32 %v38, 4294901760
  %v144 = vsub.f32 %v38, %v143
  %v145 = vand.u32 %v144, 4294901760
  %v146 = vsub.f32 %v144, %v145
  %v147 = vand.u32 %v146, 4294901760
  %148 = vmatpush1.msra.mxu0 %v147
  %149 = vmatprep.subr.mxu0 0.0
  %v150 = vand.u32 %v37, 4294901760
  %v151 = vsub.f32 %v37, %v150
  %v152 = vand.u32 %v151, 4294901760
  %v153 = vsub.f32 %v151, %v152
  %v154 = vand.u32 %v153, 4294901760
  %155 = vmatpush1.msra.mxu0 %v154
  %156 = vmatprep.subr.mxu0 0.0
  %v157 = vand.u32 %v36, 4294901760
  %v158 = vsub.f32 %v36, %v157
  %v159 = vand.u32 %v158, 4294901760
  %v160 = vsub.f32 %v158, %v159
  %v161 = vand.u32 %v160, 4294901760
  %162 = vmatpush1.msra.mxu0 %v161
  %163 = vmatprep.subr.mxu0 0.0
  %v164 = vand.u32 %v35, 4294901760
  %v165 = vsub.f32 %v35, %v164
  %v166 = vand.u32 %v165, 4294901760
  %v167 = vsub.f32 %v165, %v166
  %v168 = vand.u32 %v167, 4294901760
  %169 = vmatpush1.msra.mxu0 %v168
  %170 = vmatprep.subr.mxu0 0.0
  %v171 = vand.u32 %v34, 4294901760
  %v172 = vsub.f32 %v34, %v171
  %v173 = vand.u32 %v172, 4294901760
  %v174 = vsub.f32 %v172, %v173
  %v175 = vand.u32 %v174, 4294901760
  %176 = vmatpush1.msra.mxu0 %v175
  %177 = vmatprep.subr.mxu0 0.0
  %v178 = vand.u32 %v33, 4294901760
  %v179 = vsub.f32 %v33, %v178
  %v180 = vand.u32 %v179, 4294901760
  %v181 = vsub.f32 %v179, %v180
  %v182 = vand.u32 %v181, 4294901760
  %183 = vmatpush1.msra.mxu0 %v182
  %184 = vmatprep.subr.mxu0 0.0
  %v185 = vand.u32 %v32, 4294901760
  %v186 = vsub.f32 %v32, %v185
  %v187 = vand.u32 %v186, 4294901760
  %v188 = vsub.f32 %v186, %v187
  %v189 = vand.u32 %v188, 4294901760
  %190 = vmatpush1.msra.mxu0 %v189
  %191 = vmatprep.subr.mxu0 0.0
  %v192 = vand.u32 %v31, 4294901760
  %v193 = vsub.f32 %v31, %v192
  %v194 = vand.u32 %v193, 4294901760
  %v195 = vsub.f32 %v193, %v194
  %v196 = vand.u32 %v195, 4294901760
  %197 = vmatpush1.msra.mxu0 %v196
  %198 = vmatprep.subr.mxu0 0.0
  %199 = vmatpush2.msra.mxu0 0.0
  %200 = vmatprep.subr.mxu0 0.0
  %201 = vmatpush2.msra.mxu0 0.0
  %202 = vmatprep.subr.mxu0 0.0
  %203 = vmatpush2.msra.mxu0 0.0
  %204 = vmatprep.subr.mxu0 0.0
  %205 = vmatpush2.msra.mxu0 0.0
  %206 = vmatprep.subr.mxu0 0.0
  %207 = vmatpush2.msra.mxu0 0.0
  %208 = vmatprep.subr.mxu0 0.0
  %209 = vmatpush2.msra.mxu0 0.0
  %210 = vmatprep.subr.mxu0 0.0
  %211 = vmatpush2.msra.mxu0 0.0
  %212 = vmatprep.subr.mxu0 0.0
  %213 = vmatpush2.msra.mxu0 0.0
  %214 = vmatprep.subr.mxu0 0.0
  %215 = vmatpush2.msra.mxu0 0.0
  %216 = vmatprep.subr.mxu0 0.0
  %217 = vmatpush2.msra.mxu0 0.0
  %218 = vmatprep.subr.mxu0 0.0
  %219 = vmatpush2.msra.mxu0 0.0
  %220 = vmatprep.subr.mxu0 0.0
  %221 = vmatpush2.msra.mxu0 0.0
  %222 = vmatprep.subr.mxu0 0.0
  %223 = vmatpush2.msra.mxu0 0.0
  %224 = vmatprep.subr.mxu0 0.0
  %225 = vmatpush2.msra.mxu0 0.0
  %226 = vmatprep.subr.mxu0 0.0
  %227 = vmatpush2.msra.mxu0 0.0
  %228 = vmatprep.subr.mxu0 0.0
  %229 = vmatpush2.msra.mxu0 0.0
  %230 = vmatprep.mubr.f32.mxu0 0.0
  %v231 = vand.u32 %v41, 4294901760
  %232 = vmatmul.mubr.f32.gmra.mxu0 %v231
  %v233 = vpop.f32.mrf.mxu0
  %v234 = vadd.f32 %v123, %v233
  %v235 = vpop.f32.mrf.mxu0
  %236 = vdwg.mxu0
  %237 = vmatprep.subr.mxu0 0.0
  %238 = vmatpush1.msra.mxu0 0.0
  %239 = vmatprep.subr.mxu0 0.0
  %240 = vmatpush1.msra.mxu0 0.0
  %241 = vmatprep.subr.mxu0 0.0
  %242 = vmatpush1.msra.mxu0 0.0
  %243 = vmatprep.subr.mxu0 0.0
  %244 = vmatpush1.msra.mxu0 0.0
  %245 = vmatprep.subr.mxu0 0.0
  %246 = vmatpush1.msra.mxu0 0.0
  %247 = vmatprep.subr.mxu0 0.0
  %248 = vmatpush1.msra.mxu0 0.0
  %249 = vmatprep.subr.mxu0 0.0
  %250 = vmatpush1.msra.mxu0 0.0
  %251 = vmatprep.subr.mxu0 0.0
  %252 = vmatpush1.msra.mxu0 0.0
  %253 = vmatprep.subr.mxu0 0.0
  %v254 = vand.u32 %v38, 4294901760
  %v255 = vsub.f32 %v38, %v254
  %256 = vmatpush1.msra.mxu0 %v255
  %257 = vmatprep.subr.mxu0 0.0
  %v258 = vand.u32 %v37, 4294901760
  %v259 = vsub.f32 %v37, %v258
  %260 = vmatpush1.msra.mxu0 %v259
  %261 = vmatprep.subr.mxu0 0.0
  %v262 = vand.u32 %v36, 4294901760
  %v263 = vsub.f32 %v36, %v262
  %264 = vmatpush1.msra.mxu0 %v263
  %265 = vmatprep.subr.mxu0 0.0
  %v266 = vand.u32 %v35, 4294901760
  %v267 = vsub.f32 %v35, %v266
  %268 = vmatpush1.msra.mxu0 %v267
  %269 = vmatprep.subr.mxu0 0.0
  %v270 = vand.u32 %v34, 4294901760
  %v271 = vsub.f32 %v34, %v270
  %272 = vmatpush1.msra.mxu0 %v271
  %273 = vmatprep.subr.mxu0 0.0
  %v274 = vand.u32 %v33, 4294901760
  %v275 = vsub.f32 %v33, %v274
  %276 = vmatpush1.msra.mxu0 %v275
  %277 = vmatprep.subr.mxu0 0.0
  %v278 = vand.u32 %v32, 4294901760
  %v279 = vsub.f32 %v32, %v278
  %280 = vmatpush1.msra.mxu0 %v279
  %281 = vmatprep.subr.mxu0 0.0
  %v282 = vand.u32 %v31, 4294901760
  %v283 = vsub.f32 %v31, %v282
  %284 = vmatpush1.msra.mxu0 %v283
  %285 = vmatprep.subr.mxu0 0.0
  %286 = vmatpush2.msra.mxu0 0.0
  %287 = vmatprep.subr.mxu0 0.0
  %288 = vmatpush2.msra.mxu0 0.0
  %289 = vmatprep.subr.mxu0 0.0
  %290 = vmatpush2.msra.mxu0 0.0
  %291 = vmatprep.subr.mxu0 0.0
  %292 = vmatpush2.msra.mxu0 0.0
  %293 = vmatprep.subr.mxu0 0.0
  %294 = vmatpush2.msra.mxu0 0.0
  %295 = vmatprep.subr.mxu0 0.0
  %296 = vmatpush2.msra.mxu0 0.0
  %297 = vmatprep.subr.mxu0 0.0
  %298 = vmatpush2.msra.mxu0 0.0
  %299 = vmatprep.subr.mxu0 0.0
  %300 = vmatpush2.msra.mxu0 0.0
  %301 = vmatprep.subr.mxu0 0.0
  %302 = vmatpush2.msra.mxu0 0.0
  %303 = vmatprep.subr.mxu0 0.0
  %304 = vmatpush2.msra.mxu0 0.0
  %305 = vmatprep.subr.mxu0 0.0
  %306 = vmatpush2.msra.mxu0 0.0
  %307 = vmatprep.subr.mxu0 0.0
  %308 = vmatpush2.msra.mxu0 0.0
  %309 = vmatprep.subr.mxu0 0.0
  %310 = vmatpush2.msra.mxu0 0.0
  %311 = vmatprep.subr.mxu0 0.0
  %312 = vmatpush2.msra.mxu0 0.0
  %313 = vmatprep.subr.mxu0 0.0
  %314 = vmatpush2.msra.mxu0 0.0
  %315 = vmatprep.subr.mxu0 0.0
  %316 = vmatpush2.msra.mxu0 0.0
  %317 = vmatprep.mubr.f32.mxu0 0.0
  %v318 = vand.u32 %v41, 4294901760
  %v319 = vsub.f32 %v41, %v318
  %320 = vmatmul.mubr.f32.gmra.mxu0 %v319
  %v321 = vpop.f32.mrf.mxu0
  %v322 = vadd.f32 %v234, %v321
  %v323 = vpop.f32.mrf.mxu0
  %324 = vdwg.mxu0
  %325 = vmatprep.subr.mxu0 0.0
  %326 = vmatpush1.msra.mxu0 0.0
  %327 = vmatprep.subr.mxu0 0.0
  %328 = vmatpush1.msra.mxu0 0.0
  %329 = vmatprep.subr.mxu0 0.0
  %330 = vmatpush1.msra.mxu0 0.0
  %331 = vmatprep.subr.mxu0 0.0
  %332 = vmatpush1.msra.mxu0 0.0
  %333 = vmatprep.subr.mxu0 0.0
  %334 = vmatpush1.msra.mxu0 0.0
  %335 = vmatprep.subr.mxu0 0.0
  %336 = vmatpush1.msra.mxu0 0.0
  %337 = vmatprep.subr.mxu0 0.0
  %338 = vmatpush1.msra.mxu0 0.0
  %339 = vmatprep.subr.mxu0 0.0
  %340 = vmatpush1.msra.mxu0 0.0
  %341 = vmatprep.subr.mxu0 0.0
  %v342 = vand.u32 %v38, 4294901760
  %343 = vmatpush1.msra.mxu0 %v342
  %344 = vmatprep.subr.mxu0 0.0
  %v345 = vand.u32 %v37, 4294901760
  %346 = vmatpush1.msra.mxu0 %v345
  %347 = vmatprep.subr.mxu0 0.0
  %v348 = vand.u32 %v36, 4294901760
  %349 = vmatpush1.msra.mxu0 %v348
  %350 = vmatprep.subr.mxu0 0.0
  %v351 = vand.u32 %v35, 4294901760
  %352 = vmatpush1.msra.mxu0 %v351
  %353 = vmatprep.subr.mxu0 0.0
  %v354 = vand.u32 %v34, 4294901760
  %355 = vmatpush1.msra.mxu0 %v354
  %356 = vmatprep.subr.mxu0 0.0
  %v357 = vand.u32 %v33, 4294901760
  %358 = vmatpush1.msra.mxu0 %v357
  %359 = vmatprep.subr.mxu0 0.0
  %v360 = vand.u32 %v32, 4294901760
  %361 = vmatpush1.msra.mxu0 %v360
  %362 = vmatprep.subr.mxu0 0.0
  %v363 = vand.u32 %v31, 4294901760
  %364 = vmatpush1.msra.mxu0 %v363
  %365 = vmatprep.subr.mxu0 0.0
  %366 = vmatpush2.msra.mxu0 0.0
  %367 = vmatprep.subr.mxu0 0.0
  %368 = vmatpush2.msra.mxu0 0.0
  %369 = vmatprep.subr.mxu0 0.0
  %370 = vmatpush2.msra.mxu0 0.0
  %371 = vmatprep.subr.mxu0 0.0
  %372 = vmatpush2.msra.mxu0 0.0
  %373 = vmatprep.subr.mxu0 0.0
  %374 = vmatpush2.msra.mxu0 0.0
  %375 = vmatprep.subr.mxu0 0.0
  %376 = vmatpush2.msra.mxu0 0.0
  %377 = vmatprep.subr.mxu0 0.0
  %378 = vmatpush2.msra.mxu0 0.0
  %379 = vmatprep.subr.mxu0 0.0
  %380 = vmatpush2.msra.mxu0 0.0
  %381 = vmatprep.subr.mxu0 0.0
  %382 = vmatpush2.msra.mxu0 0.0
  %383 = vmatprep.subr.mxu0 0.0
  %384 = vmatpush2.msra.mxu0 0.0
  %385 = vmatprep.subr.mxu0 0.0
  %386 = vmatpush2.msra.mxu0 0.0
  %387 = vmatprep.subr.mxu0 0.0
  %388 = vmatpush2.msra.mxu0 0.0
  %389 = vmatprep.subr.mxu0 0.0
  %390 = vmatpush2.msra.mxu0 0.0
  %391 = vmatprep.subr.mxu0 0.0
  %392 = vmatpush2.msra.mxu0 0.0
  %393 = vmatprep.subr.mxu0 0.0
  %394 = vmatpush2.msra.mxu0 0.0
  %395 = vmatprep.subr.mxu0 0.0
  %396 = vmatpush2.msra.mxu0 0.0
  %397 = vmatprep.mubr.f32.mxu0 0.0
  %v398 = vand.u32 %v41, 4294901760
  %v399 = vsub.f32 %v41, %v398
  %v400 = vand.u32 %v399, 4294901760
  %401 = vmatmul.mubr.f32.gmra.mxu0 %v400
  %v402 = vpop.f32.mrf.mxu0
  %v403 = vadd.f32 %v322, %v402
  %v404 = vpop.f32.mrf.mxu0
  %405 = vdwg.mxu0
  %406 = vmatprep.subr.mxu0 0.0
  %407 = vmatpush1.msra.mxu0 0.0
  %408 = vmatprep.subr.mxu0 0.0
  %409 = vmatpush1.msra.mxu0 0.0
  %410 = vmatprep.subr.mxu0 0.0
  %411 = vmatpush1.msra.mxu0 0.0
  %412 = vmatprep.subr.mxu0 0.0
  %413 = vmatpush1.msra.mxu0 0.0
  %414 = vmatprep.subr.mxu0 0.0
  %415 = vmatpush1.msra.mxu0 0.0
  %416 = vmatprep.subr.mxu0 0.0
  %417 = vmatpush1.msra.mxu0 0.0
  %418 = vmatprep.subr.mxu0 0.0
  %419 = vmatpush1.msra.mxu0 0.0
  %420 = vmatprep.subr.mxu0 0.0
  %421 = vmatpush1.msra.mxu0 0.0
  %422 = vmatprep.subr.mxu0 0.0
  %v423 = vand.u32 %v38, 4294901760
  %v424 = vsub.f32 %v38, %v423
  %v425 = vand.u32 %v424, 4294901760
  %426 = vmatpush1.msra.mxu0 %v425
  %427 = vmatprep.subr.mxu0 0.0
  %v428 = vand.u32 %v37, 4294901760
  %v429 = vsub.f32 %v37, %v428
  %v430 = vand.u32 %v429, 4294901760
  %431 = vmatpush1.msra.mxu0 %v430
  %432 = vmatprep.subr.mxu0 0.0
  %v433 = vand.u32 %v36, 4294901760
  %v434 = vsub.f32 %v36, %v433
  %v435 = vand.u32 %v434, 4294901760
  %436 = vmatpush1.msra.mxu0 %v435
  %437 = vmatprep.subr.mxu0 0.0
  %v438 = vand.u32 %v35, 4294901760
  %v439 = vsub.f32 %v35, %v438
  %v440 = vand.u32 %v439, 4294901760
  %441 = vmatpush1.msra.mxu0 %v440
  %442 = vmatprep.subr.mxu0 0.0
  %v443 = vand.u32 %v34, 4294901760
  %v444 = vsub.f32 %v34, %v443
  %v445 = vand.u32 %v444, 4294901760
  %446 = vmatpush1.msra.mxu0 %v445
  %447 = vmatprep.subr.mxu0 0.0
  %v448 = vand.u32 %v33, 4294901760
  %v449 = vsub.f32 %v33, %v448
  %v450 = vand.u32 %v449, 4294901760
  %451 = vmatpush1.msra.mxu0 %v450
  %452 = vmatprep.subr.mxu0 0.0
  %v453 = vand.u32 %v32, 4294901760
  %v454 = vsub.f32 %v32, %v453
  %v455 = vand.u32 %v454, 4294901760
  %456 = vmatpush1.msra.mxu0 %v455
  %457 = vmatprep.subr.mxu0 0.0
  %v458 = vand.u32 %v31, 4294901760
  %v459 = vsub.f32 %v31, %v458
  %v460 = vand.u32 %v459, 4294901760
  %461 = vmatpush1.msra.mxu0 %v460
  %462 = vmatprep.subr.mxu0 0.0
  %463 = vmatpush2.msra.mxu0 0.0
  %464 = vmatprep.subr.mxu0 0.0
  %465 = vmatpush2.msra.mxu0 0.0
  %466 = vmatprep.subr.mxu0 0.0
  %467 = vmatpush2.msra.mxu0 0.0
  %468 = vmatprep.subr.mxu0 0.0
  %469 = vmatpush2.msra.mxu0 0.0
  %470 = vmatprep.subr.mxu0 0.0
  %471 = vmatpush2.msra.mxu0 0.0
  %472 = vmatprep.subr.mxu0 0.0
  %473 = vmatpush2.msra.mxu0 0.0
  %474 = vmatprep.subr.mxu0 0.0
  %475 = vmatpush2.msra.mxu0 0.0
  %476 = vmatprep.subr.mxu0 0.0
  %477 = vmatpush2.msra.mxu0 0.0
  %478 = vmatprep.subr.mxu0 0.0
  %479 = vmatpush2.msra.mxu0 0.0
  %480 = vmatprep.subr.mxu0 0.0
  %481 = vmatpush2.msra.mxu0 0.0
  %482 = vmatprep.subr.mxu0 0.0
  %483 = vmatpush2.msra.mxu0 0.0
  %484 = vmatprep.subr.mxu0 0.0
  %485 = vmatpush2.msra.mxu0 0.0
  %486 = vmatprep.subr.mxu0 0.0
  %487 = vmatpush2.msra.mxu0 0.0
  %488 = vmatprep.subr.mxu0 0.0
  %489 = vmatpush2.msra.mxu0 0.0
  %490 = vmatprep.subr.mxu0 0.0
  %491 = vmatpush2.msra.mxu0 0.0
  %492 = vmatprep.subr.mxu0 0.0
  %493 = vmatpush2.msra.mxu0 0.0
  %494 = vmatprep.mubr.f32.mxu0 0.0
  %v495 = vand.u32 %v41, 4294901760
  %496 = vmatmul.mubr.f32.gmra.mxu0 %v495
  %v497 = vpop.f32.mrf.mxu0
  %v498 = vadd.f32 %v403, %v497
  %v499 = vpop.f32.mrf.mxu0
  %500 = vdwg.mxu0
  %501 = vmatprep.subr.mxu0 0.0
  %502 = vmatpush1.msra.mxu0 0.0
  %503 = vmatprep.subr.mxu0 0.0
  %504 = vmatpush1.msra.mxu0 0.0
  %505 = vmatprep.subr.mxu0 0.0
  %506 = vmatpush1.msra.mxu0 0.0
  %507 = vmatprep.subr.mxu0 0.0
  %508 = vmatpush1.msra.mxu0 0.0
  %509 = vmatprep.subr.mxu0 0.0
  %510 = vmatpush1.msra.mxu0 0.0
  %511 = vmatprep.subr.mxu0 0.0
  %512 = vmatpush1.msra.mxu0 0.0
  %513 = vmatprep.subr.mxu0 0.0
  %514 = vmatpush1.msra.mxu0 0.0
  %515 = vmatprep.subr.mxu0 0.0
  %516 = vmatpush1.msra.mxu0 0.0
  %517 = vmatprep.subr.mxu0 0.0
  %v518 = vand.u32 %v38, 4294901760
  %519 = vmatpush1.msra.mxu0 %v518
  %520 = vmatprep.subr.mxu0 0.0
  %v521 = vand.u32 %v37, 4294901760
  %522 = vmatpush1.msra.mxu0 %v521
  %523 = vmatprep.subr.mxu0 0.0
  %v524 = vand.u32 %v36, 4294901760
  %525 = vmatpush1.msra.mxu0 %v524
  %526 = vmatprep.subr.mxu0 0.0
  %v527 = vand.u32 %v35, 4294901760
  %528 = vmatpush1.msra.mxu0 %v527
  %529 = vmatprep.subr.mxu0 0.0
  %v530 = vand.u32 %v34, 4294901760
  %531 = vmatpush1.msra.mxu0 %v530
  %532 = vmatprep.subr.mxu0 0.0
  %v533 = vand.u32 %v33, 4294901760
  %534 = vmatpush1.msra.mxu0 %v533
  %535 = vmatprep.subr.mxu0 0.0
  %v536 = vand.u32 %v32, 4294901760
  %537 = vmatpush1.msra.mxu0 %v536
  %538 = vmatprep.subr.mxu0 0.0
  %v539 = vand.u32 %v31, 4294901760
  %540 = vmatpush1.msra.mxu0 %v539
  %541 = vmatprep.subr.mxu0 0.0
  %542 = vmatpush2.msra.mxu0 0.0
  %543 = vmatprep.subr.mxu0 0.0
  %544 = vmatpush2.msra.mxu0 0.0
  %545 = vmatprep.subr.mxu0 0.0
  %546 = vmatpush2.msra.mxu0 0.0
  %547 = vmatprep.subr.mxu0 0.0
  %548 = vmatpush2.msra.mxu0 0.0
  %549 = vmatprep.subr.mxu0 0.0
  %550 = vmatpush2.msra.mxu0 0.0
  %551 = vmatprep.subr.mxu0 0.0
  %552 = vmatpush2.msra.mxu0 0.0
  %553 = vmatprep.subr.mxu0 0.0
  %554 = vmatpush2.msra.mxu0 0.0
  %555 = vmatprep.subr.mxu0 0.0
  %556 = vmatpush2.msra.mxu0 0.0
  %557 = vmatprep.subr.mxu0 0.0
  %558 = vmatpush2.msra.mxu0 0.0
  %559 = vmatprep.subr.mxu0 0.0
  %560 = vmatpush2.msra.mxu0 0.0
  %561 = vmatprep.subr.mxu0 0.0
  %562 = vmatpush2.msra.mxu0 0.0
  %563 = vmatprep.subr.mxu0 0.0
  %564 = vmatpush2.msra.mxu0 0.0
  %565 = vmatprep.subr.mxu0 0.0
  %566 = vmatpush2.msra.mxu0 0.0
  %567 = vmatprep.subr.mxu0 0.0
  %568 = vmatpush2.msra.mxu0 0.0
  %569 = vmatprep.subr.mxu0 0.0
  %570 = vmatpush2.msra.mxu0 0.0
  %571 = vmatprep.subr.mxu0 0.0
  %572 = vmatpush2.msra.mxu0 0.0
  %573 = vmatprep.mubr.f32.mxu0 0.0
  %v574 = vand.u32 %v41, 4294901760
  %575 = vmatmul.mubr.f32.gmra.mxu0 %v574
  %v576 = vpop.f32.mrf.mxu0
  %v577 = vadd.f32 %v498, %v576
  %v578 = vpop.f32.mrf.mxu0
  %579 = vdwg.mxu0
  %v580 = vld [vmem:[%s3] sm:$0xff]
  %v581 = vld [vmem:[%s3 + $0x8] sm:$0xff]
  %v582 = vld [vmem:[%s3 + $0x10] sm:$0xff]
  %v583 = vld [vmem:[%s3 + $0x18] sm:$0xff]
  %v584 = vld [vmem:[%s3 + $0x20] sm:$0xff]
  %v585 = vld [vmem:[%s3 + $0x28] sm:$0xff]
  %v586 = vld [vmem:[%s3 + $0x30] sm:$0xff]
  %v587 = vld [vmem:[%s3 + $0x38] sm:$0xff]
  %v589 = vsel %vm39, %v30, 0
  %591 = vmatprep.subr.mxu0 0.0
  %592 = vmatpush1.msra.mxu0 0.0
  %593 = vmatprep.subr.mxu0 0.0
  %594 = vmatpush1.msra.mxu0 0.0
  %595 = vmatprep.subr.mxu0 0.0
  %596 = vmatpush1.msra.mxu0 0.0
  %597 = vmatprep.subr.mxu0 0.0
  %598 = vmatpush1.msra.mxu0 0.0
  %599 = vmatprep.subr.mxu0 0.0
  %600 = vmatpush1.msra.mxu0 0.0
  %601 = vmatprep.subr.mxu0 0.0
  %602 = vmatpush1.msra.mxu0 0.0
  %603 = vmatprep.subr.mxu0 0.0
  %604 = vmatpush1.msra.mxu0 0.0
  %605 = vmatprep.subr.mxu0 0.0
  %606 = vmatpush1.msra.mxu0 0.0
  %607 = vmatprep.subr.mxu0 0.0
  %v608 = vand.u32 %v587, 4294901760
  %609 = vmatpush1.msra.mxu0 %v608
  %610 = vmatprep.subr.mxu0 0.0
  %v611 = vand.u32 %v586, 4294901760
  %612 = vmatpush1.msra.mxu0 %v611
  %613 = vmatprep.subr.mxu0 0.0
  %v614 = vand.u32 %v585, 4294901760
  %615 = vmatpush1.msra.mxu0 %v614
  %616 = vmatprep.subr.mxu0 0.0
  %v617 = vand.u32 %v584, 4294901760
  %618 = vmatpush1.msra.mxu0 %v617
  %619 = vmatprep.subr.mxu0 0.0
  %v620 = vand.u32 %v583, 4294901760
  %621 = vmatpush1.msra.mxu0 %v620
  %622 = vmatprep.subr.mxu0 0.0
  %v623 = vand.u32 %v582, 4294901760
  %624 = vmatpush1.msra.mxu0 %v623
  %625 = vmatprep.subr.mxu0 0.0
  %v626 = vand.u32 %v581, 4294901760
  %627 = vmatpush1.msra.mxu0 %v626
  %628 = vmatprep.subr.mxu0 0.0
  %v629 = vand.u32 %v580, 4294901760
  %630 = vmatpush1.msra.mxu0 %v629
  %631 = vmatprep.subr.mxu0 0.0
  %632 = vmatpush2.msra.mxu0 0.0
  %633 = vmatprep.subr.mxu0 0.0
  %634 = vmatpush2.msra.mxu0 0.0
  %635 = vmatprep.subr.mxu0 0.0
  %636 = vmatpush2.msra.mxu0 0.0
  %637 = vmatprep.subr.mxu0 0.0
  %638 = vmatpush2.msra.mxu0 0.0
  %639 = vmatprep.subr.mxu0 0.0
  %640 = vmatpush2.msra.mxu0 0.0
  %641 = vmatprep.subr.mxu0 0.0
  %642 = vmatpush2.msra.mxu0 0.0
  %643 = vmatprep.subr.mxu0 0.0
  %644 = vmatpush2.msra.mxu0 0.0
  %645 = vmatprep.subr.mxu0 0.0
  %646 = vmatpush2.msra.mxu0 0.0
  %647 = vmatprep.subr.mxu0 0.0
  %648 = vmatpush2.msra.mxu0 0.0
  %649 = vmatprep.subr.mxu0 0.0
  %650 = vmatpush2.msra.mxu0 0.0
  %651 = vmatprep.subr.mxu0 0.0
  %652 = vmatpush2.msra.mxu0 0.0
  %653 = vmatprep.subr.mxu0 0.0
  %654 = vmatpush2.msra.mxu0 0.0
  %655 = vmatprep.subr.mxu0 0.0
  %656 = vmatpush2.msra.mxu0 0.0
  %657 = vmatprep.subr.mxu0 0.0
  %658 = vmatpush2.msra.mxu0 0.0
  %659 = vmatprep.subr.mxu0 0.0
  %660 = vmatpush2.msra.mxu0 0.0
  %661 = vmatprep.subr.mxu0 0.0
  %662 = vmatpush2.msra.mxu0 0.0
  %663 = vmatprep.mubr.f32.mxu0 0.0
  %v664 = vand.u32 %v589, 4294901760
  %v665 = vsub.f32 %v589, %v664
  %v666 = vand.u32 %v665, 4294901760
  %v667 = vsub.f32 %v665, %v666
  %v668 = vand.u32 %v667, 4294901760
  %669 = vmatmul.mubr.f32.gmra.mxu0 %v668
  %v670 = vpop.f32.mrf.mxu0
  %v671 = vadd.f32 0.0, %v670
  %v672 = vpop.f32.mrf.mxu0
  %673 = vdwg.mxu0
  %674 = vmatprep.subr.mxu0 0.0
  %675 = vmatpush1.msra.mxu0 0.0
  %676 = vmatprep.subr.mxu0 0.0
  %677 = vmatpush1.msra.mxu0 0.0
  %678 = vmatprep.subr.mxu0 0.0
  %679 = vmatpush1.msra.mxu0 0.0
  %680 = vmatprep.subr.mxu0 0.0
  %681 = vmatpush1.msra.mxu0 0.0
  %682 = vmatprep.subr.mxu0 0.0
  %683 = vmatpush1.msra.mxu0 0.0
  %684 = vmatprep.subr.mxu0 0.0
  %685 = vmatpush1.msra.mxu0 0.0
  %686 = vmatprep.subr.mxu0 0.0
  %687 = vmatpush1.msra.mxu0 0.0
  %688 = vmatprep.subr.mxu0 0.0
  %689 = vmatpush1.msra.mxu0 0.0
  %690 = vmatprep.subr.mxu0 0.0
  %v691 = vand.u32 %v587, 4294901760
  %v692 = vsub.f32 %v587, %v691
  %v693 = vand.u32 %v692, 4294901760
  %v694 = vsub.f32 %v692, %v693
  %v695 = vand.u32 %v694, 4294901760
  %696 = vmatpush1.msra.mxu0 %v695
  %697 = vmatprep.subr.mxu0 0.0
  %v698 = vand.u32 %v586, 4294901760
  %v699 = vsub.f32 %v586, %v698
  %v700 = vand.u32 %v699, 4294901760
  %v701 = vsub.f32 %v699, %v700
  %v702 = vand.u32 %v701, 4294901760
  %703 = vmatpush1.msra.mxu0 %v702
  %704 = vmatprep.subr.mxu0 0.0
  %v705 = vand.u32 %v585, 4294901760
  %v706 = vsub.f32 %v585, %v705
  %v707 = vand.u32 %v706, 4294901760
  %v708 = vsub.f32 %v706, %v707
  %v709 = vand.u32 %v708, 4294901760
  %710 = vmatpush1.msra.mxu0 %v709
  %711 = vmatprep.subr.mxu0 0.0
  %v712 = vand.u32 %v584, 4294901760
  %v713 = vsub.f32 %v584, %v712
  %v714 = vand.u32 %v713, 4294901760
  %v715 = vsub.f32 %v713, %v714
  %v716 = vand.u32 %v715, 4294901760
  %717 = vmatpush1.msra.mxu0 %v716
  %718 = vmatprep.subr.mxu0 0.0
  %v719 = vand.u32 %v583, 4294901760
  %v720 = vsub.f32 %v583, %v719
  %v721 = vand.u32 %v720, 4294901760
  %v722 = vsub.f32 %v720, %v721
  %v723 = vand.u32 %v722, 4294901760
  %724 = vmatpush1.msra.mxu0 %v723
  %725 = vmatprep.subr.mxu0 0.0
  %v726 = vand.u32 %v582, 4294901760
  %v727 = vsub.f32 %v582, %v726
  %v728 = vand.u32 %v727, 4294901760
  %v729 = vsub.f32 %v727, %v728
  %v730 = vand.u32 %v729, 4294901760
  %731 = vmatpush1.msra.mxu0 %v730
  %732 = vmatprep.subr.mxu0 0.0
  %v733 = vand.u32 %v581, 4294901760
  %v734 = vsub.f32 %v581, %v733
  %v735 = vand.u32 %v734, 4294901760
  %v736 = vsub.f32 %v734, %v735
  %v737 = vand.u32 %v736, 4294901760
  %738 = vmatpush1.msra.mxu0 %v737
  %739 = vmatprep.subr.mxu0 0.0
  %v740 = vand.u32 %v580, 4294901760
  %v741 = vsub.f32 %v580, %v740
  %v742 = vand.u32 %v741, 4294901760
  %v743 = vsub.f32 %v741, %v742
  %v744 = vand.u32 %v743, 4294901760
  %745 = vmatpush1.msra.mxu0 %v744
  %746 = vmatprep.subr.mxu0 0.0
  %747 = vmatpush2.msra.mxu0 0.0
  %748 = vmatprep.subr.mxu0 0.0
  %749 = vmatpush2.msra.mxu0 0.0
  %750 = vmatprep.subr.mxu0 0.0
  %751 = vmatpush2.msra.mxu0 0.0
  %752 = vmatprep.subr.mxu0 0.0
  %753 = vmatpush2.msra.mxu0 0.0
  %754 = vmatprep.subr.mxu0 0.0
  %755 = vmatpush2.msra.mxu0 0.0
  %756 = vmatprep.subr.mxu0 0.0
  %757 = vmatpush2.msra.mxu0 0.0
  %758 = vmatprep.subr.mxu0 0.0
  %759 = vmatpush2.msra.mxu0 0.0
  %760 = vmatprep.subr.mxu0 0.0
  %761 = vmatpush2.msra.mxu0 0.0
  %762 = vmatprep.subr.mxu0 0.0
  %763 = vmatpush2.msra.mxu0 0.0
  %764 = vmatprep.subr.mxu0 0.0
  %765 = vmatpush2.msra.mxu0 0.0
  %766 = vmatprep.subr.mxu0 0.0
  %767 = vmatpush2.msra.mxu0 0.0
  %768 = vmatprep.subr.mxu0 0.0
  %769 = vmatpush2.msra.mxu0 0.0
  %770 = vmatprep.subr.mxu0 0.0
  %771 = vmatpush2.msra.mxu0 0.0
  %772 = vmatprep.subr.mxu0 0.0
  %773 = vmatpush2.msra.mxu0 0.0
  %774 = vmatprep.subr.mxu0 0.0
  %775 = vmatpush2.msra.mxu0 0.0
  %776 = vmatprep.subr.mxu0 0.0
  %777 = vmatpush2.msra.mxu0 0.0
  %778 = vmatprep.mubr.f32.mxu0 0.0
  %v779 = vand.u32 %v589, 4294901760
  %780 = vmatmul.mubr.f32.gmra.mxu0 %v779
  %v781 = vpop.f32.mrf.mxu0
  %v782 = vadd.f32 %v671, %v781
  %v783 = vpop.f32.mrf.mxu0
  %784 = vdwg.mxu0
  %785 = vmatprep.subr.mxu0 0.0
  %786 = vmatpush1.msra.mxu0 0.0
  %787 = vmatprep.subr.mxu0 0.0
  %788 = vmatpush1.msra.mxu0 0.0
  %789 = vmatprep.subr.mxu0 0.0
  %790 = vmatpush1.msra.mxu0 0.0
  %791 = vmatprep.subr.mxu0 0.0
  %792 = vmatpush1.msra.mxu0 0.0
  %793 = vmatprep.subr.mxu0 0.0
  %794 = vmatpush1.msra.mxu0 0.0
  %795 = vmatprep.subr.mxu0 0.0
  %796 = vmatpush1.msra.mxu0 0.0
  %797 = vmatprep.subr.mxu0 0.0
  %798 = vmatpush1.msra.mxu0 0.0
  %799 = vmatprep.subr.mxu0 0.0
  %800 = vmatpush1.msra.mxu0 0.0
  %801 = vmatprep.subr.mxu0 0.0
  %v802 = vand.u32 %v587, 4294901760
  %v803 = vsub.f32 %v587, %v802
  %804 = vmatpush1.msra.mxu0 %v803
  %805 = vmatprep.subr.mxu0 0.0
  %v806 = vand.u32 %v586, 4294901760
  %v807 = vsub.f32 %v586, %v806
  %808 = vmatpush1.msra.mxu0 %v807
  %809 = vmatprep.subr.mxu0 0.0
  %v810 = vand.u32 %v585, 4294901760
  %v811 = vsub.f32 %v585, %v810
  %812 = vmatpush1.msra.mxu0 %v811
  %813 = vmatprep.subr.mxu0 0.0
  %v814 = vand.u32 %v584, 4294901760
  %v815 = vsub.f32 %v584, %v814
  %816 = vmatpush1.msra.mxu0 %v815
  %817 = vmatprep.subr.mxu0 0.0
  %v818 = vand.u32 %v583, 4294901760
  %v819 = vsub.f32 %v583, %v818
  %820 = vmatpush1.msra.mxu0 %v819
  %821 = vmatprep.subr.mxu0 0.0
  %v822 = vand.u32 %v582, 4294901760
  %v823 = vsub.f32 %v582, %v822
  %824 = vmatpush1.msra.mxu0 %v823
  %825 = vmatprep.subr.mxu0 0.0
  %v826 = vand.u32 %v581, 4294901760
  %v827 = vsub.f32 %v581, %v826
  %828 = vmatpush1.msra.mxu0 %v827
  %829 = vmatprep.subr.mxu0 0.0
  %v830 = vand.u32 %v580, 4294901760
  %v831 = vsub.f32 %v580, %v830
  %832 = vmatpush1.msra.mxu0 %v831
  %833 = vmatprep.subr.mxu0 0.0
  %834 = vmatpush2.msra.mxu0 0.0
  %835 = vmatprep.subr.mxu0 0.0
  %836 = vmatpush2.msra.mxu0 0.0
  %837 = vmatprep.subr.mxu0 0.0
  %838 = vmatpush2.msra.mxu0 0.0
  %839 = vmatprep.subr.mxu0 0.0
  %840 = vmatpush2.msra.mxu0 0.0
  %841 = vmatprep.subr.mxu0 0.0
  %842 = vmatpush2.msra.mxu0 0.0
  %843 = vmatprep.subr.mxu0 0.0
  %844 = vmatpush2.msra.mxu0 0.0
  %845 = vmatprep.subr.mxu0 0.0
  %846 = vmatpush2.msra.mxu0 0.0
  %847 = vmatprep.subr.mxu0 0.0
  %848 = vmatpush2.msra.mxu0 0.0
  %849 = vmatprep.subr.mxu0 0.0
  %850 = vmatpush2.msra.mxu0 0.0
  %851 = vmatprep.subr.mxu0 0.0
  %852 = vmatpush2.msra.mxu0 0.0
  %853 = vmatprep.subr.mxu0 0.0
  %854 = vmatpush2.msra.mxu0 0.0
  %855 = vmatprep.subr.mxu0 0.0
  %856 = vmatpush2.msra.mxu0 0.0
  %857 = vmatprep.subr.mxu0 0.0
  %858 = vmatpush2.msra.mxu0 0.0
  %859 = vmatprep.subr.mxu0 0.0
  %860 = vmatpush2.msra.mxu0 0.0
  %861 = vmatprep.subr.mxu0 0.0
  %862 = vmatpush2.msra.mxu0 0.0
  %863 = vmatprep.subr.mxu0 0.0
  %864 = vmatpush2.msra.mxu0 0.0
  %865 = vmatprep.mubr.f32.mxu0 0.0
  %v866 = vand.u32 %v589, 4294901760
  %v867 = vsub.f32 %v589, %v866
  %868 = vmatmul.mubr.f32.gmra.mxu0 %v867
  %v869 = vpop.f32.mrf.mxu0
  %v870 = vadd.f32 %v782, %v869
  %v871 = vpop.f32.mrf.mxu0
  %872 = vdwg.mxu0
  %873 = vmatprep.subr.mxu0 0.0
  %874 = vmatpush1.msra.mxu0 0.0
  %875 = vmatprep.subr.mxu0 0.0
  %876 = vmatpush1.msra.mxu0 0.0
  %877 = vmatprep.subr.mxu0 0.0
  %878 = vmatpush1.msra.mxu0 0.0
  %879 = vmatprep.subr.mxu0 0.0
  %880 = vmatpush1.msra.mxu0 0.0
  %881 = vmatprep.subr.mxu0 0.0
  %882 = vmatpush1.msra.mxu0 0.0
  %883 = vmatprep.subr.mxu0 0.0
  %884 = vmatpush1.msra.mxu0 0.0
  %885 = vmatprep.subr.mxu0 0.0
  %886 = vmatpush1.msra.mxu0 0.0
  %887 = vmatprep.subr.mxu0 0.0
  %888 = vmatpush1.msra.mxu0 0.0
  %889 = vmatprep.subr.mxu0 0.0
  %v890 = vand.u32 %v587, 4294901760
  %891 = vmatpush1.msra.mxu0 %v890
  %892 = vmatprep.subr.mxu0 0.0
  %v893 = vand.u32 %v586, 4294901760
  %894 = vmatpush1.msra.mxu0 %v893
  %895 = vmatprep.subr.mxu0 0.0
  %v896 = vand.u32 %v585, 4294901760
  %897 = vmatpush1.msra.mxu0 %v896
  %898 = vmatprep.subr.mxu0 0.0
  %v899 = vand.u32 %v584, 4294901760
  %900 = vmatpush1.msra.mxu0 %v899
  %901 = vmatprep.subr.mxu0 0.0
  %v902 = vand.u32 %v583, 4294901760
  %903 = vmatpush1.msra.mxu0 %v902
  %904 = vmatprep.subr.mxu0 0.0
  %v905 = vand.u32 %v582, 4294901760
  %906 = vmatpush1.msra.mxu0 %v905
  %907 = vmatprep.subr.mxu0 0.0
  %v908 = vand.u32 %v581, 4294901760
  %909 = vmatpush1.msra.mxu0 %v908
  %910 = vmatprep.subr.mxu0 0.0
  %v911 = vand.u32 %v580, 4294901760
  %912 = vmatpush1.msra.mxu0 %v911
  %913 = vmatprep.subr.mxu0 0.0
  %914 = vmatpush2.msra.mxu0 0.0
  %915 = vmatprep.subr.mxu0 0.0
  %916 = vmatpush2.msra.mxu0 0.0
  %917 = vmatprep.subr.mxu0 0.0
  %918 = vmatpush2.msra.mxu0 0.0
  %919 = vmatprep.subr.mxu0 0.0
  %920 = vmatpush2.msra.mxu0 0.0
  %921 = vmatprep.subr.mxu0 0.0
  %922 = vmatpush2.msra.mxu0 0.0
  %923 = vmatprep.subr.mxu0 0.0
  %924 = vmatpush2.msra.mxu0 0.0
  %925 = vmatprep.subr.mxu0 0.0
  %926 = vmatpush2.msra.mxu0 0.0
  %927 = vmatprep.subr.mxu0 0.0
  %928 = vmatpush2.msra.mxu0 0.0
  %929 = vmatprep.subr.mxu0 0.0
  %930 = vmatpush2.msra.mxu0 0.0
  %931 = vmatprep.subr.mxu0 0.0
  %932 = vmatpush2.msra.mxu0 0.0
  %933 = vmatprep.subr.mxu0 0.0
  %934 = vmatpush2.msra.mxu0 0.0
  %935 = vmatprep.subr.mxu0 0.0
  %936 = vmatpush2.msra.mxu0 0.0
  %937 = vmatprep.subr.mxu0 0.0
  %938 = vmatpush2.msra.mxu0 0.0
  %939 = vmatprep.subr.mxu0 0.0
  %940 = vmatpush2.msra.mxu0 0.0
  %941 = vmatprep.subr.mxu0 0.0
  %942 = vmatpush2.msra.mxu0 0.0
  %943 = vmatprep.subr.mxu0 0.0
  %944 = vmatpush2.msra.mxu0 0.0
  %945 = vmatprep.mubr.f32.mxu0 0.0
  %v946 = vand.u32 %v589, 4294901760
  %v947 = vsub.f32 %v589, %v946
  %v948 = vand.u32 %v947, 4294901760
  %949 = vmatmul.mubr.f32.gmra.mxu0 %v948
  %v950 = vpop.f32.mrf.mxu0
  %v951 = vadd.f32 %v870, %v950
  %v952 = vpop.f32.mrf.mxu0
  %953 = vdwg.mxu0
  %954 = vmatprep.subr.mxu0 0.0
  %955 = vmatpush1.msra.mxu0 0.0
  %956 = vmatprep.subr.mxu0 0.0
  %957 = vmatpush1.msra.mxu0 0.0
  %958 = vmatprep.subr.mxu0 0.0
  %959 = vmatpush1.msra.mxu0 0.0
  %960 = vmatprep.subr.mxu0 0.0
  %961 = vmatpush1.msra.mxu0 0.0
  %962 = vmatprep.subr.mxu0 0.0
  %963 = vmatpush1.msra.mxu0 0.0
  %964 = vmatprep.subr.mxu0 0.0
  %965 = vmatpush1.msra.mxu0 0.0
  %966 = vmatprep.subr.mxu0 0.0
  %967 = vmatpush1.msra.mxu0 0.0
  %968 = vmatprep.subr.mxu0 0.0
  %969 = vmatpush1.msra.mxu0 0.0
  %970 = vmatprep.subr.mxu0 0.0
  %v971 = vand.u32 %v587, 4294901760
  %v972 = vsub.f32 %v587, %v971
  %v973 = vand.u32 %v972, 4294901760
  %974 = vmatpush1.msra.mxu0 %v973
  %975 = vmatprep.subr.mxu0 0.0
  %v976 = vand.u32 %v586, 4294901760
  %v977 = vsub.f32 %v586, %v976
  %v978 = vand.u32 %v977, 4294901760
  %979 = vmatpush1.msra.mxu0 %v978
  %980 = vmatprep.subr.mxu0 0.0
  %v981 = vand.u32 %v585, 4294901760
  %v982 = vsub.f32 %v585, %v981
  %v983 = vand.u32 %v982, 4294901760
  %984 = vmatpush1.msra.mxu0 %v983
  %985 = vmatprep.subr.mxu0 0.0
  %v986 = vand.u32 %v584, 4294901760
  %v987 = vsub.f32 %v584, %v986
  %v988 = vand.u32 %v987, 4294901760
  %989 = vmatpush1.msra.mxu0 %v988
  %990 = vmatprep.subr.mxu0 0.0
  %v991 = vand.u32 %v583, 4294901760
  %v992 = vsub.f32 %v583, %v991
  %v993 = vand.u32 %v992, 4294901760
  %994 = vmatpush1.msra.mxu0 %v993
  %995 = vmatprep.subr.mxu0 0.0
  %v996 = vand.u32 %v582, 4294901760
  %v997 = vsub.f32 %v582, %v996
  %v998 = vand.u32 %v997, 4294901760
  %999 = vmatpush1.msra.mxu0 %v998
  %1000 = vmatprep.subr.mxu0 0.0
  %v1001 = vand.u32 %v581, 4294901760
  %v1002 = vsub.f32 %v581, %v1001
  %v1003 = vand.u32 %v1002, 4294901760
  %1004 = vmatpush1.msra.mxu0 %v1003
  %1005 = vmatprep.subr.mxu0 0.0
  %v1006 = vand.u32 %v580, 4294901760
  %v1007 = vsub.f32 %v580, %v1006
  %v1008 = vand.u32 %v1007, 4294901760
  %1009 = vmatpush1.msra.mxu0 %v1008
  %1010 = vmatprep.subr.mxu0 0.0
  %1011 = vmatpush2.msra.mxu0 0.0
  %1012 = vmatprep.subr.mxu0 0.0
  %1013 = vmatpush2.msra.mxu0 0.0
  %1014 = vmatprep.subr.mxu0 0.0
  %1015 = vmatpush2.msra.mxu0 0.0
  %1016 = vmatprep.subr.mxu0 0.0
  %1017 = vmatpush2.msra.mxu0 0.0
  %1018 = vmatprep.subr.mxu0 0.0
  %1019 = vmatpush2.msra.mxu0 0.0
  %1020 = vmatprep.subr.mxu0 0.0
  %1021 = vmatpush2.msra.mxu0 0.0
  %1022 = vmatprep.subr.mxu0 0.0
  %1023 = vmatpush2.msra.mxu0 0.0
  %1024 = vmatprep.subr.mxu0 0.0
  %1025 = vmatpush2.msra.mxu0 0.0
  %1026 = vmatprep.subr.mxu0 0.0
  %1027 = vmatpush2.msra.mxu0 0.0
  %1028 = vmatprep.subr.mxu0 0.0
  %1029 = vmatpush2.msra.mxu0 0.0
  %1030 = vmatprep.subr.mxu0 0.0
  %1031 = vmatpush2.msra.mxu0 0.0
  %1032 = vmatprep.subr.mxu0 0.0
  %1033 = vmatpush2.msra.mxu0 0.0
  %1034 = vmatprep.subr.mxu0 0.0
  %1035 = vmatpush2.msra.mxu0 0.0
  %1036 = vmatprep.subr.mxu0 0.0
  %1037 = vmatpush2.msra.mxu0 0.0
  %1038 = vmatprep.subr.mxu0 0.0
  %1039 = vmatpush2.msra.mxu0 0.0
  %1040 = vmatprep.subr.mxu0 0.0
  %1041 = vmatpush2.msra.mxu0 0.0
  %1042 = vmatprep.mubr.f32.mxu0 0.0
  %v1043 = vand.u32 %v589, 4294901760
  %1044 = vmatmul.mubr.f32.gmra.mxu0 %v1043
  %v1045 = vpop.f32.mrf.mxu0
  %v1046 = vadd.f32 %v951, %v1045
  %v1047 = vpop.f32.mrf.mxu0
  %1048 = vdwg.mxu0
  %1049 = vmatprep.subr.mxu0 0.0
  %1050 = vmatpush1.msra.mxu0 0.0
  %1051 = vmatprep.subr.mxu0 0.0
  %1052 = vmatpush1.msra.mxu0 0.0
  %1053 = vmatprep.subr.mxu0 0.0
  %1054 = vmatpush1.msra.mxu0 0.0
  %1055 = vmatprep.subr.mxu0 0.0
  %1056 = vmatpush1.msra.mxu0 0.0
  %1057 = vmatprep.subr.mxu0 0.0
  %1058 = vmatpush1.msra.mxu0 0.0
  %1059 = vmatprep.subr.mxu0 0.0
  %1060 = vmatpush1.msra.mxu0 0.0
  %1061 = vmatprep.subr.mxu0 0.0
  %1062 = vmatpush1.msra.mxu0 0.0
  %1063 = vmatprep.subr.mxu0 0.0
  %1064 = vmatpush1.msra.mxu0 0.0
  %1065 = vmatprep.subr.mxu0 0.0
  %v1066 = vand.u32 %v587, 4294901760
  %1067 = vmatpush1.msra.mxu0 %v1066
  %1068 = vmatprep.subr.mxu0 0.0
  %v1069 = vand.u32 %v586, 4294901760
  %1070 = vmatpush1.msra.mxu0 %v1069
  %1071 = vmatprep.subr.mxu0 0.0
  %v1072 = vand.u32 %v585, 4294901760
  %1073 = vmatpush1.msra.mxu0 %v1072
  %1074 = vmatprep.subr.mxu0 0.0
  %v1075 = vand.u32 %v584, 4294901760
  %1076 = vmatpush1.msra.mxu0 %v1075
  %1077 = vmatprep.subr.mxu0 0.0
  %v1078 = vand.u32 %v583, 4294901760
  %1079 = vmatpush1.msra.mxu0 %v1078
  %1080 = vmatprep.subr.mxu0 0.0
  %v1081 = vand.u32 %v582, 4294901760
  %1082 = vmatpush1.msra.mxu0 %v1081
  %1083 = vmatprep.subr.mxu0 0.0
  %v1084 = vand.u32 %v581, 4294901760
  %1085 = vmatpush1.msra.mxu0 %v1084
  %1086 = vmatprep.subr.mxu0 0.0
  %v1087 = vand.u32 %v580, 4294901760
  %1088 = vmatpush1.msra.mxu0 %v1087
  %1089 = vmatprep.subr.mxu0 0.0
  %1090 = vmatpush2.msra.mxu0 0.0
  %1091 = vmatprep.subr.mxu0 0.0
  %1092 = vmatpush2.msra.mxu0 0.0
  %1093 = vmatprep.subr.mxu0 0.0
  %1094 = vmatpush2.msra.mxu0 0.0
  %1095 = vmatprep.subr.mxu0 0.0
  %1096 = vmatpush2.msra.mxu0 0.0
  %1097 = vmatprep.subr.mxu0 0.0
  %1098 = vmatpush2.msra.mxu0 0.0
  %1099 = vmatprep.subr.mxu0 0.0
  %1100 = vmatpush2.msra.mxu0 0.0
  %1101 = vmatprep.subr.mxu0 0.0
  %1102 = vmatpush2.msra.mxu0 0.0
  %1103 = vmatprep.subr.mxu0 0.0
  %1104 = vmatpush2.msra.mxu0 0.0
  %1105 = vmatprep.subr.mxu0 0.0
  %1106 = vmatpush2.msra.mxu0 0.0
  %1107 = vmatprep.subr.mxu0 0.0
  %1108 = vmatpush2.msra.mxu0 0.0
  %1109 = vmatprep.subr.mxu0 0.0
  %1110 = vmatpush2.msra.mxu0 0.0
  %1111 = vmatprep.subr.mxu0 0.0
  %1112 = vmatpush2.msra.mxu0 0.0
  %1113 = vmatprep.subr.mxu0 0.0
  %1114 = vmatpush2.msra.mxu0 0.0
  %1115 = vmatprep.subr.mxu0 0.0
  %1116 = vmatpush2.msra.mxu0 0.0
  %1117 = vmatprep.subr.mxu0 0.0
  %1118 = vmatpush2.msra.mxu0 0.0
  %1119 = vmatprep.subr.mxu0 0.0
  %1120 = vmatpush2.msra.mxu0 0.0
  %1121 = vmatprep.mubr.f32.mxu0 0.0
  %v1122 = vand.u32 %v589, 4294901760
  %1123 = vmatmul.mubr.f32.gmra.mxu0 %v1122
  %v1124 = vpop.f32.mrf.mxu0
  %v1125 = vadd.f32 %v1046, %v1124
  %v1126 = vpop.f32.mrf.mxu0
  %1127 = vdwg.mxu0
  %v1128 = vlaneseq
  %v1129 = vshrl.u32 %v1128, 7
  %v1130 = vsub.s32 0, %v1129
  %v1131 = vrot.slane %v577, %v1130
  %v1132 = vmul.f32 %v1131, %v1125
  %v1133 = vlaneseq
  %v1134 = vshrl.u32 %v1133, 7
  %v1135 = vsub.s32 4, %v1134
  %v1136 = vrot.slane %v577, %v1135
  %v1137 = vmul.f32 %v1136, %v1125
  %v1139 = vrot.slane %v1137, 4
  %v1141 = vadd.f32 %v1132, %v1139
  %v1142 = vlaneseq
  %v1143 = vshrl.u32 %v1142, 7
  %v1144 = vsub.s32 1, %v1143
  %v1145 = vrot.slane %v577, %v1144
  %v1146 = vmul.f32 %v1145, %v1125
  %v1147 = vlaneseq
  %v1148 = vshrl.u32 %v1147, 7
  %v1149 = vsub.s32 5, %v1148
  %v1150 = vrot.slane %v577, %v1149
  %v1151 = vmul.f32 %v1150, %v1125
  %v1153 = vrot.slane %v1151, 4
  %v1155 = vadd.f32 %v1146, %v1153
  %v1156 = vlaneseq
  %v1157 = vshrl.u32 %v1156, 7
  %v1158 = vsub.s32 2, %v1157
  %v1159 = vrot.slane %v577, %v1158
  %v1160 = vmul.f32 %v1159, %v1125
  %v1161 = vlaneseq
  %v1162 = vshrl.u32 %v1161, 7
  %v1163 = vsub.s32 6, %v1162
  %v1164 = vrot.slane %v577, %v1163
  %v1165 = vmul.f32 %v1164, %v1125
  %v1167 = vrot.slane %v1165, 4
  %v1169 = vadd.f32 %v1160, %v1167
  %v1170 = vlaneseq
  %v1171 = vshrl.u32 %v1170, 7
  %v1172 = vsub.s32 3, %v1171
  %v1173 = vrot.slane %v577, %v1172
  %v1174 = vmul.f32 %v1173, %v1125
  %v1175 = vlaneseq
  %v1176 = vshrl.u32 %v1175, 7
  %v1177 = vsub.s32 7, %v1176
  %v1178 = vrot.slane %v577, %v1177
  %v1179 = vmul.f32 %v1178, %v1125
  %v1181 = vrot.slane %v1179, 4
  %v1183 = vadd.f32 %v1174, %v1181
  %v1184 = vld [vmem:[%s4] sm:$0xff]
  %v1185 = vld [vmem:[%s4 + $0x8] sm:$0xff]
  %v1186 = vld [vmem:[%s4 + $0x10] sm:$0xff]
  %v1187 = vld [vmem:[%s4 + $0x18] sm:$0xff]
  %v1188 = vld [vmem:[%s4 + $0x20] sm:$0xff]
  %v1189 = vld [vmem:[%s4 + $0x28] sm:$0xff]
  %v1190 = vld [vmem:[%s4 + $0x30] sm:$0xff]
  %v1191 = vld [vmem:[%s4 + $0x38] sm:$0xff]
  %v1192 = vld [vmem:[%s4 + $0x40] sm:$0xff]
  %v1193 = vld [vmem:[%s4 + $0x48] sm:$0xff]
  %v1194 = vld [vmem:[%s4 + $0x50] sm:$0xff]
  %v1195 = vld [vmem:[%s4 + $0x58] sm:$0xff]
  %v1196 = vld [vmem:[%s4 + $0x60] sm:$0xff]
  %v1197 = vld [vmem:[%s4 + $0x68] sm:$0xff]
  %v1198 = vld [vmem:[%s4 + $0x70] sm:$0xff]
  %v1199 = vld [vmem:[%s4 + $0x78] sm:$0xff]
  %v1200 = vld [vmem:[%s4 + $0x80] sm:$0xff]
  %v1201 = vld [vmem:[%s4 + $0x88] sm:$0xff]
  %v1202 = vld [vmem:[%s4 + $0x90] sm:$0xff]
  %v1203 = vld [vmem:[%s4 + $0x98] sm:$0xff]
  %v1204 = vld [vmem:[%s4 + $0xa0] sm:$0xff]
  %v1205 = vld [vmem:[%s4 + $0xa8] sm:$0xff]
  %v1206 = vld [vmem:[%s4 + $0xb0] sm:$0xff]
  %v1207 = vld [vmem:[%s4 + $0xb8] sm:$0xff]
  %v1208 = vld [vmem:[%s4 + $0xc0] sm:$0xff]
  %v1209 = vld [vmem:[%s4 + $0xc8] sm:$0xff]
  %v1210 = vld [vmem:[%s4 + $0xd0] sm:$0xff]
  %v1211 = vld [vmem:[%s4 + $0xd8] sm:$0xff]
  %v1212 = vld [vmem:[%s4 + $0xe0] sm:$0xff]
  %v1213 = vld [vmem:[%s4 + $0xe8] sm:$0xff]
  %v1214 = vld [vmem:[%s4 + $0xf0] sm:$0xff]
  %v1215 = vld [vmem:[%s4 + $0xf8] sm:$0xff]
  %v1216 = vld [vmem:[%s4 + $0x100] sm:$0xff]
  %v1217 = vld [vmem:[%s4 + $0x108] sm:$0xff]
  %v1218 = vld [vmem:[%s4 + $0x110] sm:$0xff]
  %v1219 = vld [vmem:[%s4 + $0x118] sm:$0xff]
  %v1220 = vld [vmem:[%s4 + $0x120] sm:$0xff]
  %v1221 = vld [vmem:[%s4 + $0x128] sm:$0xff]
  %v1222 = vld [vmem:[%s4 + $0x130] sm:$0xff]
  %v1223 = vld [vmem:[%s4 + $0x138] sm:$0xff]
  %v1224 = vld [vmem:[%s4 + $0x140] sm:$0xff]
  %v1225 = vld [vmem:[%s4 + $0x148] sm:$0xff]
  %v1226 = vld [vmem:[%s4 + $0x150] sm:$0xff]
  %v1227 = vld [vmem:[%s4 + $0x158] sm:$0xff]
  %v1228 = vld [vmem:[%s4 + $0x160] sm:$0xff]
  %v1229 = vld [vmem:[%s4 + $0x168] sm:$0xff]
  %v1230 = vld [vmem:[%s4 + $0x170] sm:$0xff]
  %v1231 = vld [vmem:[%s4 + $0x178] sm:$0xff]
  %v1232 = vld [vmem:[%s4 + $0x180] sm:$0xff]
  %v1233 = vld [vmem:[%s4 + $0x188] sm:$0xff]
  %v1234 = vld [vmem:[%s4 + $0x190] sm:$0xff]
  %v1235 = vld [vmem:[%s4 + $0x198] sm:$0xff]
  %v1236 = vld [vmem:[%s4 + $0x1a0] sm:$0xff]
  %v1237 = vld [vmem:[%s4 + $0x1a8] sm:$0xff]
  %v1238 = vld [vmem:[%s4 + $0x1b0] sm:$0xff]
  %v1239 = vld [vmem:[%s4 + $0x1b8] sm:$0xff]
  %v1240 = vld [vmem:[%s4 + $0x1c0] sm:$0xff]
  %v1241 = vld [vmem:[%s4 + $0x1c8] sm:$0xff]
  %v1242 = vld [vmem:[%s4 + $0x1d0] sm:$0xff]
  %v1243 = vld [vmem:[%s4 + $0x1d8] sm:$0xff]
  %v1244 = vld [vmem:[%s4 + $0x1e0] sm:$0xff]
  %v1245 = vld [vmem:[%s4 + $0x1e8] sm:$0xff]
  %v1246 = vld [vmem:[%s4 + $0x1f0] sm:$0xff]
  %v1247 = vld [vmem:[%s4 + $0x1f8] sm:$0xff]
  %1248 = vmatprep.subr.mxu0 0.0
  %v1249 = vand.u32 %v1199, 4294901760
  %1250 = vmatpush1.msra.mxu0 %v1249
  %1251 = vmatprep.subr.mxu0 0.0
  %v1252 = vand.u32 %v1198, 4294901760
  %1253 = vmatpush1.msra.mxu0 %v1252
  %1254 = vmatprep.subr.mxu0 0.0
  %v1255 = vand.u32 %v1197, 4294901760
  %1256 = vmatpush1.msra.mxu0 %v1255
  %1257 = vmatprep.subr.mxu0 0.0
  %v1258 = vand.u32 %v1196, 4294901760
  %1259 = vmatpush1.msra.mxu0 %v1258
  %1260 = vmatprep.subr.mxu0 0.0
  %v1261 = vand.u32 %v1195, 4294901760
  %1262 = vmatpush1.msra.mxu0 %v1261
  %1263 = vmatprep.subr.mxu0 0.0
  %v1264 = vand.u32 %v1194, 4294901760
  %1265 = vmatpush1.msra.mxu0 %v1264
  %1266 = vmatprep.subr.mxu0 0.0
  %v1267 = vand.u32 %v1193, 4294901760
  %1268 = vmatpush1.msra.mxu0 %v1267
  %1269 = vmatprep.subr.mxu0 0.0
  %v1270 = vand.u32 %v1192, 4294901760
  %1271 = vmatpush1.msra.mxu0 %v1270
  %1272 = vmatprep.subr.mxu0 0.0
  %v1273 = vand.u32 %v1191, 4294901760
  %1274 = vmatpush1.msra.mxu0 %v1273
  %1275 = vmatprep.subr.mxu0 0.0
  %v1276 = vand.u32 %v1190, 4294901760
  %1277 = vmatpush1.msra.mxu0 %v1276
  %1278 = vmatprep.subr.mxu0 0.0
  %v1279 = vand.u32 %v1189, 4294901760
  %1280 = vmatpush1.msra.mxu0 %v1279
  %1281 = vmatprep.subr.mxu0 0.0
  %v1282 = vand.u32 %v1188, 4294901760
  %1283 = vmatpush1.msra.mxu0 %v1282
  %1284 = vmatprep.subr.mxu0 0.0
  %v1285 = vand.u32 %v1187, 4294901760
  %1286 = vmatpush1.msra.mxu0 %v1285
  %1287 = vmatprep.subr.mxu0 0.0
  %v1288 = vand.u32 %v1186, 4294901760
  %1289 = vmatpush1.msra.mxu0 %v1288
  %1290 = vmatprep.subr.mxu0 0.0
  %v1291 = vand.u32 %v1185, 4294901760
  %1292 = vmatpush1.msra.mxu0 %v1291
  %1293 = vmatprep.subr.mxu0 0.0
  %v1294 = vand.u32 %v1184, 4294901760
  %1295 = vmatpush1.msra.mxu0 %v1294
  %1296 = vmatprep.subr.mxu0 0.0
  %v1297 = vand.u32 %v1215, 4294901760
  %1298 = vmatpush2.msra.mxu0 %v1297
  %1299 = vmatprep.subr.mxu0 0.0
  %v1300 = vand.u32 %v1214, 4294901760
  %1301 = vmatpush2.msra.mxu0 %v1300
  %1302 = vmatprep.subr.mxu0 0.0
  %v1303 = vand.u32 %v1213, 4294901760
  %1304 = vmatpush2.msra.mxu0 %v1303
  %1305 = vmatprep.subr.mxu0 0.0
  %v1306 = vand.u32 %v1212, 4294901760
  %1307 = vmatpush2.msra.mxu0 %v1306
  %1308 = vmatprep.subr.mxu0 0.0
  %v1309 = vand.u32 %v1211, 4294901760
  %1310 = vmatpush2.msra.mxu0 %v1309
  %1311 = vmatprep.subr.mxu0 0.0
  %v1312 = vand.u32 %v1210, 4294901760
  %1313 = vmatpush2.msra.mxu0 %v1312
  %1314 = vmatprep.subr.mxu0 0.0
  %v1315 = vand.u32 %v1209, 4294901760
  %1316 = vmatpush2.msra.mxu0 %v1315
  %1317 = vmatprep.subr.mxu0 0.0
  %v1318 = vand.u32 %v1208, 4294901760
  %1319 = vmatpush2.msra.mxu0 %v1318
  %1320 = vmatprep.subr.mxu0 0.0
  %v1321 = vand.u32 %v1207, 4294901760
  %1322 = vmatpush2.msra.mxu0 %v1321
  %1323 = vmatprep.subr.mxu0 0.0
  %v1324 = vand.u32 %v1206, 4294901760
  %1325 = vmatpush2.msra.mxu0 %v1324
  %1326 = vmatprep.subr.mxu0 0.0
  %v1327 = vand.u32 %v1205, 4294901760
  %1328 = vmatpush2.msra.mxu0 %v1327
  %1329 = vmatprep.subr.mxu0 0.0
  %v1330 = vand.u32 %v1204, 4294901760
  %1331 = vmatpush2.msra.mxu0 %v1330
  %1332 = vmatprep.subr.mxu0 0.0
  %v1333 = vand.u32 %v1203, 4294901760
  %1334 = vmatpush2.msra.mxu0 %v1333
  %1335 = vmatprep.subr.mxu0 0.0
  %v1336 = vand.u32 %v1202, 4294901760
  %1337 = vmatpush2.msra.mxu0 %v1336
  %1338 = vmatprep.subr.mxu0 0.0
  %v1339 = vand.u32 %v1201, 4294901760
  %1340 = vmatpush2.msra.mxu0 %v1339
  %1341 = vmatprep.subr.mxu0 0.0
  %v1342 = vand.u32 %v1200, 4294901760
  %1343 = vmatpush2.msra.mxu0 %v1342
  %v1344 = vand.u32 %v1155, 4294901760
  %v1345 = vsub.f32 %v1155, %v1344
  %v1346 = vand.u32 %v1345, 4294901760
  %v1347 = vsub.f32 %v1345, %v1346
  %v1348 = vand.u32 %v1347, 4294901760
  %1349 = vmatprep.mubr.f32.mxu0 %v1348
  %v1350 = vand.u32 %v1141, 4294901760
  %v1351 = vsub.f32 %v1141, %v1350
  %v1352 = vand.u32 %v1351, 4294901760
  %v1353 = vsub.f32 %v1351, %v1352
  %v1354 = vand.u32 %v1353, 4294901760
  %1355 = vmatmul.mubr.f32.gmra.mxu0 %v1354
  %v1356 = vpop.f32.mrf.mxu0
  %v1357 = vadd.f32 0.0, %v1356
  %v1358 = vpop.f32.mrf.mxu0
  %1359 = vdwg.mxu0
  %1360 = vmatprep.subr.mxu0 0.0
  %v1361 = vand.u32 %v1199, 4294901760
  %v1362 = vsub.f32 %v1199, %v1361
  %v1363 = vand.u32 %v1362, 4294901760
  %v1364 = vsub.f32 %v1362, %v1363
  %v1365 = vand.u32 %v1364, 4294901760
  %1366 = vmatpush1.msra.mxu0 %v1365
  %1367 = vmatprep.subr.mxu0 0.0
  %v1368 = vand.u32 %v1198, 4294901760
  %v1369 = vsub.f32 %v1198, %v1368
  %v1370 = vand.u32 %v1369, 4294901760
  %v1371 = vsub.f32 %v1369, %v1370
  %v1372 = vand.u32 %v1371, 4294901760
  %1373 = vmatpush1.msra.mxu0 %v1372
  %1374 = vmatprep.subr.mxu0 0.0
  %v1375 = vand.u32 %v1197, 4294901760
  %v1376 = vsub.f32 %v1197, %v1375
  %v1377 = vand.u32 %v1376, 4294901760
  %v1378 = vsub.f32 %v1376, %v1377
  %v1379 = vand.u32 %v1378, 4294901760
  %1380 = vmatpush1.msra.mxu0 %v1379
  %1381 = vmatprep.subr.mxu0 0.0
  %v1382 = vand.u32 %v1196, 4294901760
  %v1383 = vsub.f32 %v1196, %v1382
  %v1384 = vand.u32 %v1383, 4294901760
  %v1385 = vsub.f32 %v1383, %v1384
  %v1386 = vand.u32 %v1385, 4294901760
  %1387 = vmatpush1.msra.mxu0 %v1386
  %1388 = vmatprep.subr.mxu0 0.0
  %v1389 = vand.u32 %v1195, 4294901760
  %v1390 = vsub.f32 %v1195, %v1389
  %v1391 = vand.u32 %v1390, 4294901760
  %v1392 = vsub.f32 %v1390, %v1391
  %v1393 = vand.u32 %v1392, 4294901760
  %1394 = vmatpush1.msra.mxu0 %v1393
  %1395 = vmatprep.subr.mxu0 0.0
  %v1396 = vand.u32 %v1194, 4294901760
  %v1397 = vsub.f32 %v1194, %v1396
  %v1398 = vand.u32 %v1397, 4294901760
  %v1399 = vsub.f32 %v1397, %v1398
  %v1400 = vand.u32 %v1399, 4294901760
  %1401 = vmatpush1.msra.mxu0 %v1400
  %1402 = vmatprep.subr.mxu0 0.0
  %v1403 = vand.u32 %v1193, 4294901760
  %v1404 = vsub.f32 %v1193, %v1403
  %v1405 = vand.u32 %v1404, 4294901760
  %v1406 = vsub.f32 %v1404, %v1405
  %v1407 = vand.u32 %v1406, 4294901760
  %1408 = vmatpush1.msra.mxu0 %v1407
  %1409 = vmatprep.subr.mxu0 0.0
  %v1410 = vand.u32 %v1192, 4294901760
  %v1411 = vsub.f32 %v1192, %v1410
  %v1412 = vand.u32 %v1411, 4294901760
  %v1413 = vsub.f32 %v1411, %v1412
  %v1414 = vand.u32 %v1413, 4294901760
  %1415 = vmatpush1.msra.mxu0 %v1414
  %1416 = vmatprep.subr.mxu0 0.0
  %v1417 = vand.u32 %v1191, 4294901760
  %v1418 = vsub.f32 %v1191, %v1417
  %v1419 = vand.u32 %v1418, 4294901760
  %v1420 = vsub.f32 %v1418, %v1419
  %v1421 = vand.u32 %v1420, 4294901760
  %1422 = vmatpush1.msra.mxu0 %v1421
  %1423 = vmatprep.subr.mxu0 0.0
  %v1424 = vand.u32 %v1190, 4294901760
  %v1425 = vsub.f32 %v1190, %v1424
  %v1426 = vand.u32 %v1425, 4294901760
  %v1427 = vsub.f32 %v1425, %v1426
  %v1428 = vand.u32 %v1427, 4294901760
  %1429 = vmatpush1.msra.mxu0 %v1428
  %1430 = vmatprep.subr.mxu0 0.0
  %v1431 = vand.u32 %v1189, 4294901760
  %v1432 = vsub.f32 %v1189, %v1431
  %v1433 = vand.u32 %v1432, 4294901760
  %v1434 = vsub.f32 %v1432, %v1433
  %v1435 = vand.u32 %v1434, 4294901760
  %1436 = vmatpush1.msra.mxu0 %v1435
  %1437 = vmatprep.subr.mxu0 0.0
  %v1438 = vand.u32 %v1188, 4294901760
  %v1439 = vsub.f32 %v1188, %v1438
  %v1440 = vand.u32 %v1439, 4294901760
  %v1441 = vsub.f32 %v1439, %v1440
  %v1442 = vand.u32 %v1441, 4294901760
  %1443 = vmatpush1.msra.mxu0 %v1442
  %1444 = vmatprep.subr.mxu0 0.0
  %v1445 = vand.u32 %v1187, 4294901760
  %v1446 = vsub.f32 %v1187, %v1445
  %v1447 = vand.u32 %v1446, 4294901760
  %v1448 = vsub.f32 %v1446, %v1447
  %v1449 = vand.u32 %v1448, 4294901760
  %1450 = vmatpush1.msra.mxu0 %v1449
  %1451 = vmatprep.subr.mxu0 0.0
  %v1452 = vand.u32 %v1186, 4294901760
  %v1453 = vsub.f32 %v1186, %v1452
  %v1454 = vand.u32 %v1453, 4294901760
  %v1455 = vsub.f32 %v1453, %v1454
  %v1456 = vand.u32 %v1455, 4294901760
  %1457 = vmatpush1.msra.mxu0 %v1456
  %1458 = vmatprep.subr.mxu0 0.0
  %v1459 = vand.u32 %v1185, 4294901760
  %v1460 = vsub.f32 %v1185, %v1459
  %v1461 = vand.u32 %v1460, 4294901760
  %v1462 = vsub.f32 %v1460, %v1461
  %v1463 = vand.u32 %v1462, 4294901760
  %1464 = vmatpush1.msra.mxu0 %v1463
  %1465 = vmatprep.subr.mxu0 0.0
  %v1466 = vand.u32 %v1184, 4294901760
  %v1467 = vsub.f32 %v1184, %v1466
  %v1468 = vand.u32 %v1467, 4294901760
  %v1469 = vsub.f32 %v1467, %v1468
  %v1470 = vand.u32 %v1469, 4294901760
  %1471 = vmatpush1.msra.mxu0 %v1470
  %1472 = vmatprep.subr.mxu0 0.0
  %v1473 = vand.u32 %v1215, 4294901760
  %v1474 = vsub.f32 %v1215, %v1473
  %v1475 = vand.u32 %v1474, 4294901760
  %v1476 = vsub.f32 %v1474, %v1475
  %v1477 = vand.u32 %v1476, 4294901760
  %1478 = vmatpush2.msra.mxu0 %v1477
  %1479 = vmatprep.subr.mxu0 0.0
  %v1480 = vand.u32 %v1214, 4294901760
  %v1481 = vsub.f32 %v1214, %v1480
  %v1482 = vand.u32 %v1481, 4294901760
  %v1483 = vsub.f32 %v1481, %v1482
  %v1484 = vand.u32 %v1483, 4294901760
  %1485 = vmatpush2.msra.mxu0 %v1484
  %1486 = vmatprep.subr.mxu0 0.0
  %v1487 = vand.u32 %v1213, 4294901760
  %v1488 = vsub.f32 %v1213, %v1487
  %v1489 = vand.u32 %v1488, 4294901760
  %v1490 = vsub.f32 %v1488, %v1489
  %v1491 = vand.u32 %v1490, 4294901760
  %1492 = vmatpush2.msra.mxu0 %v1491
  %1493 = vmatprep.subr.mxu0 0.0
  %v1494 = vand.u32 %v1212, 4294901760
  %v1495 = vsub.f32 %v1212, %v1494
  %v1496 = vand.u32 %v1495, 4294901760
  %v1497 = vsub.f32 %v1495, %v1496
  %v1498 = vand.u32 %v1497, 4294901760
  %1499 = vmatpush2.msra.mxu0 %v1498
  %1500 = vmatprep.subr.mxu0 0.0
  %v1501 = vand.u32 %v1211, 4294901760
  %v1502 = vsub.f32 %v1211, %v1501
  %v1503 = vand.u32 %v1502, 4294901760
  %v1504 = vsub.f32 %v1502, %v1503
  %v1505 = vand.u32 %v1504, 4294901760
  %1506 = vmatpush2.msra.mxu0 %v1505
  %1507 = vmatprep.subr.mxu0 0.0
  %v1508 = vand.u32 %v1210, 4294901760
  %v1509 = vsub.f32 %v1210, %v1508
  %v1510 = vand.u32 %v1509, 4294901760
  %v1511 = vsub.f32 %v1509, %v1510
  %v1512 = vand.u32 %v1511, 4294901760
  %1513 = vmatpush2.msra.mxu0 %v1512
  %1514 = vmatprep.subr.mxu0 0.0
  %v1515 = vand.u32 %v1209, 4294901760
  %v1516 = vsub.f32 %v1209, %v1515
  %v1517 = vand.u32 %v1516, 4294901760
  %v1518 = vsub.f32 %v1516, %v1517
  %v1519 = vand.u32 %v1518, 4294901760
  %1520 = vmatpush2.msra.mxu0 %v1519
  %1521 = vmatprep.subr.mxu0 0.0
  %v1522 = vand.u32 %v1208, 4294901760
  %v1523 = vsub.f32 %v1208, %v1522
  %v1524 = vand.u32 %v1523, 4294901760
  %v1525 = vsub.f32 %v1523, %v1524
  %v1526 = vand.u32 %v1525, 4294901760
  %1527 = vmatpush2.msra.mxu0 %v1526
  %1528 = vmatprep.subr.mxu0 0.0
  %v1529 = vand.u32 %v1207, 4294901760
  %v1530 = vsub.f32 %v1207, %v1529
  %v1531 = vand.u32 %v1530, 4294901760
  %v1532 = vsub.f32 %v1530, %v1531
  %v1533 = vand.u32 %v1532, 4294901760
  %1534 = vmatpush2.msra.mxu0 %v1533
  %1535 = vmatprep.subr.mxu0 0.0
  %v1536 = vand.u32 %v1206, 4294901760
  %v1537 = vsub.f32 %v1206, %v1536
  %v1538 = vand.u32 %v1537, 4294901760
  %v1539 = vsub.f32 %v1537, %v1538
  %v1540 = vand.u32 %v1539, 4294901760
  %1541 = vmatpush2.msra.mxu0 %v1540
  %1542 = vmatprep.subr.mxu0 0.0
  %v1543 = vand.u32 %v1205, 4294901760
  %v1544 = vsub.f32 %v1205, %v1543
  %v1545 = vand.u32 %v1544, 4294901760
  %v1546 = vsub.f32 %v1544, %v1545
  %v1547 = vand.u32 %v1546, 4294901760
  %1548 = vmatpush2.msra.mxu0 %v1547
  %1549 = vmatprep.subr.mxu0 0.0
  %v1550 = vand.u32 %v1204, 4294901760
  %v1551 = vsub.f32 %v1204, %v1550
  %v1552 = vand.u32 %v1551, 4294901760
  %v1553 = vsub.f32 %v1551, %v1552
  %v1554 = vand.u32 %v1553, 4294901760
  %1555 = vmatpush2.msra.mxu0 %v1554
  %1556 = vmatprep.subr.mxu0 0.0
  %v1557 = vand.u32 %v1203, 4294901760
  %v1558 = vsub.f32 %v1203, %v1557
  %v1559 = vand.u32 %v1558, 4294901760
  %v1560 = vsub.f32 %v1558, %v1559
  %v1561 = vand.u32 %v1560, 4294901760
  %1562 = vmatpush2.msra.mxu0 %v1561
  %1563 = vmatprep.subr.mxu0 0.0
  %v1564 = vand.u32 %v1202, 4294901760
  %v1565 = vsub.f32 %v1202, %v1564
  %v1566 = vand.u32 %v1565, 4294901760
  %v1567 = vsub.f32 %v1565, %v1566
  %v1568 = vand.u32 %v1567, 4294901760
  %1569 = vmatpush2.msra.mxu0 %v1568
  %1570 = vmatprep.subr.mxu0 0.0
  %v1571 = vand.u32 %v1201, 4294901760
  %v1572 = vsub.f32 %v1201, %v1571
  %v1573 = vand.u32 %v1572, 4294901760
  %v1574 = vsub.f32 %v1572, %v1573
  %v1575 = vand.u32 %v1574, 4294901760
  %1576 = vmatpush2.msra.mxu0 %v1575
  %1577 = vmatprep.subr.mxu0 0.0
  %v1578 = vand.u32 %v1200, 4294901760
  %v1579 = vsub.f32 %v1200, %v1578
  %v1580 = vand.u32 %v1579, 4294901760
  %v1581 = vsub.f32 %v1579, %v1580
  %v1582 = vand.u32 %v1581, 4294901760
  %1583 = vmatpush2.msra.mxu0 %v1582
  %v1584 = vand.u32 %v1155, 4294901760
  %1585 = vmatprep.mubr.f32.mxu0 %v1584
  %v1586 = vand.u32 %v1141, 4294901760
  %1587 = vmatmul.mubr.f32.gmra.mxu0 %v1586
  %v1588 = vpop.f32.mrf.mxu0
  %v1589 = vadd.f32 %v1357, %v1588
  %v1590 = vpop.f32.mrf.mxu0
  %1591 = vdwg.mxu0
  %1592 = vmatprep.subr.mxu0 0.0
  %v1593 = vand.u32 %v1199, 4294901760
  %v1594 = vsub.f32 %v1199, %v1593
  %1595 = vmatpush1.msra.mxu0 %v1594
  %1596 = vmatprep.subr.mxu0 0.0
  %v1597 = vand.u32 %v1198, 4294901760
  %v1598 = vsub.f32 %v1198, %v1597
  %1599 = vmatpush1.msra.mxu0 %v1598
  %1600 = vmatprep.subr.mxu0 0.0
  %v1601 = vand.u32 %v1197, 4294901760
  %v1602 = vsub.f32 %v1197, %v1601
  %1603 = vmatpush1.msra.mxu0 %v1602
  %1604 = vmatprep.subr.mxu0 0.0
  %v1605 = vand.u32 %v1196, 4294901760
  %v1606 = vsub.f32 %v1196, %v1605
  %1607 = vmatpush1.msra.mxu0 %v1606
  %1608 = vmatprep.subr.mxu0 0.0
  %v1609 = vand.u32 %v1195, 4294901760
  %v1610 = vsub.f32 %v1195, %v1609
  %1611 = vmatpush1.msra.mxu0 %v1610
  %1612 = vmatprep.subr.mxu0 0.0
  %v1613 = vand.u32 %v1194, 4294901760
  %v1614 = vsub.f32 %v1194, %v1613
  %1615 = vmatpush1.msra.mxu0 %v1614
  %1616 = vmatprep.subr.mxu0 0.0
  %v1617 = vand.u32 %v1193, 4294901760
  %v1618 = vsub.f32 %v1193, %v1617
  %1619 = vmatpush1.msra.mxu0 %v1618
  %1620 = vmatprep.subr.mxu0 0.0
  %v1621 = vand.u32 %v1192, 4294901760
  %v1622 = vsub.f32 %v1192, %v1621
  %1623 = vmatpush1.msra.mxu0 %v1622
  %1624 = vmatprep.subr.mxu0 0.0
  %v1625 = vand.u32 %v1191, 4294901760
  %v1626 = vsub.f32 %v1191, %v1625
  %1627 = vmatpush1.msra.mxu0 %v1626
  %1628 = vmatprep.subr.mxu0 0.0
  %v1629 = vand.u32 %v1190, 4294901760
  %v1630 = vsub.f32 %v1190, %v1629
  %1631 = vmatpush1.msra.mxu0 %v1630
  %1632 = vmatprep.subr.mxu0 0.0
  %v1633 = vand.u32 %v1189, 4294901760
  %v1634 = vsub.f32 %v1189, %v1633
  %1635 = vmatpush1.msra.mxu0 %v1634
  %1636 = vmatprep.subr.mxu0 0.0
  %v1637 = vand.u32 %v1188, 4294901760
  %v1638 = vsub.f32 %v1188, %v1637
  %1639 = vmatpush1.msra.mxu0 %v1638
  %1640 = vmatprep.subr.mxu0 0.0
  %v1641 = vand.u32 %v1187, 4294901760
  %v1642 = vsub.f32 %v1187, %v1641
  %1643 = vmatpush1.msra.mxu0 %v1642
  %1644 = vmatprep.subr.mxu0 0.0
  %v1645 = vand.u32 %v1186, 4294901760
  %v1646 = vsub.f32 %v1186, %v1645
  %1647 = vmatpush1.msra.mxu0 %v1646
  %1648 = vmatprep.subr.mxu0 0.0
  %v1649 = vand.u32 %v1185, 4294901760
  %v1650 = vsub.f32 %v1185, %v1649
  %1651 = vmatpush1.msra.mxu0 %v1650
  %1652 = vmatprep.subr.mxu0 0.0
  %v1653 = vand.u32 %v1184, 4294901760
  %v1654 = vsub.f32 %v1184, %v1653
  %1655 = vmatpush1.msra.mxu0 %v1654
  %1656 = vmatprep.subr.mxu0 0.0
  %v1657 = vand.u32 %v1215, 4294901760
  %v1658 = vsub.f32 %v1215, %v1657
  %1659 = vmatpush2.msra.mxu0 %v1658
  %1660 = vmatprep.subr.mxu0 0.0
  %v1661 = vand.u32 %v1214, 4294901760
  %v1662 = vsub.f32 %v1214, %v1661
  %1663 = vmatpush2.msra.mxu0 %v1662
  %1664 = vmatprep.subr.mxu0 0.0
  %v1665 = vand.u32 %v1213, 4294901760
  %v1666 = vsub.f32 %v1213, %v1665
  %1667 = vmatpush2.msra.mxu0 %v1666
  %1668 = vmatprep.subr.mxu0 0.0
  %v1669 = vand.u32 %v1212, 4294901760
  %v1670 = vsub.f32 %v1212, %v1669
  %1671 = vmatpush2.msra.mxu0 %v1670
  %1672 = vmatprep.subr.mxu0 0.0
  %v1673 = vand.u32 %v1211, 4294901760
  %v1674 = vsub.f32 %v1211, %v1673
  %1675 = vmatpush2.msra.mxu0 %v1674
  %1676 = vmatprep.subr.mxu0 0.0
  %v1677 = vand.u32 %v1210, 4294901760
  %v1678 = vsub.f32 %v1210, %v1677
  %1679 = vmatpush2.msra.mxu0 %v1678
  %1680 = vmatprep.subr.mxu0 0.0
  %v1681 = vand.u32 %v1209, 4294901760
  %v1682 = vsub.f32 %v1209, %v1681
  %1683 = vmatpush2.msra.mxu0 %v1682
  %1684 = vmatprep.subr.mxu0 0.0
  %v1685 = vand.u32 %v1208, 4294901760
  %v1686 = vsub.f32 %v1208, %v1685
  %1687 = vmatpush2.msra.mxu0 %v1686
  %1688 = vmatprep.subr.mxu0 0.0
  %v1689 = vand.u32 %v1207, 4294901760
  %v1690 = vsub.f32 %v1207, %v1689
  %1691 = vmatpush2.msra.mxu0 %v1690
  %1692 = vmatprep.subr.mxu0 0.0
  %v1693 = vand.u32 %v1206, 4294901760
  %v1694 = vsub.f32 %v1206, %v1693
  %1695 = vmatpush2.msra.mxu0 %v1694
  %1696 = vmatprep.subr.mxu0 0.0
  %v1697 = vand.u32 %v1205, 4294901760
  %v1698 = vsub.f32 %v1205, %v1697
  %1699 = vmatpush2.msra.mxu0 %v1698
  %1700 = vmatprep.subr.mxu0 0.0
  %v1701 = vand.u32 %v1204, 4294901760
  %v1702 = vsub.f32 %v1204, %v1701
  %1703 = vmatpush2.msra.mxu0 %v1702
  %1704 = vmatprep.subr.mxu0 0.0
  %v1705 = vand.u32 %v1203, 4294901760
  %v1706 = vsub.f32 %v1203, %v1705
  %1707 = vmatpush2.msra.mxu0 %v1706
  %1708 = vmatprep.subr.mxu0 0.0
  %v1709 = vand.u32 %v1202, 4294901760
  %v1710 = vsub.f32 %v1202, %v1709
  %1711 = vmatpush2.msra.mxu0 %v1710
  %1712 = vmatprep.subr.mxu0 0.0
  %v1713 = vand.u32 %v1201, 4294901760
  %v1714 = vsub.f32 %v1201, %v1713
  %1715 = vmatpush2.msra.mxu0 %v1714
  %1716 = vmatprep.subr.mxu0 0.0
  %v1717 = vand.u32 %v1200, 4294901760
  %v1718 = vsub.f32 %v1200, %v1717
  %1719 = vmatpush2.msra.mxu0 %v1718
  %v1720 = vand.u32 %v1155, 4294901760
  %v1721 = vsub.f32 %v1155, %v1720
  %1722 = vmatprep.mubr.f32.mxu0 %v1721
  %v1723 = vand.u32 %v1141, 4294901760
  %v1724 = vsub.f32 %v1141, %v1723
  %1725 = vmatmul.mubr.f32.gmra.mxu0 %v1724
  %v1726 = vpop.f32.mrf.mxu0
  %v1727 = vadd.f32 %v1589, %v1726
  %v1728 = vpop.f32.mrf.mxu0
  %1729 = vdwg.mxu0
  %1730 = vmatprep.subr.mxu0 0.0
  %v1731 = vand.u32 %v1199, 4294901760
  %1732 = vmatpush1.msra.mxu0 %v1731
  %1733 = vmatprep.subr.mxu0 0.0
  %v1734 = vand.u32 %v1198, 4294901760
  %1735 = vmatpush1.msra.mxu0 %v1734
  %1736 = vmatprep.subr.mxu0 0.0
  %v1737 = vand.u32 %v1197, 4294901760
  %1738 = vmatpush1.msra.mxu0 %v1737
  %1739 = vmatprep.subr.mxu0 0.0
  %v1740 = vand.u32 %v1196, 4294901760
  %1741 = vmatpush1.msra.mxu0 %v1740
  %1742 = vmatprep.subr.mxu0 0.0
  %v1743 = vand.u32 %v1195, 4294901760
  %1744 = vmatpush1.msra.mxu0 %v1743
  %1745 = vmatprep.subr.mxu0 0.0
  %v1746 = vand.u32 %v1194, 4294901760
  %1747 = vmatpush1.msra.mxu0 %v1746
  %1748 = vmatprep.subr.mxu0 0.0
  %v1749 = vand.u32 %v1193, 4294901760
  %1750 = vmatpush1.msra.mxu0 %v1749
  %1751 = vmatprep.subr.mxu0 0.0
  %v1752 = vand.u32 %v1192, 4294901760
  %1753 = vmatpush1.msra.mxu0 %v1752
  %1754 = vmatprep.subr.mxu0 0.0
  %v1755 = vand.u32 %v1191, 4294901760
  %1756 = vmatpush1.msra.mxu0 %v1755
  %1757 = vmatprep.subr.mxu0 0.0
  %v1758 = vand.u32 %v1190, 4294901760
  %1759 = vmatpush1.msra.mxu0 %v1758
  %1760 = vmatprep.subr.mxu0 0.0
  %v1761 = vand.u32 %v1189, 4294901760
  %1762 = vmatpush1.msra.mxu0 %v1761
  %1763 = vmatprep.subr.mxu0 0.0
  %v1764 = vand.u32 %v1188, 4294901760
  %1765 = vmatpush1.msra.mxu0 %v1764
  %1766 = vmatprep.subr.mxu0 0.0
  %v1767 = vand.u32 %v1187, 4294901760
  %1768 = vmatpush1.msra.mxu0 %v1767
  %1769 = vmatprep.subr.mxu0 0.0
  %v1770 = vand.u32 %v1186, 4294901760
  %1771 = vmatpush1.msra.mxu0 %v1770
  %1772 = vmatprep.subr.mxu0 0.0
  %v1773 = vand.u32 %v1185, 4294901760
  %1774 = vmatpush1.msra.mxu0 %v1773
  %1775 = vmatprep.subr.mxu0 0.0
  %v1776 = vand.u32 %v1184, 4294901760
  %1777 = vmatpush1.msra.mxu0 %v1776
  %1778 = vmatprep.subr.mxu0 0.0
  %v1779 = vand.u32 %v1215, 4294901760
  %1780 = vmatpush2.msra.mxu0 %v1779
  %1781 = vmatprep.subr.mxu0 0.0
  %v1782 = vand.u32 %v1214, 4294901760
  %1783 = vmatpush2.msra.mxu0 %v1782
  %1784 = vmatprep.subr.mxu0 0.0
  %v1785 = vand.u32 %v1213, 4294901760
  %1786 = vmatpush2.msra.mxu0 %v1785
  %1787 = vmatprep.subr.mxu0 0.0
  %v1788 = vand.u32 %v1212, 4294901760
  %1789 = vmatpush2.msra.mxu0 %v1788
  %1790 = vmatprep.subr.mxu0 0.0
  %v1791 = vand.u32 %v1211, 4294901760
  %1792 = vmatpush2.msra.mxu0 %v1791
  %1793 = vmatprep.subr.mxu0 0.0
  %v1794 = vand.u32 %v1210, 4294901760
  %1795 = vmatpush2.msra.mxu0 %v1794
  %1796 = vmatprep.subr.mxu0 0.0
  %v1797 = vand.u32 %v1209, 4294901760
  %1798 = vmatpush2.msra.mxu0 %v1797
  %1799 = vmatprep.subr.mxu0 0.0
  %v1800 = vand.u32 %v1208, 4294901760
  %1801 = vmatpush2.msra.mxu0 %v1800
  %1802 = vmatprep.subr.mxu0 0.0
  %v1803 = vand.u32 %v1207, 4294901760
  %1804 = vmatpush2.msra.mxu0 %v1803
  %1805 = vmatprep.subr.mxu0 0.0
  %v1806 = vand.u32 %v1206, 4294901760
  %1807 = vmatpush2.msra.mxu0 %v1806
  %1808 = vmatprep.subr.mxu0 0.0
  %v1809 = vand.u32 %v1205, 4294901760
  %1810 = vmatpush2.msra.mxu0 %v1809
  %1811 = vmatprep.subr.mxu0 0.0
  %v1812 = vand.u32 %v1204, 4294901760
  %1813 = vmatpush2.msra.mxu0 %v1812
  %1814 = vmatprep.subr.mxu0 0.0
  %v1815 = vand.u32 %v1203, 4294901760
  %1816 = vmatpush2.msra.mxu0 %v1815
  %1817 = vmatprep.subr.mxu0 0.0
  %v1818 = vand.u32 %v1202, 4294901760
  %1819 = vmatpush2.msra.mxu0 %v1818
  %1820 = vmatprep.subr.mxu0 0.0
  %v1821 = vand.u32 %v1201, 4294901760
  %1822 = vmatpush2.msra.mxu0 %v1821
  %1823 = vmatprep.subr.mxu0 0.0
  %v1824 = vand.u32 %v1200, 4294901760
  %1825 = vmatpush2.msra.mxu0 %v1824
  %v1826 = vand.u32 %v1155, 4294901760
  %v1827 = vsub.f32 %v1155, %v1826
  %v1828 = vand.u32 %v1827, 4294901760
  %1829 = vmatprep.mubr.f32.mxu0 %v1828
  %v1830 = vand.u32 %v1141, 4294901760
  %v1831 = vsub.f32 %v1141, %v1830
  %v1832 = vand.u32 %v1831, 4294901760
  %1833 = vmatmul.mubr.f32.gmra.mxu0 %v1832
  %v1834 = vpop.f32.mrf.mxu0
  %v1835 = vadd.f32 %v1727, %v1834
  %v1836 = vpop.f32.mrf.mxu0
  %1837 = vdwg.mxu0
  %1838 = vmatprep.subr.mxu0 0.0
  %v1839 = vand.u32 %v1199, 4294901760
  %v1840 = vsub.f32 %v1199, %v1839
  %v1841 = vand.u32 %v1840, 4294901760
  %1842 = vmatpush1.msra.mxu0 %v1841
  %1843 = vmatprep.subr.mxu0 0.0
  %v1844 = vand.u32 %v1198, 4294901760
  %v1845 = vsub.f32 %v1198, %v1844
  %v1846 = vand.u32 %v1845, 4294901760
  %1847 = vmatpush1.msra.mxu0 %v1846
  %1848 = vmatprep.subr.mxu0 0.0
  %v1849 = vand.u32 %v1197, 4294901760
  %v1850 = vsub.f32 %v1197, %v1849
  %v1851 = vand.u32 %v1850, 4294901760
  %1852 = vmatpush1.msra.mxu0 %v1851
  %1853 = vmatprep.subr.mxu0 0.0
  %v1854 = vand.u32 %v1196, 4294901760
  %v1855 = vsub.f32 %v1196, %v1854
  %v1856 = vand.u32 %v1855, 4294901760
  %1857 = vmatpush1.msra.mxu0 %v1856
  %1858 = vmatprep.subr.mxu0 0.0
  %v1859 = vand.u32 %v1195, 4294901760
  %v1860 = vsub.f32 %v1195, %v1859
  %v1861 = vand.u32 %v1860, 4294901760
  %1862 = vmatpush1.msra.mxu0 %v1861
  %1863 = vmatprep.subr.mxu0 0.0
  %v1864 = vand.u32 %v1194, 4294901760
  %v1865 = vsub.f32 %v1194, %v1864
  %v1866 = vand.u32 %v1865, 4294901760
  %1867 = vmatpush1.msra.mxu0 %v1866
  %1868 = vmatprep.subr.mxu0 0.0
  %v1869 = vand.u32 %v1193, 4294901760
  %v1870 = vsub.f32 %v1193, %v1869
  %v1871 = vand.u32 %v1870, 4294901760
  %1872 = vmatpush1.msra.mxu0 %v1871
  %1873 = vmatprep.subr.mxu0 0.0
  %v1874 = vand.u32 %v1192, 4294901760
  %v1875 = vsub.f32 %v1192, %v1874
  %v1876 = vand.u32 %v1875, 4294901760
  %1877 = vmatpush1.msra.mxu0 %v1876
  %1878 = vmatprep.subr.mxu0 0.0
  %v1879 = vand.u32 %v1191, 4294901760
  %v1880 = vsub.f32 %v1191, %v1879
  %v1881 = vand.u32 %v1880, 4294901760
  %1882 = vmatpush1.msra.mxu0 %v1881
  %1883 = vmatprep.subr.mxu0 0.0
  %v1884 = vand.u32 %v1190, 4294901760
  %v1885 = vsub.f32 %v1190, %v1884
  %v1886 = vand.u32 %v1885, 4294901760
  %1887 = vmatpush1.msra.mxu0 %v1886
  %1888 = vmatprep.subr.mxu0 0.0
  %v1889 = vand.u32 %v1189, 4294901760
  %v1890 = vsub.f32 %v1189, %v1889
  %v1891 = vand.u32 %v1890, 4294901760
  %1892 = vmatpush1.msra.mxu0 %v1891
  %1893 = vmatprep.subr.mxu0 0.0
  %v1894 = vand.u32 %v1188, 4294901760
  %v1895 = vsub.f32 %v1188, %v1894
  %v1896 = vand.u32 %v1895, 4294901760
  %1897 = vmatpush1.msra.mxu0 %v1896
  %1898 = vmatprep.subr.mxu0 0.0
  %v1899 = vand.u32 %v1187, 4294901760
  %v1900 = vsub.f32 %v1187, %v1899
  %v1901 = vand.u32 %v1900, 4294901760
  %1902 = vmatpush1.msra.mxu0 %v1901
  %1903 = vmatprep.subr.mxu0 0.0
  %v1904 = vand.u32 %v1186, 4294901760
  %v1905 = vsub.f32 %v1186, %v1904
  %v1906 = vand.u32 %v1905, 4294901760
  %1907 = vmatpush1.msra.mxu0 %v1906
  %1908 = vmatprep.subr.mxu0 0.0
  %v1909 = vand.u32 %v1185, 4294901760
  %v1910 = vsub.f32 %v1185, %v1909
  %v1911 = vand.u32 %v1910, 4294901760
  %1912 = vmatpush1.msra.mxu0 %v1911
  %1913 = vmatprep.subr.mxu0 0.0
  %v1914 = vand.u32 %v1184, 4294901760
  %v1915 = vsub.f32 %v1184, %v1914
  %v1916 = vand.u32 %v1915, 4294901760
  %1917 = vmatpush1.msra.mxu0 %v1916
  %1918 = vmatprep.subr.mxu0 0.0
  %v1919 = vand.u32 %v1215, 4294901760
  %v1920 = vsub.f32 %v1215, %v1919
  %v1921 = vand.u32 %v1920, 4294901760
  %1922 = vmatpush2.msra.mxu0 %v1921
  %1923 = vmatprep.subr.mxu0 0.0
  %v1924 = vand.u32 %v1214, 4294901760
  %v1925 = vsub.f32 %v1214, %v1924
  %v1926 = vand.u32 %v1925, 4294901760
  %1927 = vmatpush2.msra.mxu0 %v1926
  %1928 = vmatprep.subr.mxu0 0.0
  %v1929 = vand.u32 %v1213, 4294901760
  %v1930 = vsub.f32 %v1213, %v1929
  %v1931 = vand.u32 %v1930, 4294901760
  %1932 = vmatpush2.msra.mxu0 %v1931
  %1933 = vmatprep.subr.mxu0 0.0
  %v1934 = vand.u32 %v1212, 4294901760
  %v1935 = vsub.f32 %v1212, %v1934
  %v1936 = vand.u32 %v1935, 4294901760
  %1937 = vmatpush2.msra.mxu0 %v1936
  %1938 = vmatprep.subr.mxu0 0.0
  %v1939 = vand.u32 %v1211, 4294901760
  %v1940 = vsub.f32 %v1211, %v1939
  %v1941 = vand.u32 %v1940, 4294901760
  %1942 = vmatpush2.msra.mxu0 %v1941
  %1943 = vmatprep.subr.mxu0 0.0
  %v1944 = vand.u32 %v1210, 4294901760
  %v1945 = vsub.f32 %v1210, %v1944
  %v1946 = vand.u32 %v1945, 4294901760
  %1947 = vmatpush2.msra.mxu0 %v1946
  %1948 = vmatprep.subr.mxu0 0.0
  %v1949 = vand.u32 %v1209, 4294901760
  %v1950 = vsub.f32 %v1209, %v1949
  %v1951 = vand.u32 %v1950, 4294901760
  %1952 = vmatpush2.msra.mxu0 %v1951
  %1953 = vmatprep.subr.mxu0 0.0
  %v1954 = vand.u32 %v1208, 4294901760
  %v1955 = vsub.f32 %v1208, %v1954
  %v1956 = vand.u32 %v1955, 4294901760
  %1957 = vmatpush2.msra.mxu0 %v1956
  %1958 = vmatprep.subr.mxu0 0.0
  %v1959 = vand.u32 %v1207, 4294901760
  %v1960 = vsub.f32 %v1207, %v1959
  %v1961 = vand.u32 %v1960, 4294901760
  %1962 = vmatpush2.msra.mxu0 %v1961
  %1963 = vmatprep.subr.mxu0 0.0
  %v1964 = vand.u32 %v1206, 4294901760
  %v1965 = vsub.f32 %v1206, %v1964
  %v1966 = vand.u32 %v1965, 4294901760
  %1967 = vmatpush2.msra.mxu0 %v1966
  %1968 = vmatprep.subr.mxu0 0.0
  %v1969 = vand.u32 %v1205, 4294901760
  %v1970 = vsub.f32 %v1205, %v1969
  %v1971 = vand.u32 %v1970, 4294901760
  %1972 = vmatpush2.msra.mxu0 %v1971
  %1973 = vmatprep.subr.mxu0 0.0
  %v1974 = vand.u32 %v1204, 4294901760
  %v1975 = vsub.f32 %v1204, %v1974
  %v1976 = vand.u32 %v1975, 4294901760
  %1977 = vmatpush2.msra.mxu0 %v1976
  %1978 = vmatprep.subr.mxu0 0.0
  %v1979 = vand.u32 %v1203, 4294901760
  %v1980 = vsub.f32 %v1203, %v1979
  %v1981 = vand.u32 %v1980, 4294901760
  %1982 = vmatpush2.msra.mxu0 %v1981
  %1983 = vmatprep.subr.mxu0 0.0
  %v1984 = vand.u32 %v1202, 4294901760
  %v1985 = vsub.f32 %v1202, %v1984
  %v1986 = vand.u32 %v1985, 4294901760
  %1987 = vmatpush2.msra.mxu0 %v1986
  %1988 = vmatprep.subr.mxu0 0.0
  %v1989 = vand.u32 %v1201, 4294901760
  %v1990 = vsub.f32 %v1201, %v1989
  %v1991 = vand.u32 %v1990, 4294901760
  %1992 = vmatpush2.msra.mxu0 %v1991
  %1993 = vmatprep.subr.mxu0 0.0
  %v1994 = vand.u32 %v1200, 4294901760
  %v1995 = vsub.f32 %v1200, %v1994
  %v1996 = vand.u32 %v1995, 4294901760
  %1997 = vmatpush2.msra.mxu0 %v1996
  %v1998 = vand.u32 %v1155, 4294901760
  %1999 = vmatprep.mubr.f32.mxu0 %v1998
  %v2000 = vand.u32 %v1141, 4294901760
  %2001 = vmatmul.mubr.f32.gmra.mxu0 %v2000
  %v2002 = vpop.f32.mrf.mxu0
  %v2003 = vadd.f32 %v1835, %v2002
  %v2004 = vpop.f32.mrf.mxu0
  %2005 = vdwg.mxu0
  %2006 = vmatprep.subr.mxu0 0.0
  %v2007 = vand.u32 %v1199, 4294901760
  %2008 = vmatpush1.msra.mxu0 %v2007
  %2009 = vmatprep.subr.mxu0 0.0
  %v2010 = vand.u32 %v1198, 4294901760
  %2011 = vmatpush1.msra.mxu0 %v2010
  %2012 = vmatprep.subr.mxu0 0.0
  %v2013 = vand.u32 %v1197, 4294901760
  %2014 = vmatpush1.msra.mxu0 %v2013
  %2015 = vmatprep.subr.mxu0 0.0
  %v2016 = vand.u32 %v1196, 4294901760
  %2017 = vmatpush1.msra.mxu0 %v2016
  %2018 = vmatprep.subr.mxu0 0.0
  %v2019 = vand.u32 %v1195, 4294901760
  %2020 = vmatpush1.msra.mxu0 %v2019
  %2021 = vmatprep.subr.mxu0 0.0
  %v2022 = vand.u32 %v1194, 4294901760
  %2023 = vmatpush1.msra.mxu0 %v2022
  %2024 = vmatprep.subr.mxu0 0.0
  %v2025 = vand.u32 %v1193, 4294901760
  %2026 = vmatpush1.msra.mxu0 %v2025
  %2027 = vmatprep.subr.mxu0 0.0
  %v2028 = vand.u32 %v1192, 4294901760
  %2029 = vmatpush1.msra.mxu0 %v2028
  %2030 = vmatprep.subr.mxu0 0.0
  %v2031 = vand.u32 %v1191, 4294901760
  %2032 = vmatpush1.msra.mxu0 %v2031
  %2033 = vmatprep.subr.mxu0 0.0
  %v2034 = vand.u32 %v1190, 4294901760
  %2035 = vmatpush1.msra.mxu0 %v2034
  %2036 = vmatprep.subr.mxu0 0.0
  %v2037 = vand.u32 %v1189, 4294901760
  %2038 = vmatpush1.msra.mxu0 %v2037
  %2039 = vmatprep.subr.mxu0 0.0
  %v2040 = vand.u32 %v1188, 4294901760
  %2041 = vmatpush1.msra.mxu0 %v2040
  %2042 = vmatprep.subr.mxu0 0.0
  %v2043 = vand.u32 %v1187, 4294901760
  %2044 = vmatpush1.msra.mxu0 %v2043
  %2045 = vmatprep.subr.mxu0 0.0
  %v2046 = vand.u32 %v1186, 4294901760
  %2047 = vmatpush1.msra.mxu0 %v2046
  %2048 = vmatprep.subr.mxu0 0.0
  %v2049 = vand.u32 %v1185, 4294901760
  %2050 = vmatpush1.msra.mxu0 %v2049
  %2051 = vmatprep.subr.mxu0 0.0
  %v2052 = vand.u32 %v1184, 4294901760
  %2053 = vmatpush1.msra.mxu0 %v2052
  %2054 = vmatprep.subr.mxu0 0.0
  %v2055 = vand.u32 %v1215, 4294901760
  %2056 = vmatpush2.msra.mxu0 %v2055
  %2057 = vmatprep.subr.mxu0 0.0
  %v2058 = vand.u32 %v1214, 4294901760
  %2059 = vmatpush2.msra.mxu0 %v2058
  %2060 = vmatprep.subr.mxu0 0.0
  %v2061 = vand.u32 %v1213, 4294901760
  %2062 = vmatpush2.msra.mxu0 %v2061
  %2063 = vmatprep.subr.mxu0 0.0
  %v2064 = vand.u32 %v1212, 4294901760
  %2065 = vmatpush2.msra.mxu0 %v2064
  %2066 = vmatprep.subr.mxu0 0.0
  %v2067 = vand.u32 %v1211, 4294901760
  %2068 = vmatpush2.msra.mxu0 %v2067
  %2069 = vmatprep.subr.mxu0 0.0
  %v2070 = vand.u32 %v1210, 4294901760
  %2071 = vmatpush2.msra.mxu0 %v2070
  %2072 = vmatprep.subr.mxu0 0.0
  %v2073 = vand.u32 %v1209, 4294901760
  %2074 = vmatpush2.msra.mxu0 %v2073
  %2075 = vmatprep.subr.mxu0 0.0
  %v2076 = vand.u32 %v1208, 4294901760
  %2077 = vmatpush2.msra.mxu0 %v2076
  %2078 = vmatprep.subr.mxu0 0.0
  %v2079 = vand.u32 %v1207, 4294901760
  %2080 = vmatpush2.msra.mxu0 %v2079
  %2081 = vmatprep.subr.mxu0 0.0
  %v2082 = vand.u32 %v1206, 4294901760
  %2083 = vmatpush2.msra.mxu0 %v2082
  %2084 = vmatprep.subr.mxu0 0.0
  %v2085 = vand.u32 %v1205, 4294901760
  %2086 = vmatpush2.msra.mxu0 %v2085
  %2087 = vmatprep.subr.mxu0 0.0
  %v2088 = vand.u32 %v1204, 4294901760
  %2089 = vmatpush2.msra.mxu0 %v2088
  %2090 = vmatprep.subr.mxu0 0.0
  %v2091 = vand.u32 %v1203, 4294901760
  %2092 = vmatpush2.msra.mxu0 %v2091
  %2093 = vmatprep.subr.mxu0 0.0
  %v2094 = vand.u32 %v1202, 4294901760
  %2095 = vmatpush2.msra.mxu0 %v2094
  %2096 = vmatprep.subr.mxu0 0.0
  %v2097 = vand.u32 %v1201, 4294901760
  %2098 = vmatpush2.msra.mxu0 %v2097
  %2099 = vmatprep.subr.mxu0 0.0
  %v2100 = vand.u32 %v1200, 4294901760
  %2101 = vmatpush2.msra.mxu0 %v2100
  %v2102 = vand.u32 %v1155, 4294901760
  %2103 = vmatprep.mubr.f32.mxu0 %v2102
  %v2104 = vand.u32 %v1141, 4294901760
  %2105 = vmatmul.mubr.f32.gmra.mxu0 %v2104
  %v2106 = vpop.f32.mrf.mxu0
  %v2107 = vadd.f32 %v2003, %v2106
  %v2108 = vpop.f32.mrf.mxu0
  %2109 = vdwg.mxu0
  %2110 = vmatprep.subr.mxu0 0.0
  %v2111 = vand.u32 %v1231, 4294901760
  %2112 = vmatpush1.msra.mxu0 %v2111
  %2113 = vmatprep.subr.mxu0 0.0
  %v2114 = vand.u32 %v1230, 4294901760
  %2115 = vmatpush1.msra.mxu0 %v2114
  %2116 = vmatprep.subr.mxu0 0.0
  %v2117 = vand.u32 %v1229, 4294901760
  %2118 = vmatpush1.msra.mxu0 %v2117
  %2119 = vmatprep.subr.mxu0 0.0
  %v2120 = vand.u32 %v1228, 4294901760
  %2121 = vmatpush1.msra.mxu0 %v2120
  %2122 = vmatprep.subr.mxu0 0.0
  %v2123 = vand.u32 %v1227, 4294901760
  %2124 = vmatpush1.msra.mxu0 %v2123
  %2125 = vmatprep.subr.mxu0 0.0
  %v2126 = vand.u32 %v1226, 4294901760
  %2127 = vmatpush1.msra.mxu0 %v2126
  %2128 = vmatprep.subr.mxu0 0.0
  %v2129 = vand.u32 %v1225, 4294901760
  %2130 = vmatpush1.msra.mxu0 %v2129
  %2131 = vmatprep.subr.mxu0 0.0
  %v2132 = vand.u32 %v1224, 4294901760
  %2133 = vmatpush1.msra.mxu0 %v2132
  %2134 = vmatprep.subr.mxu0 0.0
  %v2135 = vand.u32 %v1223, 4294901760
  %2136 = vmatpush1.msra.mxu0 %v2135
  %2137 = vmatprep.subr.mxu0 0.0
  %v2138 = vand.u32 %v1222, 4294901760
  %2139 = vmatpush1.msra.mxu0 %v2138
  %2140 = vmatprep.subr.mxu0 0.0
  %v2141 = vand.u32 %v1221, 4294901760
  %2142 = vmatpush1.msra.mxu0 %v2141
  %2143 = vmatprep.subr.mxu0 0.0
  %v2144 = vand.u32 %v1220, 4294901760
  %2145 = vmatpush1.msra.mxu0 %v2144
  %2146 = vmatprep.subr.mxu0 0.0
  %v2147 = vand.u32 %v1219, 4294901760
  %2148 = vmatpush1.msra.mxu0 %v2147
  %2149 = vmatprep.subr.mxu0 0.0
  %v2150 = vand.u32 %v1218, 4294901760
  %2151 = vmatpush1.msra.mxu0 %v2150
  %2152 = vmatprep.subr.mxu0 0.0
  %v2153 = vand.u32 %v1217, 4294901760
  %2154 = vmatpush1.msra.mxu0 %v2153
  %2155 = vmatprep.subr.mxu0 0.0
  %v2156 = vand.u32 %v1216, 4294901760
  %2157 = vmatpush1.msra.mxu0 %v2156
  %2158 = vmatprep.subr.mxu0 0.0
  %v2159 = vand.u32 %v1247, 4294901760
  %2160 = vmatpush2.msra.mxu0 %v2159
  %2161 = vmatprep.subr.mxu0 0.0
  %v2162 = vand.u32 %v1246, 4294901760
  %2163 = vmatpush2.msra.mxu0 %v2162
  %2164 = vmatprep.subr.mxu0 0.0
  %v2165 = vand.u32 %v1245, 4294901760
  %2166 = vmatpush2.msra.mxu0 %v2165
  %2167 = vmatprep.subr.mxu0 0.0
  %v2168 = vand.u32 %v1244, 4294901760
  %2169 = vmatpush2.msra.mxu0 %v2168
  %2170 = vmatprep.subr.mxu0 0.0
  %v2171 = vand.u32 %v1243, 4294901760
  %2172 = vmatpush2.msra.mxu0 %v2171
  %2173 = vmatprep.subr.mxu0 0.0
  %v2174 = vand.u32 %v1242, 4294901760
  %2175 = vmatpush2.msra.mxu0 %v2174
  %2176 = vmatprep.subr.mxu0 0.0
  %v2177 = vand.u32 %v1241, 4294901760
  %2178 = vmatpush2.msra.mxu0 %v2177
  %2179 = vmatprep.subr.mxu0 0.0
  %v2180 = vand.u32 %v1240, 4294901760
  %2181 = vmatpush2.msra.mxu0 %v2180
  %2182 = vmatprep.subr.mxu0 0.0
  %v2183 = vand.u32 %v1239, 4294901760
  %2184 = vmatpush2.msra.mxu0 %v2183
  %2185 = vmatprep.subr.mxu0 0.0
  %v2186 = vand.u32 %v1238, 4294901760
  %2187 = vmatpush2.msra.mxu0 %v2186
  %2188 = vmatprep.subr.mxu0 0.0
  %v2189 = vand.u32 %v1237, 4294901760
  %2190 = vmatpush2.msra.mxu0 %v2189
  %2191 = vmatprep.subr.mxu0 0.0
  %v2192 = vand.u32 %v1236, 4294901760
  %2193 = vmatpush2.msra.mxu0 %v2192
  %2194 = vmatprep.subr.mxu0 0.0
  %v2195 = vand.u32 %v1235, 4294901760
  %2196 = vmatpush2.msra.mxu0 %v2195
  %2197 = vmatprep.subr.mxu0 0.0
  %v2198 = vand.u32 %v1234, 4294901760
  %2199 = vmatpush2.msra.mxu0 %v2198
  %2200 = vmatprep.subr.mxu0 0.0
  %v2201 = vand.u32 %v1233, 4294901760
  %2202 = vmatpush2.msra.mxu0 %v2201
  %2203 = vmatprep.subr.mxu0 0.0
  %v2204 = vand.u32 %v1232, 4294901760
  %2205 = vmatpush2.msra.mxu0 %v2204
  %v2206 = vand.u32 %v1183, 4294901760
  %v2207 = vsub.f32 %v1183, %v2206
  %v2208 = vand.u32 %v2207, 4294901760
  %v2209 = vsub.f32 %v2207, %v2208
  %v2210 = vand.u32 %v2209, 4294901760
  %2211 = vmatprep.mubr.f32.mxu0 %v2210
  %v2212 = vand.u32 %v1169, 4294901760
  %v2213 = vsub.f32 %v1169, %v2212
  %v2214 = vand.u32 %v2213, 4294901760
  %v2215 = vsub.f32 %v2213, %v2214
  %v2216 = vand.u32 %v2215, 4294901760
  %2217 = vmatmul.mubr.f32.gmra.mxu0 %v2216
  %v2218 = vpop.f32.mrf.mxu0
  %v2219 = vadd.f32 %v2107, %v2218
  %v2220 = vpop.f32.mrf.mxu0
  %2221 = vdwg.mxu0
  %2222 = vmatprep.subr.mxu0 0.0
  %v2223 = vand.u32 %v1231, 4294901760
  %v2224 = vsub.f32 %v1231, %v2223
  %v2225 = vand.u32 %v2224, 4294901760
  %v2226 = vsub.f32 %v2224, %v2225
  %v2227 = vand.u32 %v2226, 4294901760
  %2228 = vmatpush1.msra.mxu0 %v2227
  %2229 = vmatprep.subr.mxu0 0.0
  %v2230 = vand.u32 %v1230, 4294901760
  %v2231 = vsub.f32 %v1230, %v2230
  %v2232 = vand.u32 %v2231, 4294901760
  %v2233 = vsub.f32 %v2231, %v2232
  %v2234 = vand.u32 %v2233, 4294901760
  %2235 = vmatpush1.msra.mxu0 %v2234
  %2236 = vmatprep.subr.mxu0 0.0
  %v2237 = vand.u32 %v1229, 4294901760
  %v2238 = vsub.f32 %v1229, %v2237
  %v2239 = vand.u32 %v2238, 4294901760
  %v2240 = vsub.f32 %v2238, %v2239
  %v2241 = vand.u32 %v2240, 4294901760
  %2242 = vmatpush1.msra.mxu0 %v2241
  %2243 = vmatprep.subr.mxu0 0.0
  %v2244 = vand.u32 %v1228, 4294901760
  %v2245 = vsub.f32 %v1228, %v2244
  %v2246 = vand.u32 %v2245, 4294901760
  %v2247 = vsub.f32 %v2245, %v2246
  %v2248 = vand.u32 %v2247, 4294901760
  %2249 = vmatpush1.msra.mxu0 %v2248
  %2250 = vmatprep.subr.mxu0 0.0
  %v2251 = vand.u32 %v1227, 4294901760
  %v2252 = vsub.f32 %v1227, %v2251
  %v2253 = vand.u32 %v2252, 4294901760
  %v2254 = vsub.f32 %v2252, %v2253
  %v2255 = vand.u32 %v2254, 4294901760
  %2256 = vmatpush1.msra.mxu0 %v2255
  %2257 = vmatprep.subr.mxu0 0.0
  %v2258 = vand.u32 %v1226, 4294901760
  %v2259 = vsub.f32 %v1226, %v2258
  %v2260 = vand.u32 %v2259, 4294901760
  %v2261 = vsub.f32 %v2259, %v2260
  %v2262 = vand.u32 %v2261, 4294901760
  %2263 = vmatpush1.msra.mxu0 %v2262
  %2264 = vmatprep.subr.mxu0 0.0
  %v2265 = vand.u32 %v1225, 4294901760
  %v2266 = vsub.f32 %v1225, %v2265
  %v2267 = vand.u32 %v2266, 4294901760
  %v2268 = vsub.f32 %v2266, %v2267
  %v2269 = vand.u32 %v2268, 4294901760
  %2270 = vmatpush1.msra.mxu0 %v2269
  %2271 = vmatprep.subr.mxu0 0.0
  %v2272 = vand.u32 %v1224, 4294901760
  %v2273 = vsub.f32 %v1224, %v2272
  %v2274 = vand.u32 %v2273, 4294901760
  %v2275 = vsub.f32 %v2273, %v2274
  %v2276 = vand.u32 %v2275, 4294901760
  %2277 = vmatpush1.msra.mxu0 %v2276
  %2278 = vmatprep.subr.mxu0 0.0
  %v2279 = vand.u32 %v1223, 4294901760
  %v2280 = vsub.f32 %v1223, %v2279
  %v2281 = vand.u32 %v2280, 4294901760
  %v2282 = vsub.f32 %v2280, %v2281
  %v2283 = vand.u32 %v2282, 4294901760
  %2284 = vmatpush1.msra.mxu0 %v2283
  %2285 = vmatprep.subr.mxu0 0.0
  %v2286 = vand.u32 %v1222, 4294901760
  %v2287 = vsub.f32 %v1222, %v2286
  %v2288 = vand.u32 %v2287, 4294901760
  %v2289 = vsub.f32 %v2287, %v2288
  %v2290 = vand.u32 %v2289, 4294901760
  %2291 = vmatpush1.msra.mxu0 %v2290
  %2292 = vmatprep.subr.mxu0 0.0
  %v2293 = vand.u32 %v1221, 4294901760
  %v2294 = vsub.f32 %v1221, %v2293
  %v2295 = vand.u32 %v2294, 4294901760
  %v2296 = vsub.f32 %v2294, %v2295
  %v2297 = vand.u32 %v2296, 4294901760
  %2298 = vmatpush1.msra.mxu0 %v2297
  %2299 = vmatprep.subr.mxu0 0.0
  %v2300 = vand.u32 %v1220, 4294901760
  %v2301 = vsub.f32 %v1220, %v2300
  %v2302 = vand.u32 %v2301, 4294901760
  %v2303 = vsub.f32 %v2301, %v2302
  %v2304 = vand.u32 %v2303, 4294901760
  %2305 = vmatpush1.msra.mxu0 %v2304
  %2306 = vmatprep.subr.mxu0 0.0
  %v2307 = vand.u32 %v1219, 4294901760
  %v2308 = vsub.f32 %v1219, %v2307
  %v2309 = vand.u32 %v2308, 4294901760
  %v2310 = vsub.f32 %v2308, %v2309
  %v2311 = vand.u32 %v2310, 4294901760
  %2312 = vmatpush1.msra.mxu0 %v2311
  %2313 = vmatprep.subr.mxu0 0.0
  %v2314 = vand.u32 %v1218, 4294901760
  %v2315 = vsub.f32 %v1218, %v2314
  %v2316 = vand.u32 %v2315, 4294901760
  %v2317 = vsub.f32 %v2315, %v2316
  %v2318 = vand.u32 %v2317, 4294901760
  %2319 = vmatpush1.msra.mxu0 %v2318
  %2320 = vmatprep.subr.mxu0 0.0
  %v2321 = vand.u32 %v1217, 4294901760
  %v2322 = vsub.f32 %v1217, %v2321
  %v2323 = vand.u32 %v2322, 4294901760
  %v2324 = vsub.f32 %v2322, %v2323
  %v2325 = vand.u32 %v2324, 4294901760
  %2326 = vmatpush1.msra.mxu0 %v2325
  %2327 = vmatprep.subr.mxu0 0.0
  %v2328 = vand.u32 %v1216, 4294901760
  %v2329 = vsub.f32 %v1216, %v2328
  %v2330 = vand.u32 %v2329, 4294901760
  %v2331 = vsub.f32 %v2329, %v2330
  %v2332 = vand.u32 %v2331, 4294901760
  %2333 = vmatpush1.msra.mxu0 %v2332
  %2334 = vmatprep.subr.mxu0 0.0
  %v2335 = vand.u32 %v1247, 4294901760
  %v2336 = vsub.f32 %v1247, %v2335
  %v2337 = vand.u32 %v2336, 4294901760
  %v2338 = vsub.f32 %v2336, %v2337
  %v2339 = vand.u32 %v2338, 4294901760
  %2340 = vmatpush2.msra.mxu0 %v2339
  %2341 = vmatprep.subr.mxu0 0.0
  %v2342 = vand.u32 %v1246, 4294901760
  %v2343 = vsub.f32 %v1246, %v2342
  %v2344 = vand.u32 %v2343, 4294901760
  %v2345 = vsub.f32 %v2343, %v2344
  %v2346 = vand.u32 %v2345, 4294901760
  %2347 = vmatpush2.msra.mxu0 %v2346
  %2348 = vmatprep.subr.mxu0 0.0
  %v2349 = vand.u32 %v1245, 4294901760
  %v2350 = vsub.f32 %v1245, %v2349
  %v2351 = vand.u32 %v2350, 4294901760
  %v2352 = vsub.f32 %v2350, %v2351
  %v2353 = vand.u32 %v2352, 4294901760
  %2354 = vmatpush2.msra.mxu0 %v2353
  %2355 = vmatprep.subr.mxu0 0.0
  %v2356 = vand.u32 %v1244, 4294901760
  %v2357 = vsub.f32 %v1244, %v2356
  %v2358 = vand.u32 %v2357, 4294901760
  %v2359 = vsub.f32 %v2357, %v2358
  %v2360 = vand.u32 %v2359, 4294901760
  %2361 = vmatpush2.msra.mxu0 %v2360
  %2362 = vmatprep.subr.mxu0 0.0
  %v2363 = vand.u32 %v1243, 4294901760
  %v2364 = vsub.f32 %v1243, %v2363
  %v2365 = vand.u32 %v2364, 4294901760
  %v2366 = vsub.f32 %v2364, %v2365
  %v2367 = vand.u32 %v2366, 4294901760
  %2368 = vmatpush2.msra.mxu0 %v2367
  %2369 = vmatprep.subr.mxu0 0.0
  %v2370 = vand.u32 %v1242, 4294901760
  %v2371 = vsub.f32 %v1242, %v2370
  %v2372 = vand.u32 %v2371, 4294901760
  %v2373 = vsub.f32 %v2371, %v2372
  %v2374 = vand.u32 %v2373, 4294901760
  %2375 = vmatpush2.msra.mxu0 %v2374
  %2376 = vmatprep.subr.mxu0 0.0
  %v2377 = vand.u32 %v1241, 4294901760
  %v2378 = vsub.f32 %v1241, %v2377
  %v2379 = vand.u32 %v2378, 4294901760
  %v2380 = vsub.f32 %v2378, %v2379
  %v2381 = vand.u32 %v2380, 4294901760
  %2382 = vmatpush2.msra.mxu0 %v2381
  %2383 = vmatprep.subr.mxu0 0.0
  %v2384 = vand.u32 %v1240, 4294901760
  %v2385 = vsub.f32 %v1240, %v2384
  %v2386 = vand.u32 %v2385, 4294901760
  %v2387 = vsub.f32 %v2385, %v2386
  %v2388 = vand.u32 %v2387, 4294901760
  %2389 = vmatpush2.msra.mxu0 %v2388
  %2390 = vmatprep.subr.mxu0 0.0
  %v2391 = vand.u32 %v1239, 4294901760
  %v2392 = vsub.f32 %v1239, %v2391
  %v2393 = vand.u32 %v2392, 4294901760
  %v2394 = vsub.f32 %v2392, %v2393
  %v2395 = vand.u32 %v2394, 4294901760
  %2396 = vmatpush2.msra.mxu0 %v2395
  %2397 = vmatprep.subr.mxu0 0.0
  %v2398 = vand.u32 %v1238, 4294901760
  %v2399 = vsub.f32 %v1238, %v2398
  %v2400 = vand.u32 %v2399, 4294901760
  %v2401 = vsub.f32 %v2399, %v2400
  %v2402 = vand.u32 %v2401, 4294901760
  %2403 = vmatpush2.msra.mxu0 %v2402
  %2404 = vmatprep.subr.mxu0 0.0
  %v2405 = vand.u32 %v1237, 4294901760
  %v2406 = vsub.f32 %v1237, %v2405
  %v2407 = vand.u32 %v2406, 4294901760
  %v2408 = vsub.f32 %v2406, %v2407
  %v2409 = vand.u32 %v2408, 4294901760
  %2410 = vmatpush2.msra.mxu0 %v2409
  %2411 = vmatprep.subr.mxu0 0.0
  %v2412 = vand.u32 %v1236, 4294901760
  %v2413 = vsub.f32 %v1236, %v2412
  %v2414 = vand.u32 %v2413, 4294901760
  %v2415 = vsub.f32 %v2413, %v2414
  %v2416 = vand.u32 %v2415, 4294901760
  %2417 = vmatpush2.msra.mxu0 %v2416
  %2418 = vmatprep.subr.mxu0 0.0
  %v2419 = vand.u32 %v1235, 4294901760
  %v2420 = vsub.f32 %v1235, %v2419
  %v2421 = vand.u32 %v2420, 4294901760
  %v2422 = vsub.f32 %v2420, %v2421
  %v2423 = vand.u32 %v2422, 4294901760
  %2424 = vmatpush2.msra.mxu0 %v2423
  %2425 = vmatprep.subr.mxu0 0.0
  %v2426 = vand.u32 %v1234, 4294901760
  %v2427 = vsub.f32 %v1234, %v2426
  %v2428 = vand.u32 %v2427, 4294901760
  %v2429 = vsub.f32 %v2427, %v2428
  %v2430 = vand.u32 %v2429, 4294901760
  %2431 = vmatpush2.msra.mxu0 %v2430
  %2432 = vmatprep.subr.mxu0 0.0
  %v2433 = vand.u32 %v1233, 4294901760
  %v2434 = vsub.f32 %v1233, %v2433
  %v2435 = vand.u32 %v2434, 4294901760
  %v2436 = vsub.f32 %v2434, %v2435
  %v2437 = vand.u32 %v2436, 4294901760
  %2438 = vmatpush2.msra.mxu0 %v2437
  %2439 = vmatprep.subr.mxu0 0.0
  %v2440 = vand.u32 %v1232, 4294901760
  %v2441 = vsub.f32 %v1232, %v2440
  %v2442 = vand.u32 %v2441, 4294901760
  %v2443 = vsub.f32 %v2441, %v2442
  %v2444 = vand.u32 %v2443, 4294901760
  %2445 = vmatpush2.msra.mxu0 %v2444
  %v2446 = vand.u32 %v1183, 4294901760
  %2447 = vmatprep.mubr.f32.mxu0 %v2446
  %v2448 = vand.u32 %v1169, 4294901760
  %2449 = vmatmul.mubr.f32.gmra.mxu0 %v2448
  %v2450 = vpop.f32.mrf.mxu0
  %v2451 = vadd.f32 %v2219, %v2450
  %v2452 = vpop.f32.mrf.mxu0
  %2453 = vdwg.mxu0
  %2454 = vmatprep.subr.mxu0 0.0
  %v2455 = vand.u32 %v1231, 4294901760
  %v2456 = vsub.f32 %v1231, %v2455
  %2457 = vmatpush1.msra.mxu0 %v2456
  %2458 = vmatprep.subr.mxu0 0.0
  %v2459 = vand.u32 %v1230, 4294901760
  %v2460 = vsub.f32 %v1230, %v2459
  %2461 = vmatpush1.msra.mxu0 %v2460
  %2462 = vmatprep.subr.mxu0 0.0
  %v2463 = vand.u32 %v1229, 4294901760
  %v2464 = vsub.f32 %v1229, %v2463
  %2465 = vmatpush1.msra.mxu0 %v2464
  %2466 = vmatprep.subr.mxu0 0.0
  %v2467 = vand.u32 %v1228, 4294901760
  %v2468 = vsub.f32 %v1228, %v2467
  %2469 = vmatpush1.msra.mxu0 %v2468
  %2470 = vmatprep.subr.mxu0 0.0
  %v2471 = vand.u32 %v1227, 4294901760
  %v2472 = vsub.f32 %v1227, %v2471
  %2473 = vmatpush1.msra.mxu0 %v2472
  %2474 = vmatprep.subr.mxu0 0.0
  %v2475 = vand.u32 %v1226, 4294901760
  %v2476 = vsub.f32 %v1226, %v2475
  %2477 = vmatpush1.msra.mxu0 %v2476
  %2478 = vmatprep.subr.mxu0 0.0
  %v2479 = vand.u32 %v1225, 4294901760
  %v2480 = vsub.f32 %v1225, %v2479
  %2481 = vmatpush1.msra.mxu0 %v2480
  %2482 = vmatprep.subr.mxu0 0.0
  %v2483 = vand.u32 %v1224, 4294901760
  %v2484 = vsub.f32 %v1224, %v2483
  %2485 = vmatpush1.msra.mxu0 %v2484
  %2486 = vmatprep.subr.mxu0 0.0
  %v2487 = vand.u32 %v1223, 4294901760
  %v2488 = vsub.f32 %v1223, %v2487
  %2489 = vmatpush1.msra.mxu0 %v2488
  %2490 = vmatprep.subr.mxu0 0.0
  %v2491 = vand.u32 %v1222, 4294901760
  %v2492 = vsub.f32 %v1222, %v2491
  %2493 = vmatpush1.msra.mxu0 %v2492
  %2494 = vmatprep.subr.mxu0 0.0
  %v2495 = vand.u32 %v1221, 4294901760
  %v2496 = vsub.f32 %v1221, %v2495
  %2497 = vmatpush1.msra.mxu0 %v2496
  %2498 = vmatprep.subr.mxu0 0.0
  %v2499 = vand.u32 %v1220, 4294901760
  %v2500 = vsub.f32 %v1220, %v2499
  %2501 = vmatpush1.msra.mxu0 %v2500
  %2502 = vmatprep.subr.mxu0 0.0
  %v2503 = vand.u32 %v1219, 4294901760
  %v2504 = vsub.f32 %v1219, %v2503
  %2505 = vmatpush1.msra.mxu0 %v2504
  %2506 = vmatprep.subr.mxu0 0.0
  %v2507 = vand.u32 %v1218, 4294901760
  %v2508 = vsub.f32 %v1218, %v2507
  %2509 = vmatpush1.msra.mxu0 %v2508
  %2510 = vmatprep.subr.mxu0 0.0
  %v2511 = vand.u32 %v1217, 4294901760
  %v2512 = vsub.f32 %v1217, %v2511
  %2513 = vmatpush1.msra.mxu0 %v2512
  %2514 = vmatprep.subr.mxu0 0.0
  %v2515 = vand.u32 %v1216, 4294901760
  %v2516 = vsub.f32 %v1216, %v2515
  %2517 = vmatpush1.msra.mxu0 %v2516
  %2518 = vmatprep.subr.mxu0 0.0
  %v2519 = vand.u32 %v1247, 4294901760
  %v2520 = vsub.f32 %v1247, %v2519
  %2521 = vmatpush2.msra.mxu0 %v2520
  %2522 = vmatprep.subr.mxu0 0.0
  %v2523 = vand.u32 %v1246, 4294901760
  %v2524 = vsub.f32 %v1246, %v2523
  %2525 = vmatpush2.msra.mxu0 %v2524
  %2526 = vmatprep.subr.mxu0 0.0
  %v2527 = vand.u32 %v1245, 4294901760
  %v2528 = vsub.f32 %v1245, %v2527
  %2529 = vmatpush2.msra.mxu0 %v2528
  %2530 = vmatprep.subr.mxu0 0.0
  %v2531 = vand.u32 %v1244, 4294901760
  %v2532 = vsub.f32 %v1244, %v2531
  %2533 = vmatpush2.msra.mxu0 %v2532
  %2534 = vmatprep.subr.mxu0 0.0
  %v2535 = vand.u32 %v1243, 4294901760
  %v2536 = vsub.f32 %v1243, %v2535
  %2537 = vmatpush2.msra.mxu0 %v2536
  %2538 = vmatprep.subr.mxu0 0.0
  %v2539 = vand.u32 %v1242, 4294901760
  %v2540 = vsub.f32 %v1242, %v2539
  %2541 = vmatpush2.msra.mxu0 %v2540
  %2542 = vmatprep.subr.mxu0 0.0
  %v2543 = vand.u32 %v1241, 4294901760
  %v2544 = vsub.f32 %v1241, %v2543
  %2545 = vmatpush2.msra.mxu0 %v2544
  %2546 = vmatprep.subr.mxu0 0.0
  %v2547 = vand.u32 %v1240, 4294901760
  %v2548 = vsub.f32 %v1240, %v2547
  %2549 = vmatpush2.msra.mxu0 %v2548
  %2550 = vmatprep.subr.mxu0 0.0
  %v2551 = vand.u32 %v1239, 4294901760
  %v2552 = vsub.f32 %v1239, %v2551
  %2553 = vmatpush2.msra.mxu0 %v2552
  %2554 = vmatprep.subr.mxu0 0.0
  %v2555 = vand.u32 %v1238, 4294901760
  %v2556 = vsub.f32 %v1238, %v2555
  %2557 = vmatpush2.msra.mxu0 %v2556
  %2558 = vmatprep.subr.mxu0 0.0
  %v2559 = vand.u32 %v1237, 4294901760
  %v2560 = vsub.f32 %v1237, %v2559
  %2561 = vmatpush2.msra.mxu0 %v2560
  %2562 = vmatprep.subr.mxu0 0.0
  %v2563 = vand.u32 %v1236, 4294901760
  %v2564 = vsub.f32 %v1236, %v2563
  %2565 = vmatpush2.msra.mxu0 %v2564
  %2566 = vmatprep.subr.mxu0 0.0
  %v2567 = vand.u32 %v1235, 4294901760
  %v2568 = vsub.f32 %v1235, %v2567
  %2569 = vmatpush2.msra.mxu0 %v2568
  %2570 = vmatprep.subr.mxu0 0.0
  %v2571 = vand.u32 %v1234, 4294901760
  %v2572 = vsub.f32 %v1234, %v2571
  %2573 = vmatpush2.msra.mxu0 %v2572
  %2574 = vmatprep.subr.mxu0 0.0
  %v2575 = vand.u32 %v1233, 4294901760
  %v2576 = vsub.f32 %v1233, %v2575
  %2577 = vmatpush2.msra.mxu0 %v2576
  %2578 = vmatprep.subr.mxu0 0.0
  %v2579 = vand.u32 %v1232, 4294901760
  %v2580 = vsub.f32 %v1232, %v2579
  %2581 = vmatpush2.msra.mxu0 %v2580
  %v2582 = vand.u32 %v1183, 4294901760
  %v2583 = vsub.f32 %v1183, %v2582
  %2584 = vmatprep.mubr.f32.mxu0 %v2583
  %v2585 = vand.u32 %v1169, 4294901760
  %v2586 = vsub.f32 %v1169, %v2585
  %2587 = vmatmul.mubr.f32.gmra.mxu0 %v2586
  %v2588 = vpop.f32.mrf.mxu0
  %v2589 = vadd.f32 %v2451, %v2588
  %v2590 = vpop.f32.mrf.mxu0
  %2591 = vdwg.mxu0
  %2592 = vmatprep.subr.mxu0 0.0
  %v2593 = vand.u32 %v1231, 4294901760
  %2594 = vmatpush1.msra.mxu0 %v2593
  %2595 = vmatprep.subr.mxu0 0.0
  %v2596 = vand.u32 %v1230, 4294901760
  %2597 = vmatpush1.msra.mxu0 %v2596
  %2598 = vmatprep.subr.mxu0 0.0
  %v2599 = vand.u32 %v1229, 4294901760
  %2600 = vmatpush1.msra.mxu0 %v2599
  %2601 = vmatprep.subr.mxu0 0.0
  %v2602 = vand.u32 %v1228, 4294901760
  %2603 = vmatpush1.msra.mxu0 %v2602
  %2604 = vmatprep.subr.mxu0 0.0
  %v2605 = vand.u32 %v1227, 4294901760
  %2606 = vmatpush1.msra.mxu0 %v2605
  %2607 = vmatprep.subr.mxu0 0.0
  %v2608 = vand.u32 %v1226, 4294901760
  %2609 = vmatpush1.msra.mxu0 %v2608
  %2610 = vmatprep.subr.mxu0 0.0
  %v2611 = vand.u32 %v1225, 4294901760
  %2612 = vmatpush1.msra.mxu0 %v2611
  %2613 = vmatprep.subr.mxu0 0.0
  %v2614 = vand.u32 %v1224, 4294901760
  %2615 = vmatpush1.msra.mxu0 %v2614
  %2616 = vmatprep.subr.mxu0 0.0
  %v2617 = vand.u32 %v1223, 4294901760
  %2618 = vmatpush1.msra.mxu0 %v2617
  %2619 = vmatprep.subr.mxu0 0.0
  %v2620 = vand.u32 %v1222, 4294901760
  %2621 = vmatpush1.msra.mxu0 %v2620
  %2622 = vmatprep.subr.mxu0 0.0
  %v2623 = vand.u32 %v1221, 4294901760
  %2624 = vmatpush1.msra.mxu0 %v2623
  %2625 = vmatprep.subr.mxu0 0.0
  %v2626 = vand.u32 %v1220, 4294901760
  %2627 = vmatpush1.msra.mxu0 %v2626
  %2628 = vmatprep.subr.mxu0 0.0
  %v2629 = vand.u32 %v1219, 4294901760
  %2630 = vmatpush1.msra.mxu0 %v2629
  %2631 = vmatprep.subr.mxu0 0.0
  %v2632 = vand.u32 %v1218, 4294901760
  %2633 = vmatpush1.msra.mxu0 %v2632
  %2634 = vmatprep.subr.mxu0 0.0
  %v2635 = vand.u32 %v1217, 4294901760
  %2636 = vmatpush1.msra.mxu0 %v2635
  %2637 = vmatprep.subr.mxu0 0.0
  %v2638 = vand.u32 %v1216, 4294901760
  %2639 = vmatpush1.msra.mxu0 %v2638
  %2640 = vmatprep.subr.mxu0 0.0
  %v2641 = vand.u32 %v1247, 4294901760
  %2642 = vmatpush2.msra.mxu0 %v2641
  %2643 = vmatprep.subr.mxu0 0.0
  %v2644 = vand.u32 %v1246, 4294901760
  %2645 = vmatpush2.msra.mxu0 %v2644
  %2646 = vmatprep.subr.mxu0 0.0
  %v2647 = vand.u32 %v1245, 4294901760
  %2648 = vmatpush2.msra.mxu0 %v2647
  %2649 = vmatprep.subr.mxu0 0.0
  %v2650 = vand.u32 %v1244, 4294901760
  %2651 = vmatpush2.msra.mxu0 %v2650
  %2652 = vmatprep.subr.mxu0 0.0
  %v2653 = vand.u32 %v1243, 4294901760
  %2654 = vmatpush2.msra.mxu0 %v2653
  %2655 = vmatprep.subr.mxu0 0.0
  %v2656 = vand.u32 %v1242, 4294901760
  %2657 = vmatpush2.msra.mxu0 %v2656
  %2658 = vmatprep.subr.mxu0 0.0
  %v2659 = vand.u32 %v1241, 4294901760
  %2660 = vmatpush2.msra.mxu0 %v2659
  %2661 = vmatprep.subr.mxu0 0.0
  %v2662 = vand.u32 %v1240, 4294901760
  %2663 = vmatpush2.msra.mxu0 %v2662
  %2664 = vmatprep.subr.mxu0 0.0
  %v2665 = vand.u32 %v1239, 4294901760
  %2666 = vmatpush2.msra.mxu0 %v2665
  %2667 = vmatprep.subr.mxu0 0.0
  %v2668 = vand.u32 %v1238, 4294901760
  %2669 = vmatpush2.msra.mxu0 %v2668
  %2670 = vmatprep.subr.mxu0 0.0
  %v2671 = vand.u32 %v1237, 4294901760
  %2672 = vmatpush2.msra.mxu0 %v2671
  %2673 = vmatprep.subr.mxu0 0.0
  %v2674 = vand.u32 %v1236, 4294901760
  %2675 = vmatpush2.msra.mxu0 %v2674
  %2676 = vmatprep.subr.mxu0 0.0
  %v2677 = vand.u32 %v1235, 4294901760
  %2678 = vmatpush2.msra.mxu0 %v2677
  %2679 = vmatprep.subr.mxu0 0.0
  %v2680 = vand.u32 %v1234, 4294901760
  %2681 = vmatpush2.msra.mxu0 %v2680
  %2682 = vmatprep.subr.mxu0 0.0
  %v2683 = vand.u32 %v1233, 4294901760
  %2684 = vmatpush2.msra.mxu0 %v2683
  %2685 = vmatprep.subr.mxu0 0.0
  %v2686 = vand.u32 %v1232, 4294901760
  %2687 = vmatpush2.msra.mxu0 %v2686
  %v2688 = vand.u32 %v1183, 4294901760
  %v2689 = vsub.f32 %v1183, %v2688
  %v2690 = vand.u32 %v2689, 4294901760
  %2691 = vmatprep.mubr.f32.mxu0 %v2690
  %v2692 = vand.u32 %v1169, 4294901760
  %v2693 = vsub.f32 %v1169, %v2692
  %v2694 = vand.u32 %v2693, 4294901760
  %2695 = vmatmul.mubr.f32.gmra.mxu0 %v2694
  %v2696 = vpop.f32.mrf.mxu0
  %v2697 = vadd.f32 %v2589, %v2696
  %v2698 = vpop.f32.mrf.mxu0
  %2699 = vdwg.mxu0
  %2700 = vmatprep.subr.mxu0 0.0
  %v2701 = vand.u32 %v1231, 4294901760
  %v2702 = vsub.f32 %v1231, %v2701
  %v2703 = vand.u32 %v2702, 4294901760
  %2704 = vmatpush1.msra.mxu0 %v2703
  %2705 = vmatprep.subr.mxu0 0.0
  %v2706 = vand.u32 %v1230, 4294901760
  %v2707 = vsub.f32 %v1230, %v2706
  %v2708 = vand.u32 %v2707, 4294901760
  %2709 = vmatpush1.msra.mxu0 %v2708
  %2710 = vmatprep.subr.mxu0 0.0
  %v2711 = vand.u32 %v1229, 4294901760
  %v2712 = vsub.f32 %v1229, %v2711
  %v2713 = vand.u32 %v2712, 4294901760
  %2714 = vmatpush1.msra.mxu0 %v2713
  %2715 = vmatprep.subr.mxu0 0.0
  %v2716 = vand.u32 %v1228, 4294901760
  %v2717 = vsub.f32 %v1228, %v2716
  %v2718 = vand.u32 %v2717, 4294901760
  %2719 = vmatpush1.msra.mxu0 %v2718
  %2720 = vmatprep.subr.mxu0 0.0
  %v2721 = vand.u32 %v1227, 4294901760
  %v2722 = vsub.f32 %v1227, %v2721
  %v2723 = vand.u32 %v2722, 4294901760
  %2724 = vmatpush1.msra.mxu0 %v2723
  %2725 = vmatprep.subr.mxu0 0.0
  %v2726 = vand.u32 %v1226, 4294901760
  %v2727 = vsub.f32 %v1226, %v2726
  %v2728 = vand.u32 %v2727, 4294901760
  %2729 = vmatpush1.msra.mxu0 %v2728
  %2730 = vmatprep.subr.mxu0 0.0
  %v2731 = vand.u32 %v1225, 4294901760
  %v2732 = vsub.f32 %v1225, %v2731
  %v2733 = vand.u32 %v2732, 4294901760
  %2734 = vmatpush1.msra.mxu0 %v2733
  %2735 = vmatprep.subr.mxu0 0.0
  %v2736 = vand.u32 %v1224, 4294901760
  %v2737 = vsub.f32 %v1224, %v2736
  %v2738 = vand.u32 %v2737, 4294901760
  %2739 = vmatpush1.msra.mxu0 %v2738
  %2740 = vmatprep.subr.mxu0 0.0
  %v2741 = vand.u32 %v1223, 4294901760
  %v2742 = vsub.f32 %v1223, %v2741
  %v2743 = vand.u32 %v2742, 4294901760
  %2744 = vmatpush1.msra.mxu0 %v2743
  %2745 = vmatprep.subr.mxu0 0.0
  %v2746 = vand.u32 %v1222, 4294901760
  %v2747 = vsub.f32 %v1222, %v2746
  %v2748 = vand.u32 %v2747, 4294901760
  %2749 = vmatpush1.msra.mxu0 %v2748
  %2750 = vmatprep.subr.mxu0 0.0
  %v2751 = vand.u32 %v1221, 4294901760
  %v2752 = vsub.f32 %v1221, %v2751
  %v2753 = vand.u32 %v2752, 4294901760
  %2754 = vmatpush1.msra.mxu0 %v2753
  %2755 = vmatprep.subr.mxu0 0.0
  %v2756 = vand.u32 %v1220, 4294901760
  %v2757 = vsub.f32 %v1220, %v2756
  %v2758 = vand.u32 %v2757, 4294901760
  %2759 = vmatpush1.msra.mxu0 %v2758
  %2760 = vmatprep.subr.mxu0 0.0
  %v2761 = vand.u32 %v1219, 4294901760
  %v2762 = vsub.f32 %v1219, %v2761
  %v2763 = vand.u32 %v2762, 4294901760
  %2764 = vmatpush1.msra.mxu0 %v2763
  %2765 = vmatprep.subr.mxu0 0.0
  %v2766 = vand.u32 %v1218, 4294901760
  %v2767 = vsub.f32 %v1218, %v2766
  %v2768 = vand.u32 %v2767, 4294901760
  %2769 = vmatpush1.msra.mxu0 %v2768
  %2770 = vmatprep.subr.mxu0 0.0
  %v2771 = vand.u32 %v1217, 4294901760
  %v2772 = vsub.f32 %v1217, %v2771
  %v2773 = vand.u32 %v2772, 4294901760
  %2774 = vmatpush1.msra.mxu0 %v2773
  %2775 = vmatprep.subr.mxu0 0.0
  %v2776 = vand.u32 %v1216, 4294901760
  %v2777 = vsub.f32 %v1216, %v2776
  %v2778 = vand.u32 %v2777, 4294901760
  %2779 = vmatpush1.msra.mxu0 %v2778
  %2780 = vmatprep.subr.mxu0 0.0
  %v2781 = vand.u32 %v1247, 4294901760
  %v2782 = vsub.f32 %v1247, %v2781
  %v2783 = vand.u32 %v2782, 4294901760
  %2784 = vmatpush2.msra.mxu0 %v2783
  %2785 = vmatprep.subr.mxu0 0.0
  %v2786 = vand.u32 %v1246, 4294901760
  %v2787 = vsub.f32 %v1246, %v2786
  %v2788 = vand.u32 %v2787, 4294901760
  %2789 = vmatpush2.msra.mxu0 %v2788
  %2790 = vmatprep.subr.mxu0 0.0
  %v2791 = vand.u32 %v1245, 4294901760
  %v2792 = vsub.f32 %v1245, %v2791
  %v2793 = vand.u32 %v2792, 4294901760
  %2794 = vmatpush2.msra.mxu0 %v2793
  %2795 = vmatprep.subr.mxu0 0.0
  %v2796 = vand.u32 %v1244, 4294901760
  %v2797 = vsub.f32 %v1244, %v2796
  %v2798 = vand.u32 %v2797, 4294901760
  %2799 = vmatpush2.msra.mxu0 %v2798
  %2800 = vmatprep.subr.mxu0 0.0
  %v2801 = vand.u32 %v1243, 4294901760
  %v2802 = vsub.f32 %v1243, %v2801
  %v2803 = vand.u32 %v2802, 4294901760
  %2804 = vmatpush2.msra.mxu0 %v2803
  %2805 = vmatprep.subr.mxu0 0.0
  %v2806 = vand.u32 %v1242, 4294901760
  %v2807 = vsub.f32 %v1242, %v2806
  %v2808 = vand.u32 %v2807, 4294901760
  %2809 = vmatpush2.msra.mxu0 %v2808
  %2810 = vmatprep.subr.mxu0 0.0
  %v2811 = vand.u32 %v1241, 4294901760
  %v2812 = vsub.f32 %v1241, %v2811
  %v2813 = vand.u32 %v2812, 4294901760
  %2814 = vmatpush2.msra.mxu0 %v2813
  %2815 = vmatprep.subr.mxu0 0.0
  %v2816 = vand.u32 %v1240, 4294901760
  %v2817 = vsub.f32 %v1240, %v2816
  %v2818 = vand.u32 %v2817, 4294901760
  %2819 = vmatpush2.msra.mxu0 %v2818
  %2820 = vmatprep.subr.mxu0 0.0
  %v2821 = vand.u32 %v1239, 4294901760
  %v2822 = vsub.f32 %v1239, %v2821
  %v2823 = vand.u32 %v2822, 4294901760
  %2824 = vmatpush2.msra.mxu0 %v2823
  %2825 = vmatprep.subr.mxu0 0.0
  %v2826 = vand.u32 %v1238, 4294901760
  %v2827 = vsub.f32 %v1238, %v2826
  %v2828 = vand.u32 %v2827, 4294901760
  %2829 = vmatpush2.msra.mxu0 %v2828
  %2830 = vmatprep.subr.mxu0 0.0
  %v2831 = vand.u32 %v1237, 4294901760
  %v2832 = vsub.f32 %v1237, %v2831
  %v2833 = vand.u32 %v2832, 4294901760
  %2834 = vmatpush2.msra.mxu0 %v2833
  %2835 = vmatprep.subr.mxu0 0.0
  %v2836 = vand.u32 %v1236, 4294901760
  %v2837 = vsub.f32 %v1236, %v2836
  %v2838 = vand.u32 %v2837, 4294901760
  %2839 = vmatpush2.msra.mxu0 %v2838
  %2840 = vmatprep.subr.mxu0 0.0
  %v2841 = vand.u32 %v1235, 4294901760
  %v2842 = vsub.f32 %v1235, %v2841
  %v2843 = vand.u32 %v2842, 4294901760
  %2844 = vmatpush2.msra.mxu0 %v2843
  %2845 = vmatprep.subr.mxu0 0.0
  %v2846 = vand.u32 %v1234, 4294901760
  %v2847 = vsub.f32 %v1234, %v2846
  %v2848 = vand.u32 %v2847, 4294901760
  %2849 = vmatpush2.msra.mxu0 %v2848
  %2850 = vmatprep.subr.mxu0 0.0
  %v2851 = vand.u32 %v1233, 4294901760
  %v2852 = vsub.f32 %v1233, %v2851
  %v2853 = vand.u32 %v2852, 4294901760
  %2854 = vmatpush2.msra.mxu0 %v2853
  %2855 = vmatprep.subr.mxu0 0.0
  %v2856 = vand.u32 %v1232, 4294901760
  %v2857 = vsub.f32 %v1232, %v2856
  %v2858 = vand.u32 %v2857, 4294901760
  %2859 = vmatpush2.msra.mxu0 %v2858
  %v2860 = vand.u32 %v1183, 4294901760
  %2861 = vmatprep.mubr.f32.mxu0 %v2860
  %v2862 = vand.u32 %v1169, 4294901760
  %2863 = vmatmul.mubr.f32.gmra.mxu0 %v2862
  %v2864 = vpop.f32.mrf.mxu0
  %v2865 = vadd.f32 %v2697, %v2864
  %v2866 = vpop.f32.mrf.mxu0
  %2867 = vdwg.mxu0
  %2868 = vmatprep.subr.mxu0 0.0
  %v2869 = vand.u32 %v1231, 4294901760
  %2870 = vmatpush1.msra.mxu0 %v2869
  %2871 = vmatprep.subr.mxu0 0.0
  %v2872 = vand.u32 %v1230, 4294901760
  %2873 = vmatpush1.msra.mxu0 %v2872
  %2874 = vmatprep.subr.mxu0 0.0
  %v2875 = vand.u32 %v1229, 4294901760
  %2876 = vmatpush1.msra.mxu0 %v2875
  %2877 = vmatprep.subr.mxu0 0.0
  %v2878 = vand.u32 %v1228, 4294901760
  %2879 = vmatpush1.msra.mxu0 %v2878
  %2880 = vmatprep.subr.mxu0 0.0
  %v2881 = vand.u32 %v1227, 4294901760
  %2882 = vmatpush1.msra.mxu0 %v2881
  %2883 = vmatprep.subr.mxu0 0.0
  %v2884 = vand.u32 %v1226, 4294901760
  %2885 = vmatpush1.msra.mxu0 %v2884
  %2886 = vmatprep.subr.mxu0 0.0
  %v2887 = vand.u32 %v1225, 4294901760
  %2888 = vmatpush1.msra.mxu0 %v2887
  %2889 = vmatprep.subr.mxu0 0.0
  %v2890 = vand.u32 %v1224, 4294901760
  %2891 = vmatpush1.msra.mxu0 %v2890
  %2892 = vmatprep.subr.mxu0 0.0
  %v2893 = vand.u32 %v1223, 4294901760
  %2894 = vmatpush1.msra.mxu0 %v2893
  %2895 = vmatprep.subr.mxu0 0.0
  %v2896 = vand.u32 %v1222, 4294901760
  %2897 = vmatpush1.msra.mxu0 %v2896
  %2898 = vmatprep.subr.mxu0 0.0
  %v2899 = vand.u32 %v1221, 4294901760
  %2900 = vmatpush1.msra.mxu0 %v2899
  %2901 = vmatprep.subr.mxu0 0.0
  %v2902 = vand.u32 %v1220, 4294901760
  %2903 = vmatpush1.msra.mxu0 %v2902
  %2904 = vmatprep.subr.mxu0 0.0
  %v2905 = vand.u32 %v1219, 4294901760
  %2906 = vmatpush1.msra.mxu0 %v2905
  %2907 = vmatprep.subr.mxu0 0.0
  %v2908 = vand.u32 %v1218, 4294901760
  %2909 = vmatpush1.msra.mxu0 %v2908
  %2910 = vmatprep.subr.mxu0 0.0
  %v2911 = vand.u32 %v1217, 4294901760
  %2912 = vmatpush1.msra.mxu0 %v2911
  %2913 = vmatprep.subr.mxu0 0.0
  %v2914 = vand.u32 %v1216, 4294901760
  %2915 = vmatpush1.msra.mxu0 %v2914
  %2916 = vmatprep.subr.mxu0 0.0
  %v2917 = vand.u32 %v1247, 4294901760
  %2918 = vmatpush2.msra.mxu0 %v2917
  %2919 = vmatprep.subr.mxu0 0.0
  %v2920 = vand.u32 %v1246, 4294901760
  %2921 = vmatpush2.msra.mxu0 %v2920
  %2922 = vmatprep.subr.mxu0 0.0
  %v2923 = vand.u32 %v1245, 4294901760
  %2924 = vmatpush2.msra.mxu0 %v2923
  %2925 = vmatprep.subr.mxu0 0.0
  %v2926 = vand.u32 %v1244, 4294901760
  %2927 = vmatpush2.msra.mxu0 %v2926
  %2928 = vmatprep.subr.mxu0 0.0
  %v2929 = vand.u32 %v1243, 4294901760
  %2930 = vmatpush2.msra.mxu0 %v2929
  %2931 = vmatprep.subr.mxu0 0.0
  %v2932 = vand.u32 %v1242, 4294901760
  %2933 = vmatpush2.msra.mxu0 %v2932
  %2934 = vmatprep.subr.mxu0 0.0
  %v2935 = vand.u32 %v1241, 4294901760
  %2936 = vmatpush2.msra.mxu0 %v2935
  %2937 = vmatprep.subr.mxu0 0.0
  %v2938 = vand.u32 %v1240, 4294901760
  %2939 = vmatpush2.msra.mxu0 %v2938
  %2940 = vmatprep.subr.mxu0 0.0
  %v2941 = vand.u32 %v1239, 4294901760
  %2942 = vmatpush2.msra.mxu0 %v2941
  %2943 = vmatprep.subr.mxu0 0.0
  %v2944 = vand.u32 %v1238, 4294901760
  %2945 = vmatpush2.msra.mxu0 %v2944
  %2946 = vmatprep.subr.mxu0 0.0
  %v2947 = vand.u32 %v1237, 4294901760
  %2948 = vmatpush2.msra.mxu0 %v2947
  %2949 = vmatprep.subr.mxu0 0.0
  %v2950 = vand.u32 %v1236, 4294901760
  %2951 = vmatpush2.msra.mxu0 %v2950
  %2952 = vmatprep.subr.mxu0 0.0
  %v2953 = vand.u32 %v1235, 4294901760
  %2954 = vmatpush2.msra.mxu0 %v2953
  %2955 = vmatprep.subr.mxu0 0.0
  %v2956 = vand.u32 %v1234, 4294901760
  %2957 = vmatpush2.msra.mxu0 %v2956
  %2958 = vmatprep.subr.mxu0 0.0
  %v2959 = vand.u32 %v1233, 4294901760
  %2960 = vmatpush2.msra.mxu0 %v2959
  %2961 = vmatprep.subr.mxu0 0.0
  %v2962 = vand.u32 %v1232, 4294901760
  %2963 = vmatpush2.msra.mxu0 %v2962
  %v2964 = vand.u32 %v1183, 4294901760
  %2965 = vmatprep.mubr.f32.mxu0 %v2964
  %v2966 = vand.u32 %v1169, 4294901760
  %2967 = vmatmul.mubr.f32.gmra.mxu0 %v2966
  %v2968 = vpop.f32.mrf.mxu0
  %v2969 = vadd.f32 %v2865, %v2968
  %v2970 = vpop.f32.mrf.mxu0
  %2971 = vdwg.mxu0
  %v2972 = vld [vmem:[%s5] sm:$0xf]
  %vm2973 = vcmask 31744
  %v2975 = vsel %vm2973, %v2972, 0
  %vm2977 = vcmask 1043456
  %v2979 = vsel %vm2977, %v2969, 0
  %2981 = vmatprep.subr.mxu0 0.0
  %2982 = vmatpush1.msra.mxu0 0.0
  %2983 = vmatprep.subr.mxu0 0.0
  %2984 = vmatpush1.msra.mxu0 0.0
  %2985 = vmatprep.subr.mxu0 0.0
  %2986 = vmatpush1.msra.mxu0 0.0
  %2987 = vmatprep.subr.mxu0 0.0
  %2988 = vmatpush1.msra.mxu0 0.0
  %2989 = vmatprep.subr.mxu0 0.0
  %2990 = vmatpush1.msra.mxu0 0.0
  %2991 = vmatprep.subr.mxu0 0.0
  %2992 = vmatpush1.msra.mxu0 0.0
  %2993 = vmatprep.subr.mxu0 0.0
  %2994 = vmatpush1.msra.mxu0 0.0
  %2995 = vmatprep.subr.mxu0 0.0
  %2996 = vmatpush1.msra.mxu0 0.0
  %2997 = vmatprep.subr.mxu0 0.0
  %2998 = vmatpush1.msra.mxu0 0.0
  %2999 = vmatprep.subr.mxu0 0.0
  %3000 = vmatpush1.msra.mxu0 0.0
  %3001 = vmatprep.subr.mxu0 0.0
  %3002 = vmatpush1.msra.mxu0 0.0
  %3003 = vmatprep.subr.mxu0 0.0
  %3004 = vmatpush1.msra.mxu0 0.0
  %3005 = vmatprep.subr.mxu0 0.0
  %3006 = vmatpush1.msra.mxu0 0.0
  %3007 = vmatprep.subr.mxu0 0.0
  %3008 = vmatpush1.msra.mxu0 0.0
  %3009 = vmatprep.subr.mxu0 0.0
  %3010 = vmatpush1.msra.mxu0 0.0
  %3011 = vmatprep.subr.mxu0 0.0
  %v3012 = vand.u32 %v2979, 4294901760
  %3013 = vmatpush1.msra.mxu0 %v3012
  %3014 = vmatprep.subr.mxu0 0.0
  %3015 = vmatpush2.msra.mxu0 0.0
  %3016 = vmatprep.subr.mxu0 0.0
  %3017 = vmatpush2.msra.mxu0 0.0
  %3018 = vmatprep.subr.mxu0 0.0
  %3019 = vmatpush2.msra.mxu0 0.0
  %3020 = vmatprep.subr.mxu0 0.0
  %3021 = vmatpush2.msra.mxu0 0.0
  %3022 = vmatprep.subr.mxu0 0.0
  %3023 = vmatpush2.msra.mxu0 0.0
  %3024 = vmatprep.subr.mxu0 0.0
  %3025 = vmatpush2.msra.mxu0 0.0
  %3026 = vmatprep.subr.mxu0 0.0
  %3027 = vmatpush2.msra.mxu0 0.0
  %3028 = vmatprep.subr.mxu0 0.0
  %3029 = vmatpush2.msra.mxu0 0.0
  %3030 = vmatprep.subr.mxu0 0.0
  %3031 = vmatpush2.msra.mxu0 0.0
  %3032 = vmatprep.subr.mxu0 0.0
  %3033 = vmatpush2.msra.mxu0 0.0
  %3034 = vmatprep.subr.mxu0 0.0
  %3035 = vmatpush2.msra.mxu0 0.0
  %3036 = vmatprep.subr.mxu0 0.0
  %3037 = vmatpush2.msra.mxu0 0.0
  %3038 = vmatprep.subr.mxu0 0.0
  %3039 = vmatpush2.msra.mxu0 0.0
  %3040 = vmatprep.subr.mxu0 0.0
  %3041 = vmatpush2.msra.mxu0 0.0
  %3042 = vmatprep.subr.mxu0 0.0
  %3043 = vmatpush2.msra.mxu0 0.0
  %3044 = vmatprep.subr.mxu0 0.0
  %3045 = vmatpush2.msra.mxu0 0.0
  %3046 = vmatprep.mubr.f32.mxu0 0.0
  %v3047 = vand.u32 %v2975, 4294901760
  %v3048 = vsub.f32 %v2975, %v3047
  %v3049 = vand.u32 %v3048, 4294901760
  %v3050 = vsub.f32 %v3048, %v3049
  %v3051 = vand.u32 %v3050, 4294901760
  %3052 = vmatmul.mubr.f32.gmra.mxu0 %v3051
  %v3053 = vpop.f32.mrf.mxu0
  %v3054 = vadd.f32 0.0, %v3053
  %v3055 = vpop.f32.mrf.mxu0
  %3056 = vdwg.mxu0
  %3057 = vmatprep.subr.mxu0 0.0
  %3058 = vmatpush1.msra.mxu0 0.0
  %3059 = vmatprep.subr.mxu0 0.0
  %3060 = vmatpush1.msra.mxu0 0.0
  %3061 = vmatprep.subr.mxu0 0.0
  %3062 = vmatpush1.msra.mxu0 0.0
  %3063 = vmatprep.subr.mxu0 0.0
  %3064 = vmatpush1.msra.mxu0 0.0
  %3065 = vmatprep.subr.mxu0 0.0
  %3066 = vmatpush1.msra.mxu0 0.0
  %3067 = vmatprep.subr.mxu0 0.0
  %3068 = vmatpush1.msra.mxu0 0.0
  %3069 = vmatprep.subr.mxu0 0.0
  %3070 = vmatpush1.msra.mxu0 0.0
  %3071 = vmatprep.subr.mxu0 0.0
  %3072 = vmatpush1.msra.mxu0 0.0
  %3073 = vmatprep.subr.mxu0 0.0
  %3074 = vmatpush1.msra.mxu0 0.0
  %3075 = vmatprep.subr.mxu0 0.0
  %3076 = vmatpush1.msra.mxu0 0.0
  %3077 = vmatprep.subr.mxu0 0.0
  %3078 = vmatpush1.msra.mxu0 0.0
  %3079 = vmatprep.subr.mxu0 0.0
  %3080 = vmatpush1.msra.mxu0 0.0
  %3081 = vmatprep.subr.mxu0 0.0
  %3082 = vmatpush1.msra.mxu0 0.0
  %3083 = vmatprep.subr.mxu0 0.0
  %3084 = vmatpush1.msra.mxu0 0.0
  %3085 = vmatprep.subr.mxu0 0.0
  %3086 = vmatpush1.msra.mxu0 0.0
  %3087 = vmatprep.subr.mxu0 0.0
  %v3088 = vand.u32 %v2979, 4294901760
  %v3089 = vsub.f32 %v2979, %v3088
  %v3090 = vand.u32 %v3089, 4294901760
  %v3091 = vsub.f32 %v3089, %v3090
  %v3092 = vand.u32 %v3091, 4294901760
  %3093 = vmatpush1.msra.mxu0 %v3092
  %3094 = vmatprep.subr.mxu0 0.0
  %3095 = vmatpush2.msra.mxu0 0.0
  %3096 = vmatprep.subr.mxu0 0.0
  %3097 = vmatpush2.msra.mxu0 0.0
  %3098 = vmatprep.subr.mxu0 0.0
  %3099 = vmatpush2.msra.mxu0 0.0
  %3100 = vmatprep.subr.mxu0 0.0
  %3101 = vmatpush2.msra.mxu0 0.0
  %3102 = vmatprep.subr.mxu0 0.0
  %3103 = vmatpush2.msra.mxu0 0.0
  %3104 = vmatprep.subr.mxu0 0.0
  %3105 = vmatpush2.msra.mxu0 0.0
  %3106 = vmatprep.subr.mxu0 0.0
  %3107 = vmatpush2.msra.mxu0 0.0
  %3108 = vmatprep.subr.mxu0 0.0
  %3109 = vmatpush2.msra.mxu0 0.0
  %3110 = vmatprep.subr.mxu0 0.0
  %3111 = vmatpush2.msra.mxu0 0.0
  %3112 = vmatprep.subr.mxu0 0.0
  %3113 = vmatpush2.msra.mxu0 0.0
  %3114 = vmatprep.subr.mxu0 0.0
  %3115 = vmatpush2.msra.mxu0 0.0
  %3116 = vmatprep.subr.mxu0 0.0
  %3117 = vmatpush2.msra.mxu0 0.0
  %3118 = vmatprep.subr.mxu0 0.0
  %3119 = vmatpush2.msra.mxu0 0.0
  %3120 = vmatprep.subr.mxu0 0.0
  %3121 = vmatpush2.msra.mxu0 0.0
  %3122 = vmatprep.subr.mxu0 0.0
  %3123 = vmatpush2.msra.mxu0 0.0
  %3124 = vmatprep.subr.mxu0 0.0
  %3125 = vmatpush2.msra.mxu0 0.0
  %3126 = vmatprep.mubr.f32.mxu0 0.0
  %v3127 = vand.u32 %v2975, 4294901760
  %3128 = vmatmul.mubr.f32.gmra.mxu0 %v3127
  %v3129 = vpop.f32.mrf.mxu0
  %v3130 = vadd.f32 %v3054, %v3129
  %v3131 = vpop.f32.mrf.mxu0
  %3132 = vdwg.mxu0
  %3133 = vmatprep.subr.mxu0 0.0
  %3134 = vmatpush1.msra.mxu0 0.0
  %3135 = vmatprep.subr.mxu0 0.0
  %3136 = vmatpush1.msra.mxu0 0.0
  %3137 = vmatprep.subr.mxu0 0.0
  %3138 = vmatpush1.msra.mxu0 0.0
  %3139 = vmatprep.subr.mxu0 0.0
  %3140 = vmatpush1.msra.mxu0 0.0
  %3141 = vmatprep.subr.mxu0 0.0
  %3142 = vmatpush1.msra.mxu0 0.0
  %3143 = vmatprep.subr.mxu0 0.0
  %3144 = vmatpush1.msra.mxu0 0.0
  %3145 = vmatprep.subr.mxu0 0.0
  %3146 = vmatpush1.msra.mxu0 0.0
  %3147 = vmatprep.subr.mxu0 0.0
  %3148 = vmatpush1.msra.mxu0 0.0
  %3149 = vmatprep.subr.mxu0 0.0
  %3150 = vmatpush1.msra.mxu0 0.0
  %3151 = vmatprep.subr.mxu0 0.0
  %3152 = vmatpush1.msra.mxu0 0.0
  %3153 = vmatprep.subr.mxu0 0.0
  %3154 = vmatpush1.msra.mxu0 0.0
  %3155 = vmatprep.subr.mxu0 0.0
  %3156 = vmatpush1.msra.mxu0 0.0
  %3157 = vmatprep.subr.mxu0 0.0
  %3158 = vmatpush1.msra.mxu0 0.0
  %3159 = vmatprep.subr.mxu0 0.0
  %3160 = vmatpush1.msra.mxu0 0.0
  %3161 = vmatprep.subr.mxu0 0.0
  %3162 = vmatpush1.msra.mxu0 0.0
  %3163 = vmatprep.subr.mxu0 0.0
  %v3164 = vand.u32 %v2979, 4294901760
  %v3165 = vsub.f32 %v2979, %v3164
  %3166 = vmatpush1.msra.mxu0 %v3165
  %3167 = vmatprep.subr.mxu0 0.0
  %3168 = vmatpush2.msra.mxu0 0.0
  %3169 = vmatprep.subr.mxu0 0.0
  %3170 = vmatpush2.msra.mxu0 0.0
  %3171 = vmatprep.subr.mxu0 0.0
  %3172 = vmatpush2.msra.mxu0 0.0
  %3173 = vmatprep.subr.mxu0 0.0
  %3174 = vmatpush2.msra.mxu0 0.0
  %3175 = vmatprep.subr.mxu0 0.0
  %3176 = vmatpush2.msra.mxu0 0.0
  %3177 = vmatprep.subr.mxu0 0.0
  %3178 = vmatpush2.msra.mxu0 0.0
  %3179 = vmatprep.subr.mxu0 0.0
  %3180 = vmatpush2.msra.mxu0 0.0
  %3181 = vmatprep.subr.mxu0 0.0
  %3182 = vmatpush2.msra.mxu0 0.0
  %3183 = vmatprep.subr.mxu0 0.0
  %3184 = vmatpush2.msra.mxu0 0.0
  %3185 = vmatprep.subr.mxu0 0.0
  %3186 = vmatpush2.msra.mxu0 0.0
  %3187 = vmatprep.subr.mxu0 0.0
  %3188 = vmatpush2.msra.mxu0 0.0
  %3189 = vmatprep.subr.mxu0 0.0
  %3190 = vmatpush2.msra.mxu0 0.0
  %3191 = vmatprep.subr.mxu0 0.0
  %3192 = vmatpush2.msra.mxu0 0.0
  %3193 = vmatprep.subr.mxu0 0.0
  %3194 = vmatpush2.msra.mxu0 0.0
  %3195 = vmatprep.subr.mxu0 0.0
  %3196 = vmatpush2.msra.mxu0 0.0
  %3197 = vmatprep.subr.mxu0 0.0
  %3198 = vmatpush2.msra.mxu0 0.0
  %3199 = vmatprep.mubr.f32.mxu0 0.0
  %v3200 = vand.u32 %v2975, 4294901760
  %v3201 = vsub.f32 %v2975, %v3200
  %3202 = vmatmul.mubr.f32.gmra.mxu0 %v3201
  %v3203 = vpop.f32.mrf.mxu0
  %v3204 = vadd.f32 %v3130, %v3203
  %v3205 = vpop.f32.mrf.mxu0
  %3206 = vdwg.mxu0
  %3207 = vmatprep.subr.mxu0 0.0
  %3208 = vmatpush1.msra.mxu0 0.0
  %3209 = vmatprep.subr.mxu0 0.0
  %3210 = vmatpush1.msra.mxu0 0.0
  %3211 = vmatprep.subr.mxu0 0.0
  %3212 = vmatpush1.msra.mxu0 0.0
  %3213 = vmatprep.subr.mxu0 0.0
  %3214 = vmatpush1.msra.mxu0 0.0
  %3215 = vmatprep.subr.mxu0 0.0
  %3216 = vmatpush1.msra.mxu0 0.0
  %3217 = vmatprep.subr.mxu0 0.0
  %3218 = vmatpush1.msra.mxu0 0.0
  %3219 = vmatprep.subr.mxu0 0.0
  %3220 = vmatpush1.msra.mxu0 0.0
  %3221 = vmatprep.subr.mxu0 0.0
  %3222 = vmatpush1.msra.mxu0 0.0
  %3223 = vmatprep.subr.mxu0 0.0
  %3224 = vmatpush1.msra.mxu0 0.0
  %3225 = vmatprep.subr.mxu0 0.0
  %3226 = vmatpush1.msra.mxu0 0.0
  %3227 = vmatprep.subr.mxu0 0.0
  %3228 = vmatpush1.msra.mxu0 0.0
  %3229 = vmatprep.subr.mxu0 0.0
  %3230 = vmatpush1.msra.mxu0 0.0
  %3231 = vmatprep.subr.mxu0 0.0
  %3232 = vmatpush1.msra.mxu0 0.0
  %3233 = vmatprep.subr.mxu0 0.0
  %3234 = vmatpush1.msra.mxu0 0.0
  %3235 = vmatprep.subr.mxu0 0.0
  %3236 = vmatpush1.msra.mxu0 0.0
  %3237 = vmatprep.subr.mxu0 0.0
  %v3238 = vand.u32 %v2979, 4294901760
  %3239 = vmatpush1.msra.mxu0 %v3238
  %3240 = vmatprep.subr.mxu0 0.0
  %3241 = vmatpush2.msra.mxu0 0.0
  %3242 = vmatprep.subr.mxu0 0.0
  %3243 = vmatpush2.msra.mxu0 0.0
  %3244 = vmatprep.subr.mxu0 0.0
  %3245 = vmatpush2.msra.mxu0 0.0
  %3246 = vmatprep.subr.mxu0 0.0
  %3247 = vmatpush2.msra.mxu0 0.0
  %3248 = vmatprep.subr.mxu0 0.0
  %3249 = vmatpush2.msra.mxu0 0.0
  %3250 = vmatprep.subr.mxu0 0.0
  %3251 = vmatpush2.msra.mxu0 0.0
  %3252 = vmatprep.subr.mxu0 0.0
  %3253 = vmatpush2.msra.mxu0 0.0
  %3254 = vmatprep.subr.mxu0 0.0
  %3255 = vmatpush2.msra.mxu0 0.0
  %3256 = vmatprep.subr.mxu0 0.0
  %3257 = vmatpush2.msra.mxu0 0.0
  %3258 = vmatprep.subr.mxu0 0.0
  %3259 = vmatpush2.msra.mxu0 0.0
  %3260 = vmatprep.subr.mxu0 0.0
  %3261 = vmatpush2.msra.mxu0 0.0
  %3262 = vmatprep.subr.mxu0 0.0
  %3263 = vmatpush2.msra.mxu0 0.0
  %3264 = vmatprep.subr.mxu0 0.0
  %3265 = vmatpush2.msra.mxu0 0.0
  %3266 = vmatprep.subr.mxu0 0.0
  %3267 = vmatpush2.msra.mxu0 0.0
  %3268 = vmatprep.subr.mxu0 0.0
  %3269 = vmatpush2.msra.mxu0 0.0
  %3270 = vmatprep.subr.mxu0 0.0
  %3271 = vmatpush2.msra.mxu0 0.0
  %3272 = vmatprep.mubr.f32.mxu0 0.0
  %v3273 = vand.u32 %v2975, 4294901760
  %v3274 = vsub.f32 %v2975, %v3273
  %v3275 = vand.u32 %v3274, 4294901760
  %3276 = vmatmul.mubr.f32.gmra.mxu0 %v3275
  %v3277 = vpop.f32.mrf.mxu0
  %v3278 = vadd.f32 %v3204, %v3277
  %v3279 = vpop.f32.mrf.mxu0
  %3280 = vdwg.mxu0
  %3281 = vmatprep.subr.mxu0 0.0
  %3282 = vmatpush1.msra.mxu0 0.0
  %3283 = vmatprep.subr.mxu0 0.0
  %3284 = vmatpush1.msra.mxu0 0.0
  %3285 = vmatprep.subr.mxu0 0.0
  %3286 = vmatpush1.msra.mxu0 0.0
  %3287 = vmatprep.subr.mxu0 0.0
  %3288 = vmatpush1.msra.mxu0 0.0
  %3289 = vmatprep.subr.mxu0 0.0
  %3290 = vmatpush1.msra.mxu0 0.0
  %3291 = vmatprep.subr.mxu0 0.0
  %3292 = vmatpush1.msra.mxu0 0.0
  %3293 = vmatprep.subr.mxu0 0.0
  %3294 = vmatpush1.msra.mxu0 0.0
  %3295 = vmatprep.subr.mxu0 0.0
  %3296 = vmatpush1.msra.mxu0 0.0
  %3297 = vmatprep.subr.mxu0 0.0
  %3298 = vmatpush1.msra.mxu0 0.0
  %3299 = vmatprep.subr.mxu0 0.0
  %3300 = vmatpush1.msra.mxu0 0.0
  %3301 = vmatprep.subr.mxu0 0.0
  %3302 = vmatpush1.msra.mxu0 0.0
  %3303 = vmatprep.subr.mxu0 0.0
  %3304 = vmatpush1.msra.mxu0 0.0
  %3305 = vmatprep.subr.mxu0 0.0
  %3306 = vmatpush1.msra.mxu0 0.0
  %3307 = vmatprep.subr.mxu0 0.0
  %3308 = vmatpush1.msra.mxu0 0.0
  %3309 = vmatprep.subr.mxu0 0.0
  %3310 = vmatpush1.msra.mxu0 0.0
  %3311 = vmatprep.subr.mxu0 0.0
  %v3312 = vand.u32 %v2979, 4294901760
  %v3313 = vsub.f32 %v2979, %v3312
  %v3314 = vand.u32 %v3313, 4294901760
  %3315 = vmatpush1.msra.mxu0 %v3314
  %3316 = vmatprep.subr.mxu0 0.0
  %3317 = vmatpush2.msra.mxu0 0.0
  %3318 = vmatprep.subr.mxu0 0.0
  %3319 = vmatpush2.msra.mxu0 0.0
  %3320 = vmatprep.subr.mxu0 0.0
  %3321 = vmatpush2.msra.mxu0 0.0
  %3322 = vmatprep.subr.mxu0 0.0
  %3323 = vmatpush2.msra.mxu0 0.0
  %3324 = vmatprep.subr.mxu0 0.0
  %3325 = vmatpush2.msra.mxu0 0.0
  %3326 = vmatprep.subr.mxu0 0.0
  %3327 = vmatpush2.msra.mxu0 0.0
  %3328 = vmatprep.subr.mxu0 0.0
  %3329 = vmatpush2.msra.mxu0 0.0
  %3330 = vmatprep.subr.mxu0 0.0
  %3331 = vmatpush2.msra.mxu0 0.0
  %3332 = vmatprep.subr.mxu0 0.0
  %3333 = vmatpush2.msra.mxu0 0.0
  %3334 = vmatprep.subr.mxu0 0.0
  %3335 = vmatpush2.msra.mxu0 0.0
  %3336 = vmatprep.subr.mxu0 0.0
  %3337 = vmatpush2.msra.mxu0 0.0
  %3338 = vmatprep.subr.mxu0 0.0
  %3339 = vmatpush2.msra.mxu0 0.0
  %3340 = vmatprep.subr.mxu0 0.0
  %3341 = vmatpush2.msra.mxu0 0.0
  %3342 = vmatprep.subr.mxu0 0.0
  %3343 = vmatpush2.msra.mxu0 0.0
  %3344 = vmatprep.subr.mxu0 0.0
  %3345 = vmatpush2.msra.mxu0 0.0
  %3346 = vmatprep.subr.mxu0 0.0
  %3347 = vmatpush2.msra.mxu0 0.0
  %3348 = vmatprep.mubr.f32.mxu0 0.0
  %v3349 = vand.u32 %v2975, 4294901760
  %3350 = vmatmul.mubr.f32.gmra.mxu0 %v3349
  %v3351 = vpop.f32.mrf.mxu0
  %v3352 = vadd.f32 %v3278, %v3351
  %v3353 = vpop.f32.mrf.mxu0
  %3354 = vdwg.mxu0
  %3355 = vmatprep.subr.mxu0 0.0
  %3356 = vmatpush1.msra.mxu0 0.0
  %3357 = vmatprep.subr.mxu0 0.0
  %3358 = vmatpush1.msra.mxu0 0.0
  %3359 = vmatprep.subr.mxu0 0.0
  %3360 = vmatpush1.msra.mxu0 0.0
  %3361 = vmatprep.subr.mxu0 0.0
  %3362 = vmatpush1.msra.mxu0 0.0
  %3363 = vmatprep.subr.mxu0 0.0
  %3364 = vmatpush1.msra.mxu0 0.0
  %3365 = vmatprep.subr.mxu0 0.0
  %3366 = vmatpush1.msra.mxu0 0.0
  %3367 = vmatprep.subr.mxu0 0.0
  %3368 = vmatpush1.msra.mxu0 0.0
  %3369 = vmatprep.subr.mxu0 0.0
  %3370 = vmatpush1.msra.mxu0 0.0
  %3371 = vmatprep.subr.mxu0 0.0
  %3372 = vmatpush1.msra.mxu0 0.0
  %3373 = vmatprep.subr.mxu0 0.0
  %3374 = vmatpush1.msra.mxu0 0.0
  %3375 = vmatprep.subr.mxu0 0.0
  %3376 = vmatpush1.msra.mxu0 0.0
  %3377 = vmatprep.subr.mxu0 0.0
  %3378 = vmatpush1.msra.mxu0 0.0
  %3379 = vmatprep.subr.mxu0 0.0
  %3380 = vmatpush1.msra.mxu0 0.0
  %3381 = vmatprep.subr.mxu0 0.0
  %3382 = vmatpush1.msra.mxu0 0.0
  %3383 = vmatprep.subr.mxu0 0.0
  %3384 = vmatpush1.msra.mxu0 0.0
  %3385 = vmatprep.subr.mxu0 0.0
  %v3386 = vand.u32 %v2979, 4294901760
  %3387 = vmatpush1.msra.mxu0 %v3386
  %3388 = vmatprep.subr.mxu0 0.0
  %3389 = vmatpush2.msra.mxu0 0.0
  %3390 = vmatprep.subr.mxu0 0.0
  %3391 = vmatpush2.msra.mxu0 0.0
  %3392 = vmatprep.subr.mxu0 0.0
  %3393 = vmatpush2.msra.mxu0 0.0
  %3394 = vmatprep.subr.mxu0 0.0
  %3395 = vmatpush2.msra.mxu0 0.0
  %3396 = vmatprep.subr.mxu0 0.0
  %3397 = vmatpush2.msra.mxu0 0.0
  %3398 = vmatprep.subr.mxu0 0.0
  %3399 = vmatpush2.msra.mxu0 0.0
  %3400 = vmatprep.subr.mxu0 0.0
  %3401 = vmatpush2.msra.mxu0 0.0
  %3402 = vmatprep.subr.mxu0 0.0
  %3403 = vmatpush2.msra.mxu0 0.0
  %3404 = vmatprep.subr.mxu0 0.0
  %3405 = vmatpush2.msra.mxu0 0.0
  %3406 = vmatprep.subr.mxu0 0.0
  %3407 = vmatpush2.msra.mxu0 0.0
  %3408 = vmatprep.subr.mxu0 0.0
  %3409 = vmatpush2.msra.mxu0 0.0
  %3410 = vmatprep.subr.mxu0 0.0
  %3411 = vmatpush2.msra.mxu0 0.0
  %3412 = vmatprep.subr.mxu0 0.0
  %3413 = vmatpush2.msra.mxu0 0.0
  %3414 = vmatprep.subr.mxu0 0.0
  %3415 = vmatpush2.msra.mxu0 0.0
  %3416 = vmatprep.subr.mxu0 0.0
  %3417 = vmatpush2.msra.mxu0 0.0
  %3418 = vmatprep.subr.mxu0 0.0
  %3419 = vmatpush2.msra.mxu0 0.0
  %3420 = vmatprep.mubr.f32.mxu0 0.0
  %v3421 = vand.u32 %v2975, 4294901760
  %3422 = vmatmul.mubr.f32.gmra.mxu0 %v3421
  %v3423 = vpop.f32.mrf.mxu0
  %v3424 = vadd.f32 %v3352, %v3423
  %v3425 = vpop.f32.mrf.mxu0
  %3426 = vdwg.mxu0
  %vm3427 = vcmask 289792
  %v3428 = vsel %vm3427, %v3424, -inf
  %3429 = vmax.xlane.f32.xlu0 %v3428
  %v3430 = vpop.xlane.xlu0 %3429
  %v3431 = vrot.slane %v3430, 4
  %v3432 = vmax.f32 %v3430, %v3431
  %v3433 = vrot.slane %v3432, 2
  %v3434 = vmax.f32 %v3432, %v3433
  %v3435 = vrot.slane %v3434, 1
  %v3436 = vmax.f32 %v3434, %v3435
  %s3437 = vtos %v3436
  %v3438 = vstv %s3437
  %v3439 = vsub.f32 %v3424, %v3438
  %v3440 = vmul.f32 %v3439, 1.442695
  %v3441 = vpow.pop %v3440
  %v3442 = vsel %vm3427, %v3441, 0.0
  %3443 = vadd.xlane.f32.xlu0 %v3442
  %v3444 = vpop.xlane.xlu0 %3443
  %v3445 = vrot.slane %v3444, 4
  %v3446 = vadd.f32 %v3444, %v3445
  %v3447 = vrot.slane %v3446, 2
  %v3448 = vadd.f32 %v3446, %v3447
  %v3449 = vrot.slane %v3448, 1
  %v3450 = vadd.f32 %v3448, %v3449
  %s3451 = vtos %v3450
  %v3452 = vstv %s3451
  %v3453 = vrcp.pop %v3452
  %v3454 = vmul.f32 %v3441, %v3453
  %v3455 = vrot.slane %v29, 4
  %3456 = vrot.lane.b32.xlu0 %v3455, 64
  %v3457 = vpop.permute.xlu0 %3456
  %v3459 = vsel %vm39, %v29, %v3457
  %v3460 = vld [vmem:[%s7] sm:$0xff]
  %v3461 = vld [vmem:[%s7 + $0x8] sm:$0xff]
  %v3462 = vld [vmem:[%s7 + $0x10] sm:$0xff]
  %v3463 = vld [vmem:[%s7 + $0x18] sm:$0xff]
  %v3464 = vld [vmem:[%s7 + $0x20] sm:$0xf]
  %v3465 = vld [vmem:[%s6] sm:$0xf]
  %3466 = vrot.lane.b32.xlu0 %v3459, 9
  %v3467 = vpop.permute.xlu0 %3466
  %3468 = vrot.lane.b32.xlu0 %v3459, 8
  %v3469 = vpop.permute.xlu0 %3468
  %3470 = vrot.lane.b32.xlu0 %v3459, 7
  %v3471 = vpop.permute.xlu0 %3470
  %3472 = vrot.lane.b32.xlu0 %v3459, 1
  %v3473 = vpop.permute.xlu0 %3472
  %3474 = vrot.lane.b32.xlu0 %v3459, 127
  %v3475 = vpop.permute.xlu0 %3474
  %3476 = vrot.lane.b32.xlu0 %v3459, 121
  %v3477 = vpop.permute.xlu0 %3476
  %3478 = vrot.lane.b32.xlu0 %v3459, 120
  %v3479 = vpop.permute.xlu0 %3478
  %3480 = vrot.lane.b32.xlu0 %v3459, 119
  %v3481 = vpop.permute.xlu0 %3480
  %v3483 = vrot.slane %v3469, 4
  %v3486 = vrot.slane %v3473, 4
  %v3489 = vrot.slane %v3475, 4
  %v3492 = vrot.slane %v3479, 4
  %v3494 = vsel %vm2977, %v3467, %v3483
  %v3495 = vsel %vm2977, %v3471, %v3486
  %v3496 = vsel %vm2977, %v3459, %v3489
  %v3497 = vsel %vm2977, %v3477, %v3492
  %v3498 = vmul.f32 %v3494, %v3460
  %v3499 = vmul.f32 %v3495, %v3461
  %v3500 = vmul.f32 %v3496, %v3462
  %v3501 = vmul.f32 %v3497, %v3463
  %v3502 = vmul.f32 %v3481, %v3464
  %vm3503 = vcmask 293888
  %v3505 = vsel %vm3503, %v3465, 0
  %v3508 = vsel %vm2977, %v3502, 0
  %3510 = vmatprep.subr.mxu0 0.0
  %3511 = vmatpush1.msra.mxu0 0.0
  %3512 = vmatprep.subr.mxu0 0.0
  %3513 = vmatpush1.msra.mxu0 0.0
  %3514 = vmatprep.subr.mxu0 0.0
  %3515 = vmatpush1.msra.mxu0 0.0
  %3516 = vmatprep.subr.mxu0 0.0
  %3517 = vmatpush1.msra.mxu0 0.0
  %3518 = vmatprep.subr.mxu0 0.0
  %3519 = vmatpush1.msra.mxu0 0.0
  %3520 = vmatprep.subr.mxu0 0.0
  %3521 = vmatpush1.msra.mxu0 0.0
  %3522 = vmatprep.subr.mxu0 0.0
  %3523 = vmatpush1.msra.mxu0 0.0
  %3524 = vmatprep.subr.mxu0 0.0
  %3525 = vmatpush1.msra.mxu0 0.0
  %3526 = vmatprep.subr.mxu0 0.0
  %3527 = vmatpush1.msra.mxu0 0.0
  %3528 = vmatprep.subr.mxu0 0.0
  %3529 = vmatpush1.msra.mxu0 0.0
  %3530 = vmatprep.subr.mxu0 0.0
  %3531 = vmatpush1.msra.mxu0 0.0
  %3532 = vmatprep.subr.mxu0 0.0
  %v3533 = vand.u32 %v3508, 4294901760
  %3534 = vmatpush1.msra.mxu0 %v3533
  %3535 = vmatprep.subr.mxu0 0.0
  %v3536 = vand.u32 %v3501, 4294901760
  %3537 = vmatpush1.msra.mxu0 %v3536
  %3538 = vmatprep.subr.mxu0 0.0
  %v3539 = vand.u32 %v3500, 4294901760
  %3540 = vmatpush1.msra.mxu0 %v3539
  %3541 = vmatprep.subr.mxu0 0.0
  %v3542 = vand.u32 %v3499, 4294901760
  %3543 = vmatpush1.msra.mxu0 %v3542
  %3544 = vmatprep.subr.mxu0 0.0
  %v3545 = vand.u32 %v3498, 4294901760
  %3546 = vmatpush1.msra.mxu0 %v3545
  %3547 = vmatprep.subr.mxu0 0.0
  %3548 = vmatpush2.msra.mxu0 0.0
  %3549 = vmatprep.subr.mxu0 0.0
  %3550 = vmatpush2.msra.mxu0 0.0
  %3551 = vmatprep.subr.mxu0 0.0
  %3552 = vmatpush2.msra.mxu0 0.0
  %3553 = vmatprep.subr.mxu0 0.0
  %3554 = vmatpush2.msra.mxu0 0.0
  %3555 = vmatprep.subr.mxu0 0.0
  %3556 = vmatpush2.msra.mxu0 0.0
  %3557 = vmatprep.subr.mxu0 0.0
  %3558 = vmatpush2.msra.mxu0 0.0
  %3559 = vmatprep.subr.mxu0 0.0
  %3560 = vmatpush2.msra.mxu0 0.0
  %3561 = vmatprep.subr.mxu0 0.0
  %3562 = vmatpush2.msra.mxu0 0.0
  %3563 = vmatprep.subr.mxu0 0.0
  %3564 = vmatpush2.msra.mxu0 0.0
  %3565 = vmatprep.subr.mxu0 0.0
  %3566 = vmatpush2.msra.mxu0 0.0
  %3567 = vmatprep.subr.mxu0 0.0
  %3568 = vmatpush2.msra.mxu0 0.0
  %3569 = vmatprep.subr.mxu0 0.0
  %3570 = vmatpush2.msra.mxu0 0.0
  %3571 = vmatprep.subr.mxu0 0.0
  %3572 = vmatpush2.msra.mxu0 0.0
  %3573 = vmatprep.subr.mxu0 0.0
  %3574 = vmatpush2.msra.mxu0 0.0
  %3575 = vmatprep.subr.mxu0 0.0
  %3576 = vmatpush2.msra.mxu0 0.0
  %3577 = vmatprep.subr.mxu0 0.0
  %3578 = vmatpush2.msra.mxu0 0.0
  %3579 = vmatprep.mubr.f32.mxu0 0.0
  %v3580 = vand.u32 %v3505, 4294901760
  %v3581 = vsub.f32 %v3505, %v3580
  %v3582 = vand.u32 %v3581, 4294901760
  %v3583 = vsub.f32 %v3581, %v3582
  %v3584 = vand.u32 %v3583, 4294901760
  %3585 = vmatmul.mubr.f32.gmra.mxu0 %v3584
  %v3586 = vpop.f32.mrf.mxu0
  %v3587 = vadd.f32 0.0, %v3586
  %v3588 = vpop.f32.mrf.mxu0
  %3589 = vdwg.mxu0
  %3590 = vmatprep.subr.mxu0 0.0
  %3591 = vmatpush1.msra.mxu0 0.0
  %3592 = vmatprep.subr.mxu0 0.0
  %3593 = vmatpush1.msra.mxu0 0.0
  %3594 = vmatprep.subr.mxu0 0.0
  %3595 = vmatpush1.msra.mxu0 0.0
  %3596 = vmatprep.subr.mxu0 0.0
  %3597 = vmatpush1.msra.mxu0 0.0
  %3598 = vmatprep.subr.mxu0 0.0
  %3599 = vmatpush1.msra.mxu0 0.0
  %3600 = vmatprep.subr.mxu0 0.0
  %3601 = vmatpush1.msra.mxu0 0.0
  %3602 = vmatprep.subr.mxu0 0.0
  %3603 = vmatpush1.msra.mxu0 0.0
  %3604 = vmatprep.subr.mxu0 0.0
  %3605 = vmatpush1.msra.mxu0 0.0
  %3606 = vmatprep.subr.mxu0 0.0
  %3607 = vmatpush1.msra.mxu0 0.0
  %3608 = vmatprep.subr.mxu0 0.0
  %3609 = vmatpush1.msra.mxu0 0.0
  %3610 = vmatprep.subr.mxu0 0.0
  %3611 = vmatpush1.msra.mxu0 0.0
  %3612 = vmatprep.subr.mxu0 0.0
  %v3613 = vand.u32 %v3508, 4294901760
  %v3614 = vsub.f32 %v3508, %v3613
  %v3615 = vand.u32 %v3614, 4294901760
  %v3616 = vsub.f32 %v3614, %v3615
  %v3617 = vand.u32 %v3616, 4294901760
  %3618 = vmatpush1.msra.mxu0 %v3617
  %3619 = vmatprep.subr.mxu0 0.0
  %v3620 = vand.u32 %v3501, 4294901760
  %v3621 = vsub.f32 %v3501, %v3620
  %v3622 = vand.u32 %v3621, 4294901760
  %v3623 = vsub.f32 %v3621, %v3622
  %v3624 = vand.u32 %v3623, 4294901760
  %3625 = vmatpush1.msra.mxu0 %v3624
  %3626 = vmatprep.subr.mxu0 0.0
  %v3627 = vand.u32 %v3500, 4294901760
  %v3628 = vsub.f32 %v3500, %v3627
  %v3629 = vand.u32 %v3628, 4294901760
  %v3630 = vsub.f32 %v3628, %v3629
  %v3631 = vand.u32 %v3630, 4294901760
  %3632 = vmatpush1.msra.mxu0 %v3631
  %3633 = vmatprep.subr.mxu0 0.0
  %v3634 = vand.u32 %v3499, 4294901760
  %v3635 = vsub.f32 %v3499, %v3634
  %v3636 = vand.u32 %v3635, 4294901760
  %v3637 = vsub.f32 %v3635, %v3636
  %v3638 = vand.u32 %v3637, 4294901760
  %3639 = vmatpush1.msra.mxu0 %v3638
  %3640 = vmatprep.subr.mxu0 0.0
  %v3641 = vand.u32 %v3498, 4294901760
  %v3642 = vsub.f32 %v3498, %v3641
  %v3643 = vand.u32 %v3642, 4294901760
  %v3644 = vsub.f32 %v3642, %v3643
  %v3645 = vand.u32 %v3644, 4294901760
  %3646 = vmatpush1.msra.mxu0 %v3645
  %3647 = vmatprep.subr.mxu0 0.0
  %3648 = vmatpush2.msra.mxu0 0.0
  %3649 = vmatprep.subr.mxu0 0.0
  %3650 = vmatpush2.msra.mxu0 0.0
  %3651 = vmatprep.subr.mxu0 0.0
  %3652 = vmatpush2.msra.mxu0 0.0
  %3653 = vmatprep.subr.mxu0 0.0
  %3654 = vmatpush2.msra.mxu0 0.0
  %3655 = vmatprep.subr.mxu0 0.0
  %3656 = vmatpush2.msra.mxu0 0.0
  %3657 = vmatprep.subr.mxu0 0.0
  %3658 = vmatpush2.msra.mxu0 0.0
  %3659 = vmatprep.subr.mxu0 0.0
  %3660 = vmatpush2.msra.mxu0 0.0
  %3661 = vmatprep.subr.mxu0 0.0
  %3662 = vmatpush2.msra.mxu0 0.0
  %3663 = vmatprep.subr.mxu0 0.0
  %3664 = vmatpush2.msra.mxu0 0.0
  %3665 = vmatprep.subr.mxu0 0.0
  %3666 = vmatpush2.msra.mxu0 0.0
  %3667 = vmatprep.subr.mxu0 0.0
  %3668 = vmatpush2.msra.mxu0 0.0
  %3669 = vmatprep.subr.mxu0 0.0
  %3670 = vmatpush2.msra.mxu0 0.0
  %3671 = vmatprep.subr.mxu0 0.0
  %3672 = vmatpush2.msra.mxu0 0.0
  %3673 = vmatprep.subr.mxu0 0.0
  %3674 = vmatpush2.msra.mxu0 0.0
  %3675 = vmatprep.subr.mxu0 0.0
  %3676 = vmatpush2.msra.mxu0 0.0
  %3677 = vmatprep.subr.mxu0 0.0
  %3678 = vmatpush2.msra.mxu0 0.0
  %3679 = vmatprep.mubr.f32.mxu0 0.0
  %v3680 = vand.u32 %v3505, 4294901760
  %3681 = vmatmul.mubr.f32.gmra.mxu0 %v3680
  %v3682 = vpop.f32.mrf.mxu0
  %v3683 = vadd.f32 %v3587, %v3682
  %v3684 = vpop.f32.mrf.mxu0
  %3685 = vdwg.mxu0
  %3686 = vmatprep.subr.mxu0 0.0
  %3687 = vmatpush1.msra.mxu0 0.0
  %3688 = vmatprep.subr.mxu0 0.0
  %3689 = vmatpush1.msra.mxu0 0.0
  %3690 = vmatprep.subr.mxu0 0.0
  %3691 = vmatpush1.msra.mxu0 0.0
  %3692 = vmatprep.subr.mxu0 0.0
  %3693 = vmatpush1.msra.mxu0 0.0
  %3694 = vmatprep.subr.mxu0 0.0
  %3695 = vmatpush1.msra.mxu0 0.0
  %3696 = vmatprep.subr.mxu0 0.0
  %3697 = vmatpush1.msra.mxu0 0.0
  %3698 = vmatprep.subr.mxu0 0.0
  %3699 = vmatpush1.msra.mxu0 0.0
  %3700 = vmatprep.subr.mxu0 0.0
  %3701 = vmatpush1.msra.mxu0 0.0
  %3702 = vmatprep.subr.mxu0 0.0
  %3703 = vmatpush1.msra.mxu0 0.0
  %3704 = vmatprep.subr.mxu0 0.0
  %3705 = vmatpush1.msra.mxu0 0.0
  %3706 = vmatprep.subr.mxu0 0.0
  %3707 = vmatpush1.msra.mxu0 0.0
  %3708 = vmatprep.subr.mxu0 0.0
  %v3709 = vand.u32 %v3508, 4294901760
  %v3710 = vsub.f32 %v3508, %v3709
  %3711 = vmatpush1.msra.mxu0 %v3710
  %3712 = vmatprep.subr.mxu0 0.0
  %v3713 = vand.u32 %v3501, 4294901760
  %v3714 = vsub.f32 %v3501, %v3713
  %3715 = vmatpush1.msra.mxu0 %v3714
  %3716 = vmatprep.subr.mxu0 0.0
  %v3717 = vand.u32 %v3500, 4294901760
  %v3718 = vsub.f32 %v3500, %v3717
  %3719 = vmatpush1.msra.mxu0 %v3718
  %3720 = vmatprep.subr.mxu0 0.0
  %v3721 = vand.u32 %v3499, 4294901760
  %v3722 = vsub.f32 %v3499, %v3721
  %3723 = vmatpush1.msra.mxu0 %v3722
  %3724 = vmatprep.subr.mxu0 0.0
  %v3725 = vand.u32 %v3498, 4294901760
  %v3726 = vsub.f32 %v3498, %v3725
  %3727 = vmatpush1.msra.mxu0 %v3726
  %3728 = vmatprep.subr.mxu0 0.0
  %3729 = vmatpush2.msra.mxu0 0.0
  %3730 = vmatprep.subr.mxu0 0.0
  %3731 = vmatpush2.msra.mxu0 0.0
  %3732 = vmatprep.subr.mxu0 0.0
  %3733 = vmatpush2.msra.mxu0 0.0
  %3734 = vmatprep.subr.mxu0 0.0
  %3735 = vmatpush2.msra.mxu0 0.0
  %3736 = vmatprep.subr.mxu0 0.0
  %3737 = vmatpush2.msra.mxu0 0.0
  %3738 = vmatprep.subr.mxu0 0.0
  %3739 = vmatpush2.msra.mxu0 0.0
  %3740 = vmatprep.subr.mxu0 0.0
  %3741 = vmatpush2.msra.mxu0 0.0
  %3742 = vmatprep.subr.mxu0 0.0
  %3743 = vmatpush2.msra.mxu0 0.0
  %3744 = vmatprep.subr.mxu0 0.0
  %3745 = vmatpush2.msra.mxu0 0.0
  %3746 = vmatprep.subr.mxu0 0.0
  %3747 = vmatpush2.msra.mxu0 0.0
  %3748 = vmatprep.subr.mxu0 0.0
  %3749 = vmatpush2.msra.mxu0 0.0
  %3750 = vmatprep.subr.mxu0 0.0
  %3751 = vmatpush2.msra.mxu0 0.0
  %3752 = vmatprep.subr.mxu0 0.0
  %3753 = vmatpush2.msra.mxu0 0.0
  %3754 = vmatprep.subr.mxu0 0.0
  %3755 = vmatpush2.msra.mxu0 0.0
  %3756 = vmatprep.subr.mxu0 0.0
  %3757 = vmatpush2.msra.mxu0 0.0
  %3758 = vmatprep.subr.mxu0 0.0
  %3759 = vmatpush2.msra.mxu0 0.0
  %3760 = vmatprep.mubr.f32.mxu0 0.0
  %v3761 = vand.u32 %v3505, 4294901760
  %v3762 = vsub.f32 %v3505, %v3761
  %3763 = vmatmul.mubr.f32.gmra.mxu0 %v3762
  %v3764 = vpop.f32.mrf.mxu0
  %v3765 = vadd.f32 %v3683, %v3764
  %v3766 = vpop.f32.mrf.mxu0
  %3767 = vdwg.mxu0
  %3768 = vmatprep.subr.mxu0 0.0
  %3769 = vmatpush1.msra.mxu0 0.0
  %3770 = vmatprep.subr.mxu0 0.0
  %3771 = vmatpush1.msra.mxu0 0.0
  %3772 = vmatprep.subr.mxu0 0.0
  %3773 = vmatpush1.msra.mxu0 0.0
  %3774 = vmatprep.subr.mxu0 0.0
  %3775 = vmatpush1.msra.mxu0 0.0
  %3776 = vmatprep.subr.mxu0 0.0
  %3777 = vmatpush1.msra.mxu0 0.0
  %3778 = vmatprep.subr.mxu0 0.0
  %3779 = vmatpush1.msra.mxu0 0.0
  %3780 = vmatprep.subr.mxu0 0.0
  %3781 = vmatpush1.msra.mxu0 0.0
  %3782 = vmatprep.subr.mxu0 0.0
  %3783 = vmatpush1.msra.mxu0 0.0
  %3784 = vmatprep.subr.mxu0 0.0
  %3785 = vmatpush1.msra.mxu0 0.0
  %3786 = vmatprep.subr.mxu0 0.0
  %3787 = vmatpush1.msra.mxu0 0.0
  %3788 = vmatprep.subr.mxu0 0.0
  %3789 = vmatpush1.msra.mxu0 0.0
  %3790 = vmatprep.subr.mxu0 0.0
  %v3791 = vand.u32 %v3508, 4294901760
  %3792 = vmatpush1.msra.mxu0 %v3791
  %3793 = vmatprep.subr.mxu0 0.0
  %v3794 = vand.u32 %v3501, 4294901760
  %3795 = vmatpush1.msra.mxu0 %v3794
  %3796 = vmatprep.subr.mxu0 0.0
  %v3797 = vand.u32 %v3500, 4294901760
  %3798 = vmatpush1.msra.mxu0 %v3797
  %3799 = vmatprep.subr.mxu0 0.0
  %v3800 = vand.u32 %v3499, 4294901760
  %3801 = vmatpush1.msra.mxu0 %v3800
  %3802 = vmatprep.subr.mxu0 0.0
  %v3803 = vand.u32 %v3498, 4294901760
  %3804 = vmatpush1.msra.mxu0 %v3803
  %3805 = vmatprep.subr.mxu0 0.0
  %3806 = vmatpush2.msra.mxu0 0.0
  %3807 = vmatprep.subr.mxu0 0.0
  %3808 = vmatpush2.msra.mxu0 0.0
  %3809 = vmatprep.subr.mxu0 0.0
  %3810 = vmatpush2.msra.mxu0 0.0
  %3811 = vmatprep.subr.mxu0 0.0
  %3812 = vmatpush2.msra.mxu0 0.0
  %3813 = vmatprep.subr.mxu0 0.0
  %3814 = vmatpush2.msra.mxu0 0.0
  %3815 = vmatprep.subr.mxu0 0.0
  %3816 = vmatpush2.msra.mxu0 0.0
  %3817 = vmatprep.subr.mxu0 0.0
  %3818 = vmatpush2.msra.mxu0 0.0
  %3819 = vmatprep.subr.mxu0 0.0
  %3820 = vmatpush2.msra.mxu0 0.0
  %3821 = vmatprep.subr.mxu0 0.0
  %3822 = vmatpush2.msra.mxu0 0.0
  %3823 = vmatprep.subr.mxu0 0.0
  %3824 = vmatpush2.msra.mxu0 0.0
  %3825 = vmatprep.subr.mxu0 0.0
  %3826 = vmatpush2.msra.mxu0 0.0
  %3827 = vmatprep.subr.mxu0 0.0
  %3828 = vmatpush2.msra.mxu0 0.0
  %3829 = vmatprep.subr.mxu0 0.0
  %3830 = vmatpush2.msra.mxu0 0.0
  %3831 = vmatprep.subr.mxu0 0.0
  %3832 = vmatpush2.msra.mxu0 0.0
  %3833 = vmatprep.subr.mxu0 0.0
  %3834 = vmatpush2.msra.mxu0 0.0
  %3835 = vmatprep.subr.mxu0 0.0
  %3836 = vmatpush2.msra.mxu0 0.0
  %3837 = vmatprep.mubr.f32.mxu0 0.0
  %v3838 = vand.u32 %v3505, 4294901760
  %v3839 = vsub.f32 %v3505, %v3838
  %v3840 = vand.u32 %v3839, 4294901760
  %3841 = vmatmul.mubr.f32.gmra.mxu0 %v3840
  %v3842 = vpop.f32.mrf.mxu0
  %v3843 = vadd.f32 %v3765, %v3842
  %v3844 = vpop.f32.mrf.mxu0
  %3845 = vdwg.mxu0
  %3846 = vmatprep.subr.mxu0 0.0
  %3847 = vmatpush1.msra.mxu0 0.0
  %3848 = vmatprep.subr.mxu0 0.0
  %3849 = vmatpush1.msra.mxu0 0.0
  %3850 = vmatprep.subr.mxu0 0.0
  %3851 = vmatpush1.msra.mxu0 0.0
  %3852 = vmatprep.subr.mxu0 0.0
  %3853 = vmatpush1.msra.mxu0 0.0
  %3854 = vmatprep.subr.mxu0 0.0
  %3855 = vmatpush1.msra.mxu0 0.0
  %3856 = vmatprep.subr.mxu0 0.0
  %3857 = vmatpush1.msra.mxu0 0.0
  %3858 = vmatprep.subr.mxu0 0.0
  %3859 = vmatpush1.msra.mxu0 0.0
  %3860 = vmatprep.subr.mxu0 0.0
  %3861 = vmatpush1.msra.mxu0 0.0
  %3862 = vmatprep.subr.mxu0 0.0
  %3863 = vmatpush1.msra.mxu0 0.0
  %3864 = vmatprep.subr.mxu0 0.0
  %3865 = vmatpush1.msra.mxu0 0.0
  %3866 = vmatprep.subr.mxu0 0.0
  %3867 = vmatpush1.msra.mxu0 0.0
  %3868 = vmatprep.subr.mxu0 0.0
  %v3869 = vand.u32 %v3508, 4294901760
  %v3870 = vsub.f32 %v3508, %v3869
  %v3871 = vand.u32 %v3870, 4294901760
  %3872 = vmatpush1.msra.mxu0 %v3871
  %3873 = vmatprep.subr.mxu0 0.0
  %v3874 = vand.u32 %v3501, 4294901760
  %v3875 = vsub.f32 %v3501, %v3874
  %v3876 = vand.u32 %v3875, 4294901760
  %3877 = vmatpush1.msra.mxu0 %v3876
  %3878 = vmatprep.subr.mxu0 0.0
  %v3879 = vand.u32 %v3500, 4294901760
  %v3880 = vsub.f32 %v3500, %v3879
  %v3881 = vand.u32 %v3880, 4294901760
  %3882 = vmatpush1.msra.mxu0 %v3881
  %3883 = vmatprep.subr.mxu0 0.0
  %v3884 = vand.u32 %v3499, 4294901760
  %v3885 = vsub.f32 %v3499, %v3884
  %v3886 = vand.u32 %v3885, 4294901760
  %3887 = vmatpush1.msra.mxu0 %v3886
  %3888 = vmatprep.subr.mxu0 0.0
  %v3889 = vand.u32 %v3498, 4294901760
  %v3890 = vsub.f32 %v3498, %v3889
  %v3891 = vand.u32 %v3890, 4294901760
  %3892 = vmatpush1.msra.mxu0 %v3891
  %3893 = vmatprep.subr.mxu0 0.0
  %3894 = vmatpush2.msra.mxu0 0.0
  %3895 = vmatprep.subr.mxu0 0.0
  %3896 = vmatpush2.msra.mxu0 0.0
  %3897 = vmatprep.subr.mxu0 0.0
  %3898 = vmatpush2.msra.mxu0 0.0
  %3899 = vmatprep.subr.mxu0 0.0
  %3900 = vmatpush2.msra.mxu0 0.0
  %3901 = vmatprep.subr.mxu0 0.0
  %3902 = vmatpush2.msra.mxu0 0.0
  %3903 = vmatprep.subr.mxu0 0.0
  %3904 = vmatpush2.msra.mxu0 0.0
  %3905 = vmatprep.subr.mxu0 0.0
  %3906 = vmatpush2.msra.mxu0 0.0
  %3907 = vmatprep.subr.mxu0 0.0
  %3908 = vmatpush2.msra.mxu0 0.0
  %3909 = vmatprep.subr.mxu0 0.0
  %3910 = vmatpush2.msra.mxu0 0.0
  %3911 = vmatprep.subr.mxu0 0.0
  %3912 = vmatpush2.msra.mxu0 0.0
  %3913 = vmatprep.subr.mxu0 0.0
  %3914 = vmatpush2.msra.mxu0 0.0
  %3915 = vmatprep.subr.mxu0 0.0
  %3916 = vmatpush2.msra.mxu0 0.0
  %3917 = vmatprep.subr.mxu0 0.0
  %3918 = vmatpush2.msra.mxu0 0.0
  %3919 = vmatprep.subr.mxu0 0.0
  %3920 = vmatpush2.msra.mxu0 0.0
  %3921 = vmatprep.subr.mxu0 0.0
  %3922 = vmatpush2.msra.mxu0 0.0
  %3923 = vmatprep.subr.mxu0 0.0
  %3924 = vmatpush2.msra.mxu0 0.0
  %3925 = vmatprep.mubr.f32.mxu0 0.0
  %v3926 = vand.u32 %v3505, 4294901760
  %3927 = vmatmul.mubr.f32.gmra.mxu0 %v3926
  %v3928 = vpop.f32.mrf.mxu0
  %v3929 = vadd.f32 %v3843, %v3928
  %v3930 = vpop.f32.mrf.mxu0
  %3931 = vdwg.mxu0
  %3932 = vmatprep.subr.mxu0 0.0
  %3933 = vmatpush1.msra.mxu0 0.0
  %3934 = vmatprep.subr.mxu0 0.0
  %3935 = vmatpush1.msra.mxu0 0.0
  %3936 = vmatprep.subr.mxu0 0.0
  %3937 = vmatpush1.msra.mxu0 0.0
  %3938 = vmatprep.subr.mxu0 0.0
  %3939 = vmatpush1.msra.mxu0 0.0
  %3940 = vmatprep.subr.mxu0 0.0
  %3941 = vmatpush1.msra.mxu0 0.0
  %3942 = vmatprep.subr.mxu0 0.0
  %3943 = vmatpush1.msra.mxu0 0.0
  %3944 = vmatprep.subr.mxu0 0.0
  %3945 = vmatpush1.msra.mxu0 0.0
  %3946 = vmatprep.subr.mxu0 0.0
  %3947 = vmatpush1.msra.mxu0 0.0
  %3948 = vmatprep.subr.mxu0 0.0
  %3949 = vmatpush1.msra.mxu0 0.0
  %3950 = vmatprep.subr.mxu0 0.0
  %3951 = vmatpush1.msra.mxu0 0.0
  %3952 = vmatprep.subr.mxu0 0.0
  %3953 = vmatpush1.msra.mxu0 0.0
  %3954 = vmatprep.subr.mxu0 0.0
  %v3955 = vand.u32 %v3508, 4294901760
  %3956 = vmatpush1.msra.mxu0 %v3955
  %3957 = vmatprep.subr.mxu0 0.0
  %v3958 = vand.u32 %v3501, 4294901760
  %3959 = vmatpush1.msra.mxu0 %v3958
  %3960 = vmatprep.subr.mxu0 0.0
  %v3961 = vand.u32 %v3500, 4294901760
  %3962 = vmatpush1.msra.mxu0 %v3961
  %3963 = vmatprep.subr.mxu0 0.0
  %v3964 = vand.u32 %v3499, 4294901760
  %3965 = vmatpush1.msra.mxu0 %v3964
  %3966 = vmatprep.subr.mxu0 0.0
  %v3967 = vand.u32 %v3498, 4294901760
  %3968 = vmatpush1.msra.mxu0 %v3967
  %3969 = vmatprep.subr.mxu0 0.0
  %3970 = vmatpush2.msra.mxu0 0.0
  %3971 = vmatprep.subr.mxu0 0.0
  %3972 = vmatpush2.msra.mxu0 0.0
  %3973 = vmatprep.subr.mxu0 0.0
  %3974 = vmatpush2.msra.mxu0 0.0
  %3975 = vmatprep.subr.mxu0 0.0
  %3976 = vmatpush2.msra.mxu0 0.0
  %3977 = vmatprep.subr.mxu0 0.0
  %3978 = vmatpush2.msra.mxu0 0.0
  %3979 = vmatprep.subr.mxu0 0.0
  %3980 = vmatpush2.msra.mxu0 0.0
  %3981 = vmatprep.subr.mxu0 0.0
  %3982 = vmatpush2.msra.mxu0 0.0
  %3983 = vmatprep.subr.mxu0 0.0
  %3984 = vmatpush2.msra.mxu0 0.0
  %3985 = vmatprep.subr.mxu0 0.0
  %3986 = vmatpush2.msra.mxu0 0.0
  %3987 = vmatprep.subr.mxu0 0.0
  %3988 = vmatpush2.msra.mxu0 0.0
  %3989 = vmatprep.subr.mxu0 0.0
  %3990 = vmatpush2.msra.mxu0 0.0
  %3991 = vmatprep.subr.mxu0 0.0
  %3992 = vmatpush2.msra.mxu0 0.0
  %3993 = vmatprep.subr.mxu0 0.0
  %3994 = vmatpush2.msra.mxu0 0.0
  %3995 = vmatprep.subr.mxu0 0.0
  %3996 = vmatpush2.msra.mxu0 0.0
  %3997 = vmatprep.subr.mxu0 0.0
  %3998 = vmatpush2.msra.mxu0 0.0
  %3999 = vmatprep.subr.mxu0 0.0
  %4000 = vmatpush2.msra.mxu0 0.0
  %4001 = vmatprep.mubr.f32.mxu0 0.0
  %v4002 = vand.u32 %v3505, 4294901760
  %4003 = vmatmul.mubr.f32.gmra.mxu0 %v4002
  %v4004 = vpop.f32.mrf.mxu0
  %v4005 = vadd.f32 %v3929, %v4004
  %v4006 = vpop.f32.mrf.mxu0
  %4007 = vdwg.mxu0
  %4008 = vrot.lane.b32.xlu0 %v4005, 9
  %v4009 = vpop.permute.xlu0 %4008
  %4010 = vrot.lane.b32.xlu0 %v4005, 8
  %v4011 = vpop.permute.xlu0 %4010
  %4012 = vrot.lane.b32.xlu0 %v4005, 7
  %v4013 = vpop.permute.xlu0 %4012
  %4014 = vrot.lane.b32.xlu0 %v4005, 1
  %v4015 = vpop.permute.xlu0 %4014
  %4016 = vrot.lane.b32.xlu0 %v4005, 127
  %v4017 = vpop.permute.xlu0 %4016
  %4018 = vrot.lane.b32.xlu0 %v4005, 121
  %v4019 = vpop.permute.xlu0 %4018
  %4020 = vrot.lane.b32.xlu0 %v4005, 120
  %v4021 = vpop.permute.xlu0 %4020
  %4022 = vrot.lane.b32.xlu0 %v4005, 119
  %v4023 = vpop.permute.xlu0 %4022
  %v4025 = vrot.slane %v4011, 4
  %v4028 = vrot.slane %v4015, 4
  %v4031 = vrot.slane %v4017, 4
  %v4034 = vrot.slane %v4021, 4
  %v4036 = vsel %vm2977, %v4009, %v4025
  %v4037 = vsel %vm2977, %v4013, %v4028
  %v4038 = vsel %vm2977, %v4005, %v4031
  %v4039 = vsel %vm2977, %v4019, %v4034
  %v4040 = vmul.f32 %v4036, %v3460
  %v4041 = vmul.f32 %v4037, %v3461
  %v4042 = vmul.f32 %v4038, %v3462
  %v4043 = vmul.f32 %v4039, %v3463
  %v4044 = vmul.f32 %v4023, %v3464
  %v4046 = vsel %vm3503, %v3454, 0
  %v4049 = vsel %vm2977, %v4044, 0
  %4051 = vmatprep.subr.mxu0 0.0
  %4052 = vmatpush1.msra.mxu0 0.0
  %4053 = vmatprep.subr.mxu0 0.0
  %4054 = vmatpush1.msra.mxu0 0.0
  %4055 = vmatprep.subr.mxu0 0.0
  %4056 = vmatpush1.msra.mxu0 0.0
  %4057 = vmatprep.subr.mxu0 0.0
  %4058 = vmatpush1.msra.mxu0 0.0
  %4059 = vmatprep.subr.mxu0 0.0
  %4060 = vmatpush1.msra.mxu0 0.0
  %4061 = vmatprep.subr.mxu0 0.0
  %4062 = vmatpush1.msra.mxu0 0.0
  %4063 = vmatprep.subr.mxu0 0.0
  %4064 = vmatpush1.msra.mxu0 0.0
  %4065 = vmatprep.subr.mxu0 0.0
  %4066 = vmatpush1.msra.mxu0 0.0
  %4067 = vmatprep.subr.mxu0 0.0
  %4068 = vmatpush1.msra.mxu0 0.0
  %4069 = vmatprep.subr.mxu0 0.0
  %4070 = vmatpush1.msra.mxu0 0.0
  %4071 = vmatprep.subr.mxu0 0.0
  %4072 = vmatpush1.msra.mxu0 0.0
  %4073 = vmatprep.subr.mxu0 0.0
  %v4074 = vand.u32 %v4049, 4294901760
  %4075 = vmatpush1.msra.mxu0 %v4074
  %4076 = vmatprep.subr.mxu0 0.0
  %v4077 = vand.u32 %v4043, 4294901760
  %4078 = vmatpush1.msra.mxu0 %v4077
  %4079 = vmatprep.subr.mxu0 0.0
  %v4080 = vand.u32 %v4042, 4294901760
  %4081 = vmatpush1.msra.mxu0 %v4080
  %4082 = vmatprep.subr.mxu0 0.0
  %v4083 = vand.u32 %v4041, 4294901760
  %4084 = vmatpush1.msra.mxu0 %v4083
  %4085 = vmatprep.subr.mxu0 0.0
  %v4086 = vand.u32 %v4040, 4294901760
  %4087 = vmatpush1.msra.mxu0 %v4086
  %4088 = vmatprep.subr.mxu0 0.0
  %4089 = vmatpush2.msra.mxu0 0.0
  %4090 = vmatprep.subr.mxu0 0.0
  %4091 = vmatpush2.msra.mxu0 0.0
  %4092 = vmatprep.subr.mxu0 0.0
  %4093 = vmatpush2.msra.mxu0 0.0
  %4094 = vmatprep.subr.mxu0 0.0
  %4095 = vmatpush2.msra.mxu0 0.0
  %4096 = vmatprep.subr.mxu0 0.0
  %4097 = vmatpush2.msra.mxu0 0.0
  %4098 = vmatprep.subr.mxu0 0.0
  %4099 = vmatpush2.msra.mxu0 0.0
  %4100 = vmatprep.subr.mxu0 0.0
  %4101 = vmatpush2.msra.mxu0 0.0
  %4102 = vmatprep.subr.mxu0 0.0
  %4103 = vmatpush2.msra.mxu0 0.0
  %4104 = vmatprep.subr.mxu0 0.0
  %4105 = vmatpush2.msra.mxu0 0.0
  %4106 = vmatprep.subr.mxu0 0.0
  %4107 = vmatpush2.msra.mxu0 0.0
  %4108 = vmatprep.subr.mxu0 0.0
  %4109 = vmatpush2.msra.mxu0 0.0
  %4110 = vmatprep.subr.mxu0 0.0
  %4111 = vmatpush2.msra.mxu0 0.0
  %4112 = vmatprep.subr.mxu0 0.0
  %4113 = vmatpush2.msra.mxu0 0.0
  %4114 = vmatprep.subr.mxu0 0.0
  %4115 = vmatpush2.msra.mxu0 0.0
  %4116 = vmatprep.subr.mxu0 0.0
  %4117 = vmatpush2.msra.mxu0 0.0
  %4118 = vmatprep.subr.mxu0 0.0
  %4119 = vmatpush2.msra.mxu0 0.0
  %4120 = vmatprep.mubr.f32.mxu0 0.0
  %v4121 = vand.u32 %v4046, 4294901760
  %v4122 = vsub.f32 %v4046, %v4121
  %v4123 = vand.u32 %v4122, 4294901760
  %v4124 = vsub.f32 %v4122, %v4123
  %v4125 = vand.u32 %v4124, 4294901760
  %4126 = vmatmul.mubr.f32.gmra.mxu0 %v4125
  %v4127 = vpop.f32.mrf.mxu0
  %v4128 = vadd.f32 0.0, %v4127
  %v4129 = vpop.f32.mrf.mxu0
  %4130 = vdwg.mxu0
  %4131 = vmatprep.subr.mxu0 0.0
  %4132 = vmatpush1.msra.mxu0 0.0
  %4133 = vmatprep.subr.mxu0 0.0
  %4134 = vmatpush1.msra.mxu0 0.0
  %4135 = vmatprep.subr.mxu0 0.0
  %4136 = vmatpush1.msra.mxu0 0.0
  %4137 = vmatprep.subr.mxu0 0.0
  %4138 = vmatpush1.msra.mxu0 0.0
  %4139 = vmatprep.subr.mxu0 0.0
  %4140 = vmatpush1.msra.mxu0 0.0
  %4141 = vmatprep.subr.mxu0 0.0
  %4142 = vmatpush1.msra.mxu0 0.0
  %4143 = vmatprep.subr.mxu0 0.0
  %4144 = vmatpush1.msra.mxu0 0.0
  %4145 = vmatprep.subr.mxu0 0.0
  %4146 = vmatpush1.msra.mxu0 0.0
  %4147 = vmatprep.subr.mxu0 0.0
  %4148 = vmatpush1.msra.mxu0 0.0
  %4149 = vmatprep.subr.mxu0 0.0
  %4150 = vmatpush1.msra.mxu0 0.0
  %4151 = vmatprep.subr.mxu0 0.0
  %4152 = vmatpush1.msra.mxu0 0.0
  %4153 = vmatprep.subr.mxu0 0.0
  %v4154 = vand.u32 %v4049, 4294901760
  %v4155 = vsub.f32 %v4049, %v4154
  %v4156 = vand.u32 %v4155, 4294901760
  %v4157 = vsub.f32 %v4155, %v4156
  %v4158 = vand.u32 %v4157, 4294901760
  %4159 = vmatpush1.msra.mxu0 %v4158
  %4160 = vmatprep.subr.mxu0 0.0
  %v4161 = vand.u32 %v4043, 4294901760
  %v4162 = vsub.f32 %v4043, %v4161
  %v4163 = vand.u32 %v4162, 4294901760
  %v4164 = vsub.f32 %v4162, %v4163
  %v4165 = vand.u32 %v4164, 4294901760
  %4166 = vmatpush1.msra.mxu0 %v4165
  %4167 = vmatprep.subr.mxu0 0.0
  %v4168 = vand.u32 %v4042, 4294901760
  %v4169 = vsub.f32 %v4042, %v4168
  %v4170 = vand.u32 %v4169, 4294901760
  %v4171 = vsub.f32 %v4169, %v4170
  %v4172 = vand.u32 %v4171, 4294901760
  %4173 = vmatpush1.msra.mxu0 %v4172
  %4174 = vmatprep.subr.mxu0 0.0
  %v4175 = vand.u32 %v4041, 4294901760
  %v4176 = vsub.f32 %v4041, %v4175
  %v4177 = vand.u32 %v4176, 4294901760
  %v4178 = vsub.f32 %v4176, %v4177
  %v4179 = vand.u32 %v4178, 4294901760
  %4180 = vmatpush1.msra.mxu0 %v4179
  %4181 = vmatprep.subr.mxu0 0.0
  %v4182 = vand.u32 %v4040, 4294901760
  %v4183 = vsub.f32 %v4040, %v4182
  %v4184 = vand.u32 %v4183, 4294901760
  %v4185 = vsub.f32 %v4183, %v4184
  %v4186 = vand.u32 %v4185, 4294901760
  %4187 = vmatpush1.msra.mxu0 %v4186
  %4188 = vmatprep.subr.mxu0 0.0
  %4189 = vmatpush2.msra.mxu0 0.0
  %4190 = vmatprep.subr.mxu0 0.0
  %4191 = vmatpush2.msra.mxu0 0.0
  %4192 = vmatprep.subr.mxu0 0.0
  %4193 = vmatpush2.msra.mxu0 0.0
  %4194 = vmatprep.subr.mxu0 0.0
  %4195 = vmatpush2.msra.mxu0 0.0
  %4196 = vmatprep.subr.mxu0 0.0
  %4197 = vmatpush2.msra.mxu0 0.0
  %4198 = vmatprep.subr.mxu0 0.0
  %4199 = vmatpush2.msra.mxu0 0.0
  %4200 = vmatprep.subr.mxu0 0.0
  %4201 = vmatpush2.msra.mxu0 0.0
  %4202 = vmatprep.subr.mxu0 0.0
  %4203 = vmatpush2.msra.mxu0 0.0
  %4204 = vmatprep.subr.mxu0 0.0
  %4205 = vmatpush2.msra.mxu0 0.0
  %4206 = vmatprep.subr.mxu0 0.0
  %4207 = vmatpush2.msra.mxu0 0.0
  %4208 = vmatprep.subr.mxu0 0.0
  %4209 = vmatpush2.msra.mxu0 0.0
  %4210 = vmatprep.subr.mxu0 0.0
  %4211 = vmatpush2.msra.mxu0 0.0
  %4212 = vmatprep.subr.mxu0 0.0
  %4213 = vmatpush2.msra.mxu0 0.0
  %4214 = vmatprep.subr.mxu0 0.0
  %4215 = vmatpush2.msra.mxu0 0.0
  %4216 = vmatprep.subr.mxu0 0.0
  %4217 = vmatpush2.msra.mxu0 0.0
  %4218 = vmatprep.subr.mxu0 0.0
  %4219 = vmatpush2.msra.mxu0 0.0
  %4220 = vmatprep.mubr.f32.mxu0 0.0
  %v4221 = vand.u32 %v4046, 4294901760
  %4222 = vmatmul.mubr.f32.gmra.mxu0 %v4221
  %v4223 = vpop.f32.mrf.mxu0
  %v4224 = vadd.f32 %v4128, %v4223
  %v4225 = vpop.f32.mrf.mxu0
  %4226 = vdwg.mxu0
  %4227 = vmatprep.subr.mxu0 0.0
  %4228 = vmatpush1.msra.mxu0 0.0
  %4229 = vmatprep.subr.mxu0 0.0
  %4230 = vmatpush1.msra.mxu0 0.0
  %4231 = vmatprep.subr.mxu0 0.0
  %4232 = vmatpush1.msra.mxu0 0.0
  %4233 = vmatprep.subr.mxu0 0.0
  %4234 = vmatpush1.msra.mxu0 0.0
  %4235 = vmatprep.subr.mxu0 0.0
  %4236 = vmatpush1.msra.mxu0 0.0
  %4237 = vmatprep.subr.mxu0 0.0
  %4238 = vmatpush1.msra.mxu0 0.0
  %4239 = vmatprep.subr.mxu0 0.0
  %4240 = vmatpush1.msra.mxu0 0.0
  %4241 = vmatprep.subr.mxu0 0.0
  %4242 = vmatpush1.msra.mxu0 0.0
  %4243 = vmatprep.subr.mxu0 0.0
  %4244 = vmatpush1.msra.mxu0 0.0
  %4245 = vmatprep.subr.mxu0 0.0
  %4246 = vmatpush1.msra.mxu0 0.0
  %4247 = vmatprep.subr.mxu0 0.0
  %4248 = vmatpush1.msra.mxu0 0.0
  %4249 = vmatprep.subr.mxu0 0.0
  %v4250 = vand.u32 %v4049, 4294901760
  %v4251 = vsub.f32 %v4049, %v4250
  %4252 = vmatpush1.msra.mxu0 %v4251
  %4253 = vmatprep.subr.mxu0 0.0
  %v4254 = vand.u32 %v4043, 4294901760
  %v4255 = vsub.f32 %v4043, %v4254
  %4256 = vmatpush1.msra.mxu0 %v4255
  %4257 = vmatprep.subr.mxu0 0.0
  %v4258 = vand.u32 %v4042, 4294901760
  %v4259 = vsub.f32 %v4042, %v4258
  %4260 = vmatpush1.msra.mxu0 %v4259
  %4261 = vmatprep.subr.mxu0 0.0
  %v4262 = vand.u32 %v4041, 4294901760
  %v4263 = vsub.f32 %v4041, %v4262
  %4264 = vmatpush1.msra.mxu0 %v4263
  %4265 = vmatprep.subr.mxu0 0.0
  %v4266 = vand.u32 %v4040, 4294901760
  %v4267 = vsub.f32 %v4040, %v4266
  %4268 = vmatpush1.msra.mxu0 %v4267
  %4269 = vmatprep.subr.mxu0 0.0
  %4270 = vmatpush2.msra.mxu0 0.0
  %4271 = vmatprep.subr.mxu0 0.0
  %4272 = vmatpush2.msra.mxu0 0.0
  %4273 = vmatprep.subr.mxu0 0.0
  %4274 = vmatpush2.msra.mxu0 0.0
  %4275 = vmatprep.subr.mxu0 0.0
  %4276 = vmatpush2.msra.mxu0 0.0
  %4277 = vmatprep.subr.mxu0 0.0
  %4278 = vmatpush2.msra.mxu0 0.0
  %4279 = vmatprep.subr.mxu0 0.0
  %4280 = vmatpush2.msra.mxu0 0.0
  %4281 = vmatprep.subr.mxu0 0.0
  %4282 = vmatpush2.msra.mxu0 0.0
  %4283 = vmatprep.subr.mxu0 0.0
  %4284 = vmatpush2.msra.mxu0 0.0
  %4285 = vmatprep.subr.mxu0 0.0
  %4286 = vmatpush2.msra.mxu0 0.0
  %4287 = vmatprep.subr.mxu0 0.0
  %4288 = vmatpush2.msra.mxu0 0.0
  %4289 = vmatprep.subr.mxu0 0.0
  %4290 = vmatpush2.msra.mxu0 0.0
  %4291 = vmatprep.subr.mxu0 0.0
  %4292 = vmatpush2.msra.mxu0 0.0
  %4293 = vmatprep.subr.mxu0 0.0
  %4294 = vmatpush2.msra.mxu0 0.0
  %4295 = vmatprep.subr.mxu0 0.0
  %4296 = vmatpush2.msra.mxu0 0.0
  %4297 = vmatprep.subr.mxu0 0.0
  %4298 = vmatpush2.msra.mxu0 0.0
  %4299 = vmatprep.subr.mxu0 0.0
  %4300 = vmatpush2.msra.mxu0 0.0
  %4301 = vmatprep.mubr.f32.mxu0 0.0
  %v4302 = vand.u32 %v4046, 4294901760
  %v4303 = vsub.f32 %v4046, %v4302
  %4304 = vmatmul.mubr.f32.gmra.mxu0 %v4303
  %v4305 = vpop.f32.mrf.mxu0
  %v4306 = vadd.f32 %v4224, %v4305
  %v4307 = vpop.f32.mrf.mxu0
  %4308 = vdwg.mxu0
  %4309 = vmatprep.subr.mxu0 0.0
  %4310 = vmatpush1.msra.mxu0 0.0
  %4311 = vmatprep.subr.mxu0 0.0
  %4312 = vmatpush1.msra.mxu0 0.0
  %4313 = vmatprep.subr.mxu0 0.0
  %4314 = vmatpush1.msra.mxu0 0.0
  %4315 = vmatprep.subr.mxu0 0.0
  %4316 = vmatpush1.msra.mxu0 0.0
  %4317 = vmatprep.subr.mxu0 0.0
  %4318 = vmatpush1.msra.mxu0 0.0
  %4319 = vmatprep.subr.mxu0 0.0
  %4320 = vmatpush1.msra.mxu0 0.0
  %4321 = vmatprep.subr.mxu0 0.0
  %4322 = vmatpush1.msra.mxu0 0.0
  %4323 = vmatprep.subr.mxu0 0.0
  %4324 = vmatpush1.msra.mxu0 0.0
  %4325 = vmatprep.subr.mxu0 0.0
  %4326 = vmatpush1.msra.mxu0 0.0
  %4327 = vmatprep.subr.mxu0 0.0
  %4328 = vmatpush1.msra.mxu0 0.0
  %4329 = vmatprep.subr.mxu0 0.0
  %4330 = vmatpush1.msra.mxu0 0.0
  %4331 = vmatprep.subr.mxu0 0.0
  %v4332 = vand.u32 %v4049, 4294901760
  %4333 = vmatpush1.msra.mxu0 %v4332
  %4334 = vmatprep.subr.mxu0 0.0
  %v4335 = vand.u32 %v4043, 4294901760
  %4336 = vmatpush1.msra.mxu0 %v4335
  %4337 = vmatprep.subr.mxu0 0.0
  %v4338 = vand.u32 %v4042, 4294901760
  %4339 = vmatpush1.msra.mxu0 %v4338
  %4340 = vmatprep.subr.mxu0 0.0
  %v4341 = vand.u32 %v4041, 4294901760
  %4342 = vmatpush1.msra.mxu0 %v4341
  %4343 = vmatprep.subr.mxu0 0.0
  %v4344 = vand.u32 %v4040, 4294901760
  %4345 = vmatpush1.msra.mxu0 %v4344
  %4346 = vmatprep.subr.mxu0 0.0
  %4347 = vmatpush2.msra.mxu0 0.0
  %4348 = vmatprep.subr.mxu0 0.0
  %4349 = vmatpush2.msra.mxu0 0.0
  %4350 = vmatprep.subr.mxu0 0.0
  %4351 = vmatpush2.msra.mxu0 0.0
  %4352 = vmatprep.subr.mxu0 0.0
  %4353 = vmatpush2.msra.mxu0 0.0
  %4354 = vmatprep.subr.mxu0 0.0
  %4355 = vmatpush2.msra.mxu0 0.0
  %4356 = vmatprep.subr.mxu0 0.0
  %4357 = vmatpush2.msra.mxu0 0.0
  %4358 = vmatprep.subr.mxu0 0.0
  %4359 = vmatpush2.msra.mxu0 0.0
  %4360 = vmatprep.subr.mxu0 0.0
  %4361 = vmatpush2.msra.mxu0 0.0
  %4362 = vmatprep.subr.mxu0 0.0
  %4363 = vmatpush2.msra.mxu0 0.0
  %4364 = vmatprep.subr.mxu0 0.0
  %4365 = vmatpush2.msra.mxu0 0.0
  %4366 = vmatprep.subr.mxu0 0.0
  %4367 = vmatpush2.msra.mxu0 0.0
  %4368 = vmatprep.subr.mxu0 0.0
  %4369 = vmatpush2.msra.mxu0 0.0
  %4370 = vmatprep.subr.mxu0 0.0
  %4371 = vmatpush2.msra.mxu0 0.0
  %4372 = vmatprep.subr.mxu0 0.0
  %4373 = vmatpush2.msra.mxu0 0.0
  %4374 = vmatprep.subr.mxu0 0.0
  %4375 = vmatpush2.msra.mxu0 0.0
  %4376 = vmatprep.subr.mxu0 0.0
  %4377 = vmatpush2.msra.mxu0 0.0
  %4378 = vmatprep.mubr.f32.mxu0 0.0
  %v4379 = vand.u32 %v4046, 4294901760
  %v4380 = vsub.f32 %v4046, %v4379
  %v4381 = vand.u32 %v4380, 4294901760
  %4382 = vmatmul.mubr.f32.gmra.mxu0 %v4381
  %v4383 = vpop.f32.mrf.mxu0
  %v4384 = vadd.f32 %v4306, %v4383
  %v4385 = vpop.f32.mrf.mxu0
  %4386 = vdwg.mxu0
  %4387 = vmatprep.subr.mxu0 0.0
  %4388 = vmatpush1.msra.mxu0 0.0
  %4389 = vmatprep.subr.mxu0 0.0
  %4390 = vmatpush1.msra.mxu0 0.0
  %4391 = vmatprep.subr.mxu0 0.0
  %4392 = vmatpush1.msra.mxu0 0.0
  %4393 = vmatprep.subr.mxu0 0.0
  %4394 = vmatpush1.msra.mxu0 0.0
  %4395 = vmatprep.subr.mxu0 0.0
  %4396 = vmatpush1.msra.mxu0 0.0
  %4397 = vmatprep.subr.mxu0 0.0
  %4398 = vmatpush1.msra.mxu0 0.0
  %4399 = vmatprep.subr.mxu0 0.0
  %4400 = vmatpush1.msra.mxu0 0.0
  %4401 = vmatprep.subr.mxu0 0.0
  %4402 = vmatpush1.msra.mxu0 0.0
  %4403 = vmatprep.subr.mxu0 0.0
  %4404 = vmatpush1.msra.mxu0 0.0
  %4405 = vmatprep.subr.mxu0 0.0
  %4406 = vmatpush1.msra.mxu0 0.0
  %4407 = vmatprep.subr.mxu0 0.0
  %4408 = vmatpush1.msra.mxu0 0.0
  %4409 = vmatprep.subr.mxu0 0.0
  %v4410 = vand.u32 %v4049, 4294901760
  %v4411 = vsub.f32 %v4049, %v4410
  %v4412 = vand.u32 %v4411, 4294901760
  %4413 = vmatpush1.msra.mxu0 %v4412
  %4414 = vmatprep.subr.mxu0 0.0
  %v4415 = vand.u32 %v4043, 4294901760
  %v4416 = vsub.f32 %v4043, %v4415
  %v4417 = vand.u32 %v4416, 4294901760
  %4418 = vmatpush1.msra.mxu0 %v4417
  %4419 = vmatprep.subr.mxu0 0.0
  %v4420 = vand.u32 %v4042, 4294901760
  %v4421 = vsub.f32 %v4042, %v4420
  %v4422 = vand.u32 %v4421, 4294901760
  %4423 = vmatpush1.msra.mxu0 %v4422
  %4424 = vmatprep.subr.mxu0 0.0
  %v4425 = vand.u32 %v4041, 4294901760
  %v4426 = vsub.f32 %v4041, %v4425
  %v4427 = vand.u32 %v4426, 4294901760
  %4428 = vmatpush1.msra.mxu0 %v4427
  %4429 = vmatprep.subr.mxu0 0.0
  %v4430 = vand.u32 %v4040, 4294901760
  %v4431 = vsub.f32 %v4040, %v4430
  %v4432 = vand.u32 %v4431, 4294901760
  %4433 = vmatpush1.msra.mxu0 %v4432
  %4434 = vmatprep.subr.mxu0 0.0
  %4435 = vmatpush2.msra.mxu0 0.0
  %4436 = vmatprep.subr.mxu0 0.0
  %4437 = vmatpush2.msra.mxu0 0.0
  %4438 = vmatprep.subr.mxu0 0.0
  %4439 = vmatpush2.msra.mxu0 0.0
  %4440 = vmatprep.subr.mxu0 0.0
  %4441 = vmatpush2.msra.mxu0 0.0
  %4442 = vmatprep.subr.mxu0 0.0
  %4443 = vmatpush2.msra.mxu0 0.0
  %4444 = vmatprep.subr.mxu0 0.0
  %4445 = vmatpush2.msra.mxu0 0.0
  %4446 = vmatprep.subr.mxu0 0.0
  %4447 = vmatpush2.msra.mxu0 0.0
  %4448 = vmatprep.subr.mxu0 0.0
  %4449 = vmatpush2.msra.mxu0 0.0
  %4450 = vmatprep.subr.mxu0 0.0
  %4451 = vmatpush2.msra.mxu0 0.0
  %4452 = vmatprep.subr.mxu0 0.0
  %4453 = vmatpush2.msra.mxu0 0.0
  %4454 = vmatprep.subr.mxu0 0.0
  %4455 = vmatpush2.msra.mxu0 0.0
  %4456 = vmatprep.subr.mxu0 0.0
  %4457 = vmatpush2.msra.mxu0 0.0
  %4458 = vmatprep.subr.mxu0 0.0
  %4459 = vmatpush2.msra.mxu0 0.0
  %4460 = vmatprep.subr.mxu0 0.0
  %4461 = vmatpush2.msra.mxu0 0.0
  %4462 = vmatprep.subr.mxu0 0.0
  %4463 = vmatpush2.msra.mxu0 0.0
  %4464 = vmatprep.subr.mxu0 0.0
  %4465 = vmatpush2.msra.mxu0 0.0
  %4466 = vmatprep.mubr.f32.mxu0 0.0
  %v4467 = vand.u32 %v4046, 4294901760
  %4468 = vmatmul.mubr.f32.gmra.mxu0 %v4467
  %v4469 = vpop.f32.mrf.mxu0
  %v4470 = vadd.f32 %v4384, %v4469
  %v4471 = vpop.f32.mrf.mxu0
  %4472 = vdwg.mxu0
  %4473 = vmatprep.subr.mxu0 0.0
  %4474 = vmatpush1.msra.mxu0 0.0
  %4475 = vmatprep.subr.mxu0 0.0
  %4476 = vmatpush1.msra.mxu0 0.0
  %4477 = vmatprep.subr.mxu0 0.0
  %4478 = vmatpush1.msra.mxu0 0.0
  %4479 = vmatprep.subr.mxu0 0.0
  %4480 = vmatpush1.msra.mxu0 0.0
  %4481 = vmatprep.subr.mxu0 0.0
  %4482 = vmatpush1.msra.mxu0 0.0
  %4483 = vmatprep.subr.mxu0 0.0
  %4484 = vmatpush1.msra.mxu0 0.0
  %4485 = vmatprep.subr.mxu0 0.0
  %4486 = vmatpush1.msra.mxu0 0.0
  %4487 = vmatprep.subr.mxu0 0.0
  %4488 = vmatpush1.msra.mxu0 0.0
  %4489 = vmatprep.subr.mxu0 0.0
  %4490 = vmatpush1.msra.mxu0 0.0
  %4491 = vmatprep.subr.mxu0 0.0
  %4492 = vmatpush1.msra.mxu0 0.0
  %4493 = vmatprep.subr.mxu0 0.0
  %4494 = vmatpush1.msra.mxu0 0.0
  %4495 = vmatprep.subr.mxu0 0.0
  %v4496 = vand.u32 %v4049, 4294901760
  %4497 = vmatpush1.msra.mxu0 %v4496
  %4498 = vmatprep.subr.mxu0 0.0
  %v4499 = vand.u32 %v4043, 4294901760
  %4500 = vmatpush1.msra.mxu0 %v4499
  %4501 = vmatprep.subr.mxu0 0.0
  %v4502 = vand.u32 %v4042, 4294901760
  %4503 = vmatpush1.msra.mxu0 %v4502
  %4504 = vmatprep.subr.mxu0 0.0
  %v4505 = vand.u32 %v4041, 4294901760
  %4506 = vmatpush1.msra.mxu0 %v4505
  %4507 = vmatprep.subr.mxu0 0.0
  %v4508 = vand.u32 %v4040, 4294901760
  %4509 = vmatpush1.msra.mxu0 %v4508
  %4510 = vmatprep.subr.mxu0 0.0
  %4511 = vmatpush2.msra.mxu0 0.0
  %4512 = vmatprep.subr.mxu0 0.0
  %4513 = vmatpush2.msra.mxu0 0.0
  %4514 = vmatprep.subr.mxu0 0.0
  %4515 = vmatpush2.msra.mxu0 0.0
  %4516 = vmatprep.subr.mxu0 0.0
  %4517 = vmatpush2.msra.mxu0 0.0
  %4518 = vmatprep.subr.mxu0 0.0
  %4519 = vmatpush2.msra.mxu0 0.0
  %4520 = vmatprep.subr.mxu0 0.0
  %4521 = vmatpush2.msra.mxu0 0.0
  %4522 = vmatprep.subr.mxu0 0.0
  %4523 = vmatpush2.msra.mxu0 0.0
  %4524 = vmatprep.subr.mxu0 0.0
  %4525 = vmatpush2.msra.mxu0 0.0
  %4526 = vmatprep.subr.mxu0 0.0
  %4527 = vmatpush2.msra.mxu0 0.0
  %4528 = vmatprep.subr.mxu0 0.0
  %4529 = vmatpush2.msra.mxu0 0.0
  %4530 = vmatprep.subr.mxu0 0.0
  %4531 = vmatpush2.msra.mxu0 0.0
  %4532 = vmatprep.subr.mxu0 0.0
  %4533 = vmatpush2.msra.mxu0 0.0
  %4534 = vmatprep.subr.mxu0 0.0
  %4535 = vmatpush2.msra.mxu0 0.0
  %4536 = vmatprep.subr.mxu0 0.0
  %4537 = vmatpush2.msra.mxu0 0.0
  %4538 = vmatprep.subr.mxu0 0.0
  %4539 = vmatpush2.msra.mxu0 0.0
  %4540 = vmatprep.subr.mxu0 0.0
  %4541 = vmatpush2.msra.mxu0 0.0
  %4542 = vmatprep.mubr.f32.mxu0 0.0
  %v4543 = vand.u32 %v4046, 4294901760
  %4544 = vmatmul.mubr.f32.gmra.mxu0 %v4543
  %v4545 = vpop.f32.mrf.mxu0
  %v4546 = vadd.f32 %v4470, %v4545
  %v4547 = vpop.f32.mrf.mxu0
  %4548 = vdwg.mxu0
  %vm4549 = vcmask 519168
  %4550 = vst.msk [vmem:[%s8] sm:$0xf] %vm4549, %v4546
  %4552 = vrot.lane.b32.xlu0 %v4546, 64
  %v4553 = vpop.permute.xlu0 %4552
  %s4555 = scalar_lea.vmem %s8, 4
  %4556 = vst.msk [vmem:[%s4555] sm:$0xf] %vm4549, %v4553
  // Predicated region
  $region34: #{attn_conv2d_forward.1} parent=0 // pred_check
    _
  $region35: #{attn_conv2d_forward.1} parent=0 // pred_check_branch
    %4558 = sbr.rel (0) target = $region37
  $region36: #{attn_conv2d_forward.1} parent=0 // pred_region
    _
  $region37: #{attn_conv2d_forward.1} parent=0 // pred_fallthru
    _
  // Predicated region
  $region38: #{attn_conv2d_forward.1} parent=0 // pred_check
    _
  $region39: #{attn_conv2d_forward.1} parent=0 // pred_check_branch
    %4560 = sbr.rel (0) target = $region41
  $region40: #{attn_conv2d_forward.1} parent=0 // pred_region
    _
  $region41: #{attn_conv2d_forward.1} parent=0 // pred_fallthru
    _

</llo_original>
